<compile_context>
chip_gen: v7x
topology: tpu7x:2x2x1
jax: 0.10.0
libtpu: 0.0.40
codegen_flags: <defaults>
</compile_context>

<pallas_src>
import functools

import jax
import jax.numpy as jnp
from jax.experimental import pallas as pl
from jax.experimental.pallas import tpu as pltpu


def transformer_block_kernel(x_ref, wq_ref, wk_ref, wv_ref, wu_ref,
                             g1_ref, b1_ref, w1_ref, bf1_ref,
                             w2_ref, bf2_ref, g2_ref, b2_ref,
                             o_ref, k_scr, v_scr,
                             *, num_heads, head_dim, q_tile):
    f32 = jnp.float32
    bf16 = jnp.bfloat16
    h, d = num_heads, head_dim
    seq = x_ref.shape[1]
    c = x_ref.shape[2]
    qi = pl.program_id(1)

    # ---- K/V projections, cached in VMEM scratch across Q tiles -----------
    # Recomputed only at the first Q tile of each batch element (grid axis 1
    # is therefore marked "arbitrary").
    @pl.when(qi == 0)
    def _():
        x_bf = x_ref[0].astype(bf16)                                # (seq, c)
        x_h = jnp.broadcast_to(x_bf[None], (h, seq, c))             # (h, seq, c)
        k_scr[...] = jnp.einsum('hsc,hcd->hsd', x_h, wk_ref[...],
                                preferred_element_type=f32).astype(bf16)
        v_scr[...] = jnp.einsum('hsc,hcd->hsd', x_h, wv_ref[...],
                                preferred_element_type=f32).astype(bf16)

    # ---- current Q-row tile of x ------------------------------------------
    if q_tile == seq:
        row0 = 0
        xq = x_ref[0]                                               # (tq, c) f32
    else:
        row0 = pl.multiple_of(qi * q_tile, q_tile)
        xq = x_ref[0, pl.ds(row0, q_tile), :]
    xq_bf = xq.astype(bf16)
    xq_h = jnp.broadcast_to(xq_bf[None], (h, q_tile, c))            # (h, tq, c)

    # ---- Q projection; apply the d**-0.5 scale once (in f32) --------------
    q3 = jnp.einsum('hqc,hcd->hqd', xq_h, wq_ref[...],
                    preferred_element_type=f32)
    q3 = (q3 * (1.0 / float(d) ** 0.5)).astype(bf16)                # (h, tq, d)

    # ---- causal attention: bf16 matmul operands, f32 softmax stats --------
    scores = jnp.einsum('hqd,hsd->hqs', q3, k_scr[...],
                        preferred_element_type=f32)                 # (h, tq, seq)
    rows = row0 + jax.lax.broadcasted_iota(jnp.int32, (1, q_tile, seq), 1)
    cols = jax.lax.broadcasted_iota(jnp.int32, (1, q_tile, seq), 2)
    scores = jnp.where(rows >= cols, scores, -1e30)                 # finite fill
    m = jnp.max(scores, axis=-1, keepdims=True)
    e = jnp.exp(scores - m)
    denom = jnp.sum(e, axis=-1, keepdims=True)
    probs = (e * pl.reciprocal(denom, approx=True)).astype(bf16)    # (h, tq, seq)
    heads_out = jnp.einsum('hqs,hsd->hqd', probs, v_scr[...],
                           preferred_element_type=f32).astype(bf16)  # (h, tq, d)

    # ---- unify heads: per-head matmul, sum over heads (no concatenate) ----
    attended = jnp.sum(
        jnp.einsum('hqd,hdc->hqc', heads_out, wu_ref[...],
                   preferred_element_type=f32), axis=0)             # (tq, c)

    # ---- residual + LayerNorm 1 (f32) --------------------------------------
    y = attended + xq
    mu = jnp.mean(y, axis=-1, keepdims=True)
    var = jnp.mean(jnp.square(y - mu), axis=-1, keepdims=True)
    y = (y - mu) * jax.lax.rsqrt(var + 1e-5) * g1_ref[...] + b1_ref[...]

    # ---- feed-forward (bf16 matmuls, f32 accumulation / bias / ReLU) ------
    h1 = jnp.dot(y.astype(bf16), w1_ref[...],
                 preferred_element_type=f32) + bf1_ref[...]
    h1 = jnp.maximum(h1, 0.0)
    ff = jnp.dot(h1.astype(bf16), w2_ref[...],
                 preferred_element_type=f32) + bf2_ref[...]

    # ---- residual + LayerNorm 2 (f32) --------------------------------------
    z = ff + y
    mu2 = jnp.mean(z, axis=-1, keepdims=True)
    var2 = jnp.mean(jnp.square(z - mu2), axis=-1, keepdims=True)
    z = (z - mu2) * jax.lax.rsqrt(var2 + 1e-5) * g2_ref[...] + b2_ref[...]

    o_ref[0] = z.astype(o_ref.dtype)


def _choose_q_tile(seq):
    # Largest multiple-of-8 tile <= 256 that divides seq; else whole seq.
    for t in (256, 128, 64, 32, 16, 8):
        if t <= seq and seq % t == 0:
            return t
    return seq


def _block_call(x, params, *, num_heads, head_dim, q_tile,
                single_buffer_weights):
    batch, seq, c = x.shape
    if q_tile is None:
        q_tile = _choose_q_tile(seq)
    n_qt = seq // q_tile
    (wq, wk, wv, wu, g1, b1, w1, bf1, w2, bf2, g2, b2) = params

    def const_spec(a):
        nd = a.ndim
        idx = lambda bi, ti: (0,) * nd
        if single_buffer_weights:
            # Invariant across the whole grid -> single-buffer to halve the
            # weight VMEM footprint.
            return pl.BlockSpec(a.shape, idx, pipeline_mode=pl.Buffered(1))
        return pl.BlockSpec(a.shape, idx)

    kernel = functools.partial(transformer_block_kernel, num_heads=num_heads,
                               head_dim=head_dim, q_tile=q_tile)

    return pl.pallas_call(
        kernel,
        out_shape=jax.ShapeDtypeStruct((batch, seq, c), jnp.float32),
        grid_spec=pltpu.PrefetchScalarGridSpec(
            num_scalar_prefetch=0,
            grid=(batch, n_qt),
            in_specs=[
                # full x of the current batch element, resident across Q tiles
                pl.BlockSpec((1, seq, c), lambda bi, ti: (bi, 0, 0)),
                const_spec(wq), const_spec(wk), const_spec(wv), const_spec(wu),
                const_spec(g1), const_spec(b1), const_spec(w1), const_spec(bf1),
                const_spec(w2), const_spec(bf2), const_spec(g2), const_spec(b2),
            ],
            out_specs=pl.BlockSpec((1, q_tile, c), lambda bi, ti: (bi, ti, 0)),
            scratch_shapes=[
                pltpu.VMEM((num_heads, seq, head_dim), jnp.bfloat16),  # K cache
                pltpu.VMEM((num_heads, seq, head_dim), jnp.bfloat16),  # V cache
            ],
        ),
        compiler_params=pltpu.CompilerParams(
            # batch axis parallel (megacore); Q-tile axis carries the K/V
            # scratch dependence -> arbitrary.
            dimension_semantics=("parallel", "arbitrary"),
            vmem_limit_bytes=48 * 1024 * 1024,
        ),
    )(x, wq, wk, wv, wu, g1, b1, w1, bf1, w2, bf2, g2, b2)


_SINGLE_BUFFER_WEIGHTS = True  # flipped off if this build rejects pl.Buffered(1)


def transformer_block(x, params, *, num_heads, head_dim, q_tile=None):
    global _SINGLE_BUFFER_WEIGHTS
    if _SINGLE_BUFFER_WEIGHTS:
        try:
            return _block_call(x, params, num_heads=num_heads,
                               head_dim=head_dim, q_tile=q_tile,
                               single_buffer_weights=True)
        except Exception:  # fall back to default double-buffered weight specs
            _SINGLE_BUFFER_WEIGHTS = False
    return _block_call(x, params, num_heads=num_heads, head_dim=head_dim,
                       q_tile=q_tile, single_buffer_weights=False)


def init_params(key, *, embedding_dim, num_mappings, num_heads, num_blocks,
                seq_length, padding_idx=0):
    c = embedding_dim
    d = embedding_dim          # head_dim == embedding_dim, as in the PyTorch module
    h = num_heads
    keys = jax.random.split(key, 2 + num_blocks * 6)

    emb = 0.02 * jax.random.normal(keys[0], (num_mappings, c), jnp.float32)
    emb = emb.at[padding_idx].set(0.0)          # padding_idx row is zero
    pos_emb = 0.02 * jax.random.normal(keys[1], (seq_length, c), jnp.float32)

    bf16 = jnp.bfloat16
    blocks = []
    for i in range(num_blocks):
        bk = keys[2 + i * 6: 2 + (i + 1) * 6]
        # per-head stacked projection weights, stored bf16 (MXU operands)
        wq = (0.02 * jax.random.normal(bk[0], (h, c, d), jnp.float32)).astype(bf16)
        wk = (0.02 * jax.random.normal(bk[1], (h, c, d), jnp.float32)).astype(bf16)
        wv = (0.02 * jax.random.normal(bk[2], (h, c, d), jnp.float32)).astype(bf16)
        wu = (0.02 * jax.random.normal(bk[3], (h, d, c), jnp.float32)).astype(bf16)
        g1 = jnp.ones((1, c), jnp.float32)
        b1 = jnp.zeros((1, c), jnp.float32)
        w1 = (0.02 * jax.random.normal(bk[4], (c, 4 * c), jnp.float32)).astype(bf16)
        bf1 = jnp.zeros((1, 4 * c), jnp.float32)
        w2 = (0.02 * jax.random.normal(bk[5], (4 * c, c), jnp.float32)).astype(bf16)
        bf2 = jnp.zeros((1, c), jnp.float32)
        g2 = jnp.ones((1, c), jnp.float32)
        b2 = jnp.zeros((1, c), jnp.float32)
        blocks.append((wq, wk, wv, wu, g1, b1, w1, bf1, w2, bf2, g2, b2))

    return emb, pos_emb, blocks


def transformer_layer(token_ids, emb, pos_emb, block_params, *, num_heads):
    # Embedding / position-embedding gathers are plain-JAX glue feeding the
    # fused per-block Pallas kernel.
    batch, seq = token_ids.shape
    c = emb.shape[1]
    x = jnp.take(emb, token_ids, axis=0)                 # (batch, seq, c)
    x = x + pos_emb[None, :seq, :]                       # positional embedding
    for params in block_params:
        x = transformer_block(x, params, num_heads=num_heads, head_dim=c)
    return x


if __name__ == "__main__":
    embedding_dim = 32
    num_mappings = 16
    num_heads = 2
    num_blocks = 2
    seq_length = 8
    batch = 2

    key = jax.random.PRNGKey(0)
    pkey, dkey = jax.random.split(key)
    emb, pos_emb, block_params = init_params(
        pkey, embedding_dim=embedding_dim, num_mappings=num_mappings,
        num_heads=num_heads, num_blocks=num_blocks, seq_length=seq_length)

    token_ids = jax.random.randint(dkey, (batch, seq_length), 0, num_mappings,
                                   dtype=jnp.int32)

    out = transformer_layer(token_ids, emb, pos_emb, block_params,
                            num_heads=num_heads)
    jax.block_until_ready(out)
    assert out.shape == (batch, seq_length, embedding_dim)
    assert bool(jnp.all(jnp.isfinite(out)))
    print("KERNEL_OK")
</pallas_src>

<mosaic_0001>
module attributes {stable_mosaic.version = 11 : i64} {
  func.func @transformer_block_kernel(%arg0: i32, %arg1: i32, %arg2: memref<1x8x32xf32, #tpu.memory_space<vmem>>, %arg3: memref<2x32x32xbf16, #tpu.memory_space<vmem>>, %arg4: memref<2x32x32xbf16, #tpu.memory_space<vmem>>, %arg5: memref<2x32x32xbf16, #tpu.memory_space<vmem>>, %arg6: memref<2x32x32xbf16, #tpu.memory_space<vmem>>, %arg7: memref<1x32xf32, #tpu.memory_space<vmem>>, %arg8: memref<1x32xf32, #tpu.memory_space<vmem>>, %arg9: memref<32x128xbf16, #tpu.memory_space<vmem>>, %arg10: memref<1x128xf32, #tpu.memory_space<vmem>>, %arg11: memref<128x32xbf16, #tpu.memory_space<vmem>>, %arg12: memref<1x32xf32, #tpu.memory_space<vmem>>, %arg13: memref<1x32xf32, #tpu.memory_space<vmem>>, %arg14: memref<1x32xf32, #tpu.memory_space<vmem>>, %arg15: memref<1x8x32xf32, #tpu.memory_space<vmem>>, %arg16: memref<2x8x32xbf16, #tpu.memory_space<vmem>>, %arg17: memref<2x8x32xbf16, #tpu.memory_space<vmem>>) attributes {dimension_semantics = [#tpu.dimension_semantics<parallel>, #tpu.dimension_semantics<arbitrary>], iteration_bounds = array<i64: 2, 1>, scalar_prefetch = 0 : i64, scratch_operands = 2 : i64, tpu.core_type = #tpu.core_type<tc>, window_params = [{transform_indices = @transform_0, window_bounds = array<i64: 1, 8, 32>}, {pipeline_mode = #tpu.pipeline_mode<synchronous>, transform_indices = @transform_1, window_bounds = array<i64: 2, 32, 32>}, {pipeline_mode = #tpu.pipeline_mode<synchronous>, transform_indices = @transform_2, window_bounds = array<i64: 2, 32, 32>}, {pipeline_mode = #tpu.pipeline_mode<synchronous>, transform_indices = @transform_3, window_bounds = array<i64: 2, 32, 32>}, {pipeline_mode = #tpu.pipeline_mode<synchronous>, transform_indices = @transform_4, window_bounds = array<i64: 2, 32, 32>}, {pipeline_mode = #tpu.pipeline_mode<synchronous>, transform_indices = @transform_5, window_bounds = array<i64: 1, 32>}, {pipeline_mode = #tpu.pipeline_mode<synchronous>, transform_indices = @transform_6, window_bounds = array<i64: 1, 32>}, {pipeline_mode = #tpu.pipeline_mode<synchronous>, transform_indices = @transform_7, window_bounds = array<i64: 32, 128>}, {pipeline_mode = #tpu.pipeline_mode<synchronous>, transform_indices = @transform_8, window_bounds = array<i64: 1, 128>}, {pipeline_mode = #tpu.pipeline_mode<synchronous>, transform_indices = @transform_9, window_bounds = array<i64: 128, 32>}, {pipeline_mode = #tpu.pipeline_mode<synchronous>, transform_indices = @transform_10, window_bounds = array<i64: 1, 32>}, {pipeline_mode = #tpu.pipeline_mode<synchronous>, transform_indices = @transform_11, window_bounds = array<i64: 1, 32>}, {pipeline_mode = #tpu.pipeline_mode<synchronous>, transform_indices = @transform_12, window_bounds = array<i64: 1, 32>}, {transform_indices = @transform_13, window_bounds = array<i64: 1, 8, 32>}]} {
    %c0_i32 = arith.constant 0 : i32
    %0 = arith.cmpi eq, %arg1, %c0_i32 : i32
    %1 = arith.extui %0 : i1 to i32
    %c0_i32_0 = arith.constant 0 : i32
    %2 = arith.cmpi ne, %1, %c0_i32_0 : i32
    scf.if %2 {
      %c0_56 = arith.constant 0 : index
      %c0_57 = arith.constant 0 : index
      %c0_58 = arith.constant 0 : index
      %109 = vector.load %arg2[%c0_56, %c0_57, %c0_58] : memref<1x8x32xf32, #tpu.memory_space<vmem>>, vector<1x8x32xf32>
      %110 = vector.shape_cast %109 : vector<1x8x32xf32> to vector<8x32xf32>
      %111 = arith.truncf %110 : vector<8x32xf32> to vector<8x32xbf16>
      %112 = vector.shape_cast %111 : vector<8x32xbf16> to vector<1x8x32xbf16>
      %113 = vector.shape_cast %112 : vector<1x8x32xbf16> to vector<1x8x32xbf16>
      %114 = vector.broadcast %113 : vector<1x8x32xbf16> to vector<2x8x32xbf16>
      %c0_59 = arith.constant 0 : index
      %c0_60 = arith.constant 0 : index
      %c0_61 = arith.constant 0 : index
      %115 = vector.load %arg4[%c0_59, %c0_60, %c0_61] : memref<2x32x32xbf16, #tpu.memory_space<vmem>>, vector<2x32x32xbf16>
      "tpu.trace_start"() <{level = 10 : i32, message = "hsc,hcd->hsd"}> : () -> ()
      %cst_62 = arith.constant dense<0.000000e+00> : vector<2x8x32xf32>
      %116 = tpu.matmul %114, %115, %cst_62 {dimension_numbers = #tpu.dot_dimension_numbers<[2], [1], [1], [2], [0, 0, 0, 1, 1, 2], [0], [0]>} : vector<2x8x32xbf16>, vector<2x32x32xbf16>, vector<2x8x32xf32> -> vector<2x8x32xf32>
      "tpu.trace_stop"() : () -> ()
      %117 = arith.truncf %116 : vector<2x8x32xf32> to vector<2x8x32xbf16>
      %c0_63 = arith.constant 0 : index
      %c0_64 = arith.constant 0 : index
      %c0_65 = arith.constant 0 : index
      %118 = vector.load %arg16[%c0_63, %c0_64, %c0_65] : memref<2x8x32xbf16, #tpu.memory_space<vmem>>, vector<2x8x32xbf16>
      tpu.vector_store %arg16[%c0_63, %c0_64, %c0_65], %117 {strides = array<i32>} : memref<2x8x32xbf16, #tpu.memory_space<vmem>>, vector<2x8x32xbf16>,
      %c0_66 = arith.constant 0 : index
      %c0_67 = arith.constant 0 : index
      %c0_68 = arith.constant 0 : index
      %119 = vector.load %arg5[%c0_66, %c0_67, %c0_68] : memref<2x32x32xbf16, #tpu.memory_space<vmem>>, vector<2x32x32xbf16>
      "tpu.trace_start"() <{level = 10 : i32, message = "hsc,hcd->hsd"}> : () -> ()
      %cst_69 = arith.constant dense<0.000000e+00> : vector<2x8x32xf32>
      %120 = tpu.matmul %114, %119, %cst_69 {dimension_numbers = #tpu.dot_dimension_numbers<[2], [1], [1], [2], [0, 0, 0, 1, 1, 2], [0], [0]>} : vector<2x8x32xbf16>, vector<2x32x32xbf16>, vector<2x8x32xf32> -> vector<2x8x32xf32>
      "tpu.trace_stop"() : () -> ()
      %121 = arith.truncf %120 : vector<2x8x32xf32> to vector<2x8x32xbf16>
      %c0_70 = arith.constant 0 : index
      %c0_71 = arith.constant 0 : index
      %c0_72 = arith.constant 0 : index
      %122 = vector.load %arg17[%c0_70, %c0_71, %c0_72] : memref<2x8x32xbf16, #tpu.memory_space<vmem>>, vector<2x8x32xbf16>
      tpu.vector_store %arg17[%c0_70, %c0_71, %c0_72], %121 {strides = array<i32>} : memref<2x8x32xbf16, #tpu.memory_space<vmem>>, vector<2x8x32xbf16>,
    } else {
    }
    %c0 = arith.constant 0 : index
    %c0_1 = arith.constant 0 : index
    %c0_2 = arith.constant 0 : index
    %3 = vector.load %arg2[%c0, %c0_1, %c0_2] : memref<1x8x32xf32, #tpu.memory_space<vmem>>, vector<1x8x32xf32>
    %4 = vector.shape_cast %3 : vector<1x8x32xf32> to vector<8x32xf32>
    %5 = arith.truncf %4 : vector<8x32xf32> to vector<8x32xbf16>
    %6 = vector.shape_cast %5 : vector<8x32xbf16> to vector<1x8x32xbf16>
    %7 = vector.shape_cast %6 : vector<1x8x32xbf16> to vector<1x8x32xbf16>
    %8 = vector.broadcast %7 : vector<1x8x32xbf16> to vector<2x8x32xbf16>
    %c0_3 = arith.constant 0 : index
    %c0_4 = arith.constant 0 : index
    %c0_5 = arith.constant 0 : index
    %9 = vector.load %arg3[%c0_3, %c0_4, %c0_5] : memref<2x32x32xbf16, #tpu.memory_space<vmem>>, vector<2x32x32xbf16>
    "tpu.trace_start"() <{level = 10 : i32, message = "hqc,hcd->hqd"}> : () -> ()
    %cst = arith.constant dense<0.000000e+00> : vector<2x8x32xf32>
    %10 = tpu.matmul %8, %9, %cst {dimension_numbers = #tpu.dot_dimension_numbers<[2], [1], [1], [2], [0, 0, 0, 1, 1, 2], [0], [0]>} : vector<2x8x32xbf16>, vector<2x32x32xbf16>, vector<2x8x32xf32> -> vector<2x8x32xf32>
    "tpu.trace_stop"() : () -> ()
    %cst_6 = arith.constant 0.176776692 : f32
    %11 = vector.broadcast %cst_6 : f32 to vector<2x8x32xf32>
    %12 = arith.mulf %10, %11 : vector<2x8x32xf32>
    %13 = arith.truncf %12 : vector<2x8x32xf32> to vector<2x8x32xbf16>
    %c0_7 = arith.constant 0 : index
    %c0_8 = arith.constant 0 : index
    %c0_9 = arith.constant 0 : index
    %14 = vector.load %arg16[%c0_7, %c0_8, %c0_9] : memref<2x8x32xbf16, #tpu.memory_space<vmem>>, vector<2x8x32xbf16>
    "tpu.trace_start"() <{level = 10 : i32, message = "hqd,hsd->hqs"}> : () -> ()
    %cst_10 = arith.constant dense<0.000000e+00> : vector<2x8x8xf32>
    %15 = tpu.matmul %13, %14, %cst_10 {dimension_numbers = #tpu.dot_dimension_numbers<[2], [2], [1], [1], [0, 0, 0, 1, 1, 1], [0], [0]>} : vector<2x8x32xbf16>, vector<2x8x32xbf16>, vector<2x8x8xf32> -> vector<2x8x8xf32>
    "tpu.trace_stop"() : () -> ()
    %16 = tpu.iota {dimensions = array<i32: 1>} : vector<1x8x8xi32>
    %c0_i32_11 = arith.constant 0 : i32
    %17 = vector.broadcast %c0_i32_11 : i32 to vector<1x8x8xi32>
    %18 = arith.addi %17, %16 : vector<1x8x8xi32>
    %19 = tpu.iota {dimensions = array<i32: 2>} : vector<1x8x8xi32>
    %20 = arith.cmpi sge, %18, %19 : vector<1x8x8xi32>
    %cst_12 = arith.constant -1.000000e+30 : f32
    %21 = vector.shape_cast %20 : vector<1x8x8xi1> to vector<1x8x8xi1>
    %22 = vector.broadcast %21 : vector<1x8x8xi1> to vector<2x8x8xi1>
    %23 = vector.broadcast %cst_12 : f32 to vector<2x8x8xf32>
    %24 = arith.select %22, %15, %23 : vector<2x8x8xi1>, vector<2x8x8xf32>
    %cst_13 = arith.constant dense<0xFF800000> : vector<2x8xf32>
    %25 = vector.multi_reduction <maximumf>, %24, %cst_13 [2] : vector<2x8x8xf32> to vector<2x8xf32>
    %26 = vector.shape_cast %25 : vector<2x8xf32> to vector<2x8x1xf32>
    %27 = vector.broadcast %26 : vector<2x8x1xf32> to vector<2x8x8xf32>
    %28 = arith.subf %24, %27 : vector<2x8x8xf32>
    %29 = math.exp %28 : vector<2x8x8xf32>
    %cst_14 = arith.constant dense<0.000000e+00> : vector<2x8xf32>
    %30 = vector.multi_reduction <add>, %29, %cst_14 [2] : vector<2x8x8xf32> to vector<2x8xf32>
    %31 = vector.shape_cast %30 : vector<2x8xf32> to vector<2x8x1xf32>
    %32 = tpu.reciprocal %31 {approx = true} : vector<2x8x1xf32> -> vector<2x8x1xf32>
    %33 = vector.broadcast %32 : vector<2x8x1xf32> to vector<2x8x8xf32>
    %34 = arith.mulf %29, %33 : vector<2x8x8xf32>
    %35 = arith.truncf %34 : vector<2x8x8xf32> to vector<2x8x8xbf16>
    %c0_15 = arith.constant 0 : index
    %c0_16 = arith.constant 0 : index
    %c0_17 = arith.constant 0 : index
    %36 = vector.load %arg17[%c0_15, %c0_16, %c0_17] : memref<2x8x32xbf16, #tpu.memory_space<vmem>>, vector<2x8x32xbf16>
    "tpu.trace_start"() <{level = 10 : i32, message = "hqs,hsd->hqd"}> : () -> ()
    %cst_18 = arith.constant dense<0.000000e+00> : vector<2x8x32xf32>
    %37 = tpu.matmul %35, %36, %cst_18 {dimension_numbers = #tpu.dot_dimension_numbers<[2], [1], [1], [2], [0, 0, 0, 1, 1, 2], [0], [0]>} : vector<2x8x8xbf16>, vector<2x8x32xbf16>, vector<2x8x32xf32> -> vector<2x8x32xf32>
    "tpu.trace_stop"() : () -> ()
    %38 = arith.truncf %37 : vector<2x8x32xf32> to vector<2x8x32xbf16>
    %c0_19 = arith.constant 0 : index
    %c0_20 = arith.constant 0 : index
    %c0_21 = arith.constant 0 : index
    %39 = vector.load %arg6[%c0_19, %c0_20, %c0_21] : memref<2x32x32xbf16, #tpu.memory_space<vmem>>, vector<2x32x32xbf16>
    "tpu.trace_start"() <{level = 10 : i32, message = "hqd,hdc->hqc"}> : () -> ()
    %cst_22 = arith.constant dense<0.000000e+00> : vector<2x8x32xf32>
    %40 = tpu.matmul %38, %39, %cst_22 {dimension_numbers = #tpu.dot_dimension_numbers<[2], [1], [1], [2], [0, 0, 0, 1, 1, 2], [0], [0]>} : vector<2x8x32xbf16>, vector<2x32x32xbf16>, vector<2x8x32xf32> -> vector<2x8x32xf32>
    "tpu.trace_stop"() : () -> ()
    %cst_23 = arith.constant dense<0.000000e+00> : vector<8x32xf32>
    %41 = vector.multi_reduction <add>, %40, %cst_23 [0] : vector<2x8x32xf32> to vector<8x32xf32>
    %42 = arith.addf %41, %4 : vector<8x32xf32>
    %cst_24 = arith.constant dense<0.000000e+00> : vector<8xf32>
    %43 = vector.multi_reduction <add>, %42, %cst_24 [1] : vector<8x32xf32> to vector<8xf32>
    %44 = vector.shape_cast %43 : vector<8xf32> to vector<8x1xf32>
    %cst_25 = arith.constant 3.200000e+01 : f32
    %45 = vector.broadcast %cst_25 : f32 to vector<8x1xf32>
    %46 = arith.divf %44, %45 : vector<8x1xf32>
    %47 = vector.broadcast %46 : vector<8x1xf32> to vector<8x32xf32>
    %48 = arith.subf %42, %47 : vector<8x32xf32>
    %49 = arith.mulf %48, %48 : vector<8x32xf32>
    %cst_26 = arith.constant dense<0.000000e+00> : vector<8xf32>
    %50 = vector.multi_reduction <add>, %49, %cst_26 [1] : vector<8x32xf32> to vector<8xf32>
    %51 = vector.shape_cast %50 : vector<8xf32> to vector<8x1xf32>
    %cst_27 = arith.constant 3.200000e+01 : f32
    %52 = vector.broadcast %cst_27 : f32 to vector<8x1xf32>
    %53 = arith.divf %51, %52 : vector<8x1xf32>
    %54 = vector.broadcast %46 : vector<8x1xf32> to vector<8x32xf32>
    %55 = arith.subf %42, %54 : vector<8x32xf32>
    %cst_28 = arith.constant 9.99999974E-6 : f32
    %56 = vector.broadcast %cst_28 : f32 to vector<8x1xf32>
    %57 = arith.addf %53, %56 : vector<8x1xf32>
    %58 = math.rsqrt %57 : vector<8x1xf32>
    %59 = vector.broadcast %58 : vector<8x1xf32> to vector<8x32xf32>
    %60 = arith.mulf %55, %59 : vector<8x32xf32>
    %c0_29 = arith.constant 0 : index
    %c0_30 = arith.constant 0 : index
    %61 = vector.load %arg7[%c0_29, %c0_30] : memref<1x32xf32, #tpu.memory_space<vmem>>, vector<1x32xf32>
    %62 = vector.broadcast %61 : vector<1x32xf32> to vector<8x32xf32>
    %63 = arith.mulf %60, %62 : vector<8x32xf32>
    %c0_31 = arith.constant 0 : index
    %c0_32 = arith.constant 0 : index
    %64 = vector.load %arg8[%c0_31, %c0_32] : memref<1x32xf32, #tpu.memory_space<vmem>>, vector<1x32xf32>
    %65 = vector.broadcast %64 : vector<1x32xf32> to vector<8x32xf32>
    %66 = arith.addf %63, %65 : vector<8x32xf32>
    %67 = arith.truncf %66 : vector<8x32xf32> to vector<8x32xbf16>
    %c0_33 = arith.constant 0 : index
    %c0_34 = arith.constant 0 : index
    %68 = vector.load %arg9[%c0_33, %c0_34] : memref<32x128xbf16, #tpu.memory_space<vmem>>, vector<32x128xbf16>
    %cst_35 = arith.constant dense<0.000000e+00> : vector<8x128xf32>
    %69 = tpu.matmul %67, %68, %cst_35 {dimension_numbers = #tpu.dot_dimension_numbers<[1], [0], [0], [1], [0, 0, 1, 1], [], []>} : vector<8x32xbf16>, vector<32x128xbf16>, vector<8x128xf32> -> vector<8x128xf32>
    %c0_36 = arith.constant 0 : index
    %c0_37 = arith.constant 0 : index
    %70 = vector.load %arg10[%c0_36, %c0_37] : memref<1x128xf32, #tpu.memory_space<vmem>>, vector<1x128xf32>
    %71 = vector.broadcast %70 : vector<1x128xf32> to vector<8x128xf32>
    %72 = arith.addf %69, %71 : vector<8x128xf32>
    %cst_38 = arith.constant 0.000000e+00 : f32
    %73 = vector.broadcast %cst_38 : f32 to vector<8x128xf32>
    %74 = arith.maximumf %72, %73 : vector<8x128xf32>
    %75 = arith.truncf %74 : vector<8x128xf32> to vector<8x128xbf16>
    %c0_39 = arith.constant 0 : index
    %c0_40 = arith.constant 0 : index
    %76 = vector.load %arg11[%c0_39, %c0_40] : memref<128x32xbf16, #tpu.memory_space<vmem>>, vector<128x32xbf16>
    %cst_41 = arith.constant dense<0.000000e+00> : vector<8x32xf32>
    %77 = tpu.matmul %75, %76, %cst_41 {dimension_numbers = #tpu.dot_dimension_numbers<[1], [0], [0], [1], [0, 0, 1, 1], [], []>} : vector<8x128xbf16>, vector<128x32xbf16>, vector<8x32xf32> -> vector<8x32xf32>
    %c0_42 = arith.constant 0 : index
    %c0_43 = arith.constant 0 : index
    %78 = vector.load %arg12[%c0_42, %c0_43] : memref<1x32xf32, #tpu.memory_space<vmem>>, vector<1x32xf32>
    %79 = vector.broadcast %78 : vector<1x32xf32> to vector<8x32xf32>
    %80 = arith.addf %77, %79 : vector<8x32xf32>
    %81 = arith.addf %80, %66 : vector<8x32xf32>
    %cst_44 = arith.constant dense<0.000000e+00> : vector<8xf32>
    %82 = vector.multi_reduction <add>, %81, %cst_44 [1] : vector<8x32xf32> to vector<8xf32>
    %83 = vector.shape_cast %82 : vector<8xf32> to vector<8x1xf32>
    %cst_45 = arith.constant 3.200000e+01 : f32
    %84 = vector.broadcast %cst_45 : f32 to vector<8x1xf32>
    %85 = arith.divf %83, %84 : vector<8x1xf32>
    %86 = vector.broadcast %85 : vector<8x1xf32> to vector<8x32xf32>
    %87 = arith.subf %81, %86 : vector<8x32xf32>
    %88 = arith.mulf %87, %87 : vector<8x32xf32>
    %cst_46 = arith.constant dense<0.000000e+00> : vector<8xf32>
    %89 = vector.multi_reduction <add>, %88, %cst_46 [1] : vector<8x32xf32> to vector<8xf32>
    %90 = vector.shape_cast %89 : vector<8xf32> to vector<8x1xf32>
    %cst_47 = arith.constant 3.200000e+01 : f32
    %91 = vector.broadcast %cst_47 : f32 to vector<8x1xf32>
    %92 = arith.divf %90, %91 : vector<8x1xf32>
    %93 = vector.broadcast %85 : vector<8x1xf32> to vector<8x32xf32>
    %94 = arith.subf %81, %93 : vector<8x32xf32>
    %cst_48 = arith.constant 9.99999974E-6 : f32
    %95 = vector.broadcast %cst_48 : f32 to vector<8x1xf32>
    %96 = arith.addf %92, %95 : vector<8x1xf32>
    %97 = math.rsqrt %96 : vector<8x1xf32>
    %98 = vector.broadcast %97 : vector<8x1xf32> to vector<8x32xf32>
    %99 = arith.mulf %94, %98 : vector<8x32xf32>
    %c0_49 = arith.constant 0 : index
    %c0_50 = arith.constant 0 : index
    %100 = vector.load %arg13[%c0_49, %c0_50] : memref<1x32xf32, #tpu.memory_space<vmem>>, vector<1x32xf32>
    %101 = vector.broadcast %100 : vector<1x32xf32> to vector<8x32xf32>
    %102 = arith.mulf %99, %101 : vector<8x32xf32>
    %c0_51 = arith.constant 0 : index
    %c0_52 = arith.constant 0 : index
    %103 = vector.load %arg14[%c0_51, %c0_52] : memref<1x32xf32, #tpu.memory_space<vmem>>, vector<1x32xf32>
    %104 = vector.broadcast %103 : vector<1x32xf32> to vector<8x32xf32>
    %105 = arith.addf %102, %104 : vector<8x32xf32>
    %c0_53 = arith.constant 0 : index
    %c0_54 = arith.constant 0 : index
    %c0_55 = arith.constant 0 : index
    %106 = vector.load %arg15[%c0_53, %c0_54, %c0_55] : memref<1x8x32xf32, #tpu.memory_space<vmem>>, vector<1x8x32xf32>
    %107 = vector.shape_cast %106 : vector<1x8x32xf32> to vector<8x32xf32>
    %108 = vector.shape_cast %105 : vector<8x32xf32> to vector<1x8x32xf32>
    tpu.vector_store %arg15[%c0_53, %c0_54, %c0_55], %108 {strides = array<i32>} : memref<1x8x32xf32, #tpu.memory_space<vmem>>, vector<1x8x32xf32>,
    return
  }
  func.func @transform_0(%arg0: i32, %arg1: i32) -> (i32, i32, i32) {
    %c0_i32 = arith.constant 0 : i32
    %c0_i32_0 = arith.constant 0 : i32
    %c0_i32_1 = arith.constant 0 : i32
    return %arg0, %c0_i32, %c0_i32_0 : i32, i32, i32
  }
  func.func @transform_1(%arg0: i32, %arg1: i32) -> (i32, i32, i32) {
    %c0_i32 = arith.constant 0 : i32
    %c0_i32_0 = arith.constant 0 : i32
    %c0_i32_1 = arith.constant 0 : i32
    %c0_i32_2 = arith.constant 0 : i32
    return %c0_i32, %c0_i32_0, %c0_i32_1 : i32, i32, i32
  }
  func.func @transform_2(%arg0: i32, %arg1: i32) -> (i32, i32, i32) {
    %c0_i32 = arith.constant 0 : i32
    %c0_i32_0 = arith.constant 0 : i32
    %c0_i32_1 = arith.constant 0 : i32
    %c0_i32_2 = arith.constant 0 : i32
    return %c0_i32, %c0_i32_0, %c0_i32_1 : i32, i32, i32
  }
  func.func @transform_3(%arg0: i32, %arg1: i32) -> (i32, i32, i32) {
    %c0_i32 = arith.constant 0 : i32
    %c0_i32_0 = arith.constant 0 : i32
    %c0_i32_1 = arith.constant 0 : i32
    %c0_i32_2 = arith.constant 0 : i32
    return %c0_i32, %c0_i32_0, %c0_i32_1 : i32, i32, i32
  }
  func.func @transform_4(%arg0: i32, %arg1: i32) -> (i32, i32, i32) {
    %c0_i32 = arith.constant 0 : i32
    %c0_i32_0 = arith.constant 0 : i32
    %c0_i32_1 = arith.constant 0 : i32
    %c0_i32_2 = arith.constant 0 : i32
    return %c0_i32, %c0_i32_0, %c0_i32_1 : i32, i32, i32
  }
  func.func @transform_5(%arg0: i32, %arg1: i32) -> (i32, i32) {
    %c0_i32 = arith.constant 0 : i32
    %c0_i32_0 = arith.constant 0 : i32
    %c0_i32_1 = arith.constant 0 : i32
    return %c0_i32, %c0_i32_0 : i32, i32
  }
  func.func @transform_6(%arg0: i32, %arg1: i32) -> (i32, i32) {
    %c0_i32 = arith.constant 0 : i32
    %c0_i32_0 = arith.constant 0 : i32
    %c0_i32_1 = arith.constant 0 : i32
    return %c0_i32, %c0_i32_0 : i32, i32
  }
  func.func @transform_7(%arg0: i32, %arg1: i32) -> (i32, i32) {
    %c0_i32 = arith.constant 0 : i32
    %c0_i32_0 = arith.constant 0 : i32
    %c0_i32_1 = arith.constant 0 : i32
    return %c0_i32, %c0_i32_0 : i32, i32
  }
  func.func @transform_8(%arg0: i32, %arg1: i32) -> (i32, i32) {
    %c0_i32 = arith.constant 0 : i32
    %c0_i32_0 = arith.constant 0 : i32
    %c0_i32_1 = arith.constant 0 : i32
    return %c0_i32, %c0_i32_0 : i32, i32
  }
  func.func @transform_9(%arg0: i32, %arg1: i32) -> (i32, i32) {
    %c0_i32 = arith.constant 0 : i32
    %c0_i32_0 = arith.constant 0 : i32
    %c0_i32_1 = arith.constant 0 : i32
    return %c0_i32, %c0_i32_0 : i32, i32
  }
  func.func @transform_10(%arg0: i32, %arg1: i32) -> (i32, i32) {
    %c0_i32 = arith.constant 0 : i32
    %c0_i32_0 = arith.constant 0 : i32
    %c0_i32_1 = arith.constant 0 : i32
    return %c0_i32, %c0_i32_0 : i32, i32
  }
  func.func @transform_11(%arg0: i32, %arg1: i32) -> (i32, i32) {
    %c0_i32 = arith.constant 0 : i32
    %c0_i32_0 = arith.constant 0 : i32
    %c0_i32_1 = arith.constant 0 : i32
    return %c0_i32, %c0_i32_0 : i32, i32
  }
  func.func @transform_12(%arg0: i32, %arg1: i32) -> (i32, i32) {
    %c0_i32 = arith.constant 0 : i32
    %c0_i32_0 = arith.constant 0 : i32
    %c0_i32_1 = arith.constant 0 : i32
    return %c0_i32, %c0_i32_0 : i32, i32
  }
  func.func @transform_13(%arg0: i32, %arg1: i32) -> (i32, i32, i32) {
    %c0_i32 = arith.constant 0 : i32
    %c0_i32_0 = arith.constant 0 : i32
    return %arg0, %arg1, %c0_i32 : i32, i32, i32
  }
}

module attributes {stable_mosaic.version = 11 : i64} {
  func.func @transformer_block_kernel(%arg0: i32, %arg1: i32, %arg2: memref<1x8x32xf32, #tpu.memory_space<vmem>>, %arg3: memref<2x32x32xbf16, #tpu.memory_space<vmem>>, %arg4: memref<2x32x32xbf16, #tpu.memory_space<vmem>>, %arg5: memref<2x32x32xbf16, #tpu.memory_space<vmem>>, %arg6: memref<2x32x32xbf16, #tpu.memory_space<vmem>>, %arg7: memref<1x32xf32, #tpu.memory_space<vmem>>, %arg8: memref<1x32xf32, #tpu.memory_space<vmem>>, %arg9: memref<32x128xbf16, #tpu.memory_space<vmem>>, %arg10: memref<1x128xf32, #tpu.memory_space<vmem>>, %arg11: memref<128x32xbf16, #tpu.memory_space<vmem>>, %arg12: memref<1x32xf32, #tpu.memory_space<vmem>>, %arg13: memref<1x32xf32, #tpu.memory_space<vmem>>, %arg14: memref<1x32xf32, #tpu.memory_space<vmem>>, %arg15: memref<1x8x32xf32, #tpu.memory_space<vmem>>, %arg16: memref<2x8x32xbf16, #tpu.memory_space<vmem>>, %arg17: memref<2x8x32xbf16, #tpu.memory_space<vmem>>) attributes {dimension_semantics = [#tpu.dimension_semantics<parallel>, #tpu.dimension_semantics<arbitrary>], iteration_bounds = array<i64: 2, 1>, scalar_prefetch = 0 : i64, scratch_operands = 2 : i64, tpu.core_type = #tpu.core_type<tc>, window_params = [{transform_indices = @transform_0, window_bounds = array<i64: 1, 8, 32>}, {pipeline_mode = #tpu.pipeline_mode<synchronous>, transform_indices = @transform_1, window_bounds = array<i64: 2, 32, 32>}, {pipeline_mode = #tpu.pipeline_mode<synchronous>, transform_indices = @transform_2, window_bounds = array<i64: 2, 32, 32>}, {pipeline_mode = #tpu.pipeline_mode<synchronous>, transform_indices = @transform_3, window_bounds = array<i64: 2, 32, 32>}, {pipeline_mode = #tpu.pipeline_mode<synchronous>, transform_indices = @transform_4, window_bounds = array<i64: 2, 32, 32>}, {pipeline_mode = #tpu.pipeline_mode<synchronous>, transform_indices = @transform_5, window_bounds = array<i64: 1, 32>}, {pipeline_mode = #tpu.pipeline_mode<synchronous>, transform_indices = @transform_6, window_bounds = array<i64: 1, 32>}, {pipeline_mode = #tpu.pipeline_mode<synchronous>, transform_indices = @transform_7, window_bounds = array<i64: 32, 128>}, {pipeline_mode = #tpu.pipeline_mode<synchronous>, transform_indices = @transform_8, window_bounds = array<i64: 1, 128>}, {pipeline_mode = #tpu.pipeline_mode<synchronous>, transform_indices = @transform_9, window_bounds = array<i64: 128, 32>}, {pipeline_mode = #tpu.pipeline_mode<synchronous>, transform_indices = @transform_10, window_bounds = array<i64: 1, 32>}, {pipeline_mode = #tpu.pipeline_mode<synchronous>, transform_indices = @transform_11, window_bounds = array<i64: 1, 32>}, {pipeline_mode = #tpu.pipeline_mode<synchronous>, transform_indices = @transform_12, window_bounds = array<i64: 1, 32>}, {transform_indices = @transform_13, window_bounds = array<i64: 1, 8, 32>}]} {
    %c0_i32 = arith.constant 0 : i32
    %0 = arith.cmpi eq, %arg1, %c0_i32 : i32
    %1 = arith.extui %0 : i1 to i32
    %c0_i32_0 = arith.constant 0 : i32
    %2 = arith.cmpi ne, %1, %c0_i32_0 : i32
    scf.if %2 {
      %c0_56 = arith.constant 0 : index
      %c0_57 = arith.constant 0 : index
      %c0_58 = arith.constant 0 : index
      %109 = vector.load %arg2[%c0_56, %c0_57, %c0_58] : memref<1x8x32xf32, #tpu.memory_space<vmem>>, vector<1x8x32xf32>
      %110 = vector.shape_cast %109 : vector<1x8x32xf32> to vector<8x32xf32>
      %111 = arith.truncf %110 : vector<8x32xf32> to vector<8x32xbf16>
      %112 = vector.shape_cast %111 : vector<8x32xbf16> to vector<1x8x32xbf16>
      %113 = vector.shape_cast %112 : vector<1x8x32xbf16> to vector<1x8x32xbf16>
      %114 = vector.broadcast %113 : vector<1x8x32xbf16> to vector<2x8x32xbf16>
      %c0_59 = arith.constant 0 : index
      %c0_60 = arith.constant 0 : index
      %c0_61 = arith.constant 0 : index
      %115 = vector.load %arg4[%c0_59, %c0_60, %c0_61] : memref<2x32x32xbf16, #tpu.memory_space<vmem>>, vector<2x32x32xbf16>
      "tpu.trace_start"() <{level = 10 : i32, message = "hsc,hcd->hsd"}> : () -> ()
      %cst_62 = arith.constant dense<0.000000e+00> : vector<2x8x32xf32>
      %116 = tpu.matmul %114, %115, %cst_62 {dimension_numbers = #tpu.dot_dimension_numbers<[2], [1], [1], [2], [0, 0, 0, 1, 1, 2], [0], [0]>} : vector<2x8x32xbf16>, vector<2x32x32xbf16>, vector<2x8x32xf32> -> vector<2x8x32xf32>
      "tpu.trace_stop"() : () -> ()
      %117 = arith.truncf %116 : vector<2x8x32xf32> to vector<2x8x32xbf16>
      %c0_63 = arith.constant 0 : index
      %c0_64 = arith.constant 0 : index
      %c0_65 = arith.constant 0 : index
      %118 = vector.load %arg16[%c0_63, %c0_64, %c0_65] : memref<2x8x32xbf16, #tpu.memory_space<vmem>>, vector<2x8x32xbf16>
      tpu.vector_store %arg16[%c0_63, %c0_64, %c0_65], %117 {strides = array<i32>} : memref<2x8x32xbf16, #tpu.memory_space<vmem>>, vector<2x8x32xbf16>,
      %c0_66 = arith.constant 0 : index
      %c0_67 = arith.constant 0 : index
      %c0_68 = arith.constant 0 : index
      %119 = vector.load %arg5[%c0_66, %c0_67, %c0_68] : memref<2x32x32xbf16, #tpu.memory_space<vmem>>, vector<2x32x32xbf16>
      "tpu.trace_start"() <{level = 10 : i32, message = "hsc,hcd->hsd"}> : () -> ()
      %cst_69 = arith.constant dense<0.000000e+00> : vector<2x8x32xf32>
      %120 = tpu.matmul %114, %119, %cst_69 {dimension_numbers = #tpu.dot_dimension_numbers<[2], [1], [1], [2], [0, 0, 0, 1, 1, 2], [0], [0]>} : vector<2x8x32xbf16>, vector<2x32x32xbf16>, vector<2x8x32xf32> -> vector<2x8x32xf32>
      "tpu.trace_stop"() : () -> ()
      %121 = arith.truncf %120 : vector<2x8x32xf32> to vector<2x8x32xbf16>
      %c0_70 = arith.constant 0 : index
      %c0_71 = arith.constant 0 : index
      %c0_72 = arith.constant 0 : index
      %122 = vector.load %arg17[%c0_70, %c0_71, %c0_72] : memref<2x8x32xbf16, #tpu.memory_space<vmem>>, vector<2x8x32xbf16>
      tpu.vector_store %arg17[%c0_70, %c0_71, %c0_72], %121 {strides = array<i32>} : memref<2x8x32xbf16, #tpu.memory_space<vmem>>, vector<2x8x32xbf16>,
    } else {
    }
    %c0 = arith.constant 0 : index
    %c0_1 = arith.constant 0 : index
    %c0_2 = arith.constant 0 : index
    %3 = vector.load %arg2[%c0, %c0_1, %c0_2] : memref<1x8x32xf32, #tpu.memory_space<vmem>>, vector<1x8x32xf32>
    %4 = vector.shape_cast %3 : vector<1x8x32xf32> to vector<8x32xf32>
    %5 = arith.truncf %4 : vector<8x32xf32> to vector<8x32xbf16>
    %6 = vector.shape_cast %5 : vector<8x32xbf16> to vector<1x8x32xbf16>
    %7 = vector.shape_cast %6 : vector<1x8x32xbf16> to vector<1x8x32xbf16>
    %8 = vector.broadcast %7 : vector<1x8x32xbf16> to vector<2x8x32xbf16>
    %c0_3 = arith.constant 0 : index
    %c0_4 = arith.constant 0 : index
    %c0_5 = arith.constant 0 : index
    %9 = vector.load %arg3[%c0_3, %c0_4, %c0_5] : memref<2x32x32xbf16, #tpu.memory_space<vmem>>, vector<2x32x32xbf16>
    "tpu.trace_start"() <{level = 10 : i32, message = "hqc,hcd->hqd"}> : () -> ()
    %cst = arith.constant dense<0.000000e+00> : vector<2x8x32xf32>
    %10 = tpu.matmul %8, %9, %cst {dimension_numbers = #tpu.dot_dimension_numbers<[2], [1], [1], [2], [0, 0, 0, 1, 1, 2], [0], [0]>} : vector<2x8x32xbf16>, vector<2x32x32xbf16>, vector<2x8x32xf32> -> vector<2x8x32xf32>
    "tpu.trace_stop"() : () -> ()
    %cst_6 = arith.constant 0.176776692 : f32
    %11 = vector.broadcast %cst_6 : f32 to vector<2x8x32xf32>
    %12 = arith.mulf %10, %11 : vector<2x8x32xf32>
    %13 = arith.truncf %12 : vector<2x8x32xf32> to vector<2x8x32xbf16>
    %c0_7 = arith.constant 0 : index
    %c0_8 = arith.constant 0 : index
    %c0_9 = arith.constant 0 : index
    %14 = vector.load %arg16[%c0_7, %c0_8, %c0_9] : memref<2x8x32xbf16, #tpu.memory_space<vmem>>, vector<2x8x32xbf16>
    "tpu.trace_start"() <{level = 10 : i32, message = "hqd,hsd->hqs"}> : () -> ()
    %cst_10 = arith.constant dense<0.000000e+00> : vector<2x8x8xf32>
    %15 = tpu.matmul %13, %14, %cst_10 {dimension_numbers = #tpu.dot_dimension_numbers<[2], [2], [1], [1], [0, 0, 0, 1, 1, 1], [0], [0]>} : vector<2x8x32xbf16>, vector<2x8x32xbf16>, vector<2x8x8xf32> -> vector<2x8x8xf32>
    "tpu.trace_stop"() : () -> ()
    %16 = tpu.iota {dimensions = array<i32: 1>} : vector<1x8x8xi32>
    %c0_i32_11 = arith.constant 0 : i32
    %17 = vector.broadcast %c0_i32_11 : i32 to vector<1x8x8xi32>
    %18 = arith.addi %17, %16 : vector<1x8x8xi32>
    %19 = tpu.iota {dimensions = array<i32: 2>} : vector<1x8x8xi32>
    %20 = arith.cmpi sge, %18, %19 : vector<1x8x8xi32>
    %cst_12 = arith.constant -1.000000e+30 : f32
    %21 = vector.shape_cast %20 : vector<1x8x8xi1> to vector<1x8x8xi1>
    %22 = vector.broadcast %21 : vector<1x8x8xi1> to vector<2x8x8xi1>
    %23 = vector.broadcast %cst_12 : f32 to vector<2x8x8xf32>
    %24 = arith.select %22, %15, %23 : vector<2x8x8xi1>, vector<2x8x8xf32>
    %cst_13 = arith.constant dense<0xFF800000> : vector<2x8xf32>
    %25 = vector.multi_reduction <maximumf>, %24, %cst_13 [2] : vector<2x8x8xf32> to vector<2x8xf32>
    %26 = vector.shape_cast %25 : vector<2x8xf32> to vector<2x8x1xf32>
    %27 = vector.broadcast %26 : vector<2x8x1xf32> to vector<2x8x8xf32>
    %28 = arith.subf %24, %27 : vector<2x8x8xf32>
    %29 = math.exp %28 : vector<2x8x8xf32>
    %cst_14 = arith.constant dense<0.000000e+00> : vector<2x8xf32>
    %30 = vector.multi_reduction <add>, %29, %cst_14 [2] : vector<2x8x8xf32> to vector<2x8xf32>
    %31 = vector.shape_cast %30 : vector<2x8xf32> to vector<2x8x1xf32>
    %32 = tpu.reciprocal %31 {approx = true} : vector<2x8x1xf32> -> vector<2x8x1xf32>
    %33 = vector.broadcast %32 : vector<2x8x1xf32> to vector<2x8x8xf32>
    %34 = arith.mulf %29, %33 : vector<2x8x8xf32>
    %35 = arith.truncf %34 : vector<2x8x8xf32> to vector<2x8x8xbf16>
    %c0_15 = arith.constant 0 : index
    %c0_16 = arith.constant 0 : index
    %c0_17 = arith.constant 0 : index
    %36 = vector.load %arg17[%c0_15, %c0_16, %c0_17] : memref<2x8x32xbf16, #tpu.memory_space<vmem>>, vector<2x8x32xbf16>
    "tpu.trace_start"() <{level = 10 : i32, message = "hqs,hsd->hqd"}> : () -> ()
    %cst_18 = arith.constant dense<0.000000e+00> : vector<2x8x32xf32>
    %37 = tpu.matmul %35, %36, %cst_18 {dimension_numbers = #tpu.dot_dimension_numbers<[2], [1], [1], [2], [0, 0, 0, 1, 1, 2], [0], [0]>} : vector<2x8x8xbf16>, vector<2x8x32xbf16>, vector<2x8x32xf32> -> vector<2x8x32xf32>
    "tpu.trace_stop"() : () -> ()
    %38 = arith.truncf %37 : vector<2x8x32xf32> to vector<2x8x32xbf16>
    %c0_19 = arith.constant 0 : index
    %c0_20 = arith.constant 0 : index
    %c0_21 = arith.constant 0 : index
    %39 = vector.load %arg6[%c0_19, %c0_20, %c0_21] : memref<2x32x32xbf16, #tpu.memory_space<vmem>>, vector<2x32x32xbf16>
    "tpu.trace_start"() <{level = 10 : i32, message = "hqd,hdc->hqc"}> : () -> ()
    %cst_22 = arith.constant dense<0.000000e+00> : vector<2x8x32xf32>
    %40 = tpu.matmul %38, %39, %cst_22 {dimension_numbers = #tpu.dot_dimension_numbers<[2], [1], [1], [2], [0, 0, 0, 1, 1, 2], [0], [0]>} : vector<2x8x32xbf16>, vector<2x32x32xbf16>, vector<2x8x32xf32> -> vector<2x8x32xf32>
    "tpu.trace_stop"() : () -> ()
    %cst_23 = arith.constant dense<0.000000e+00> : vector<8x32xf32>
    %41 = vector.multi_reduction <add>, %40, %cst_23 [0] : vector<2x8x32xf32> to vector<8x32xf32>
    %42 = arith.addf %41, %4 : vector<8x32xf32>
    %cst_24 = arith.constant dense<0.000000e+00> : vector<8xf32>
    %43 = vector.multi_reduction <add>, %42, %cst_24 [1] : vector<8x32xf32> to vector<8xf32>
    %44 = vector.shape_cast %43 : vector<8xf32> to vector<8x1xf32>
    %cst_25 = arith.constant 3.200000e+01 : f32
    %45 = vector.broadcast %cst_25 : f32 to vector<8x1xf32>
    %46 = arith.divf %44, %45 : vector<8x1xf32>
    %47 = vector.broadcast %46 : vector<8x1xf32> to vector<8x32xf32>
    %48 = arith.subf %42, %47 : vector<8x32xf32>
    %49 = arith.mulf %48, %48 : vector<8x32xf32>
    %cst_26 = arith.constant dense<0.000000e+00> : vector<8xf32>
    %50 = vector.multi_reduction <add>, %49, %cst_26 [1] : vector<8x32xf32> to vector<8xf32>
    %51 = vector.shape_cast %50 : vector<8xf32> to vector<8x1xf32>
    %cst_27 = arith.constant 3.200000e+01 : f32
    %52 = vector.broadcast %cst_27 : f32 to vector<8x1xf32>
    %53 = arith.divf %51, %52 : vector<8x1xf32>
    %54 = vector.broadcast %46 : vector<8x1xf32> to vector<8x32xf32>
    %55 = arith.subf %42, %54 : vector<8x32xf32>
    %cst_28 = arith.constant 9.99999974E-6 : f32
    %56 = vector.broadcast %cst_28 : f32 to vector<8x1xf32>
    %57 = arith.addf %53, %56 : vector<8x1xf32>
    %58 = math.rsqrt %57 : vector<8x1xf32>
    %59 = vector.broadcast %58 : vector<8x1xf32> to vector<8x32xf32>
    %60 = arith.mulf %55, %59 : vector<8x32xf32>
    %c0_29 = arith.constant 0 : index
    %c0_30 = arith.constant 0 : index
    %61 = vector.load %arg7[%c0_29, %c0_30] : memref<1x32xf32, #tpu.memory_space<vmem>>, vector<1x32xf32>
    %62 = vector.broadcast %61 : vector<1x32xf32> to vector<8x32xf32>
    %63 = arith.mulf %60, %62 : vector<8x32xf32>
    %c0_31 = arith.constant 0 : index
    %c0_32 = arith.constant 0 : index
    %64 = vector.load %arg8[%c0_31, %c0_32] : memref<1x32xf32, #tpu.memory_space<vmem>>, vector<1x32xf32>
    %65 = vector.broadcast %64 : vector<1x32xf32> to vector<8x32xf32>
    %66 = arith.addf %63, %65 : vector<8x32xf32>
    %67 = arith.truncf %66 : vector<8x32xf32> to vector<8x32xbf16>
    %c0_33 = arith.constant 0 : index
    %c0_34 = arith.constant 0 : index
    %68 = vector.load %arg9[%c0_33, %c0_34] : memref<32x128xbf16, #tpu.memory_space<vmem>>, vector<32x128xbf16>
    %cst_35 = arith.constant dense<0.000000e+00> : vector<8x128xf32>
    %69 = tpu.matmul %67, %68, %cst_35 {dimension_numbers = #tpu.dot_dimension_numbers<[1], [0], [0], [1], [0, 0, 1, 1], [], []>} : vector<8x32xbf16>, vector<32x128xbf16>, vector<8x128xf32> -> vector<8x128xf32>
    %c0_36 = arith.constant 0 : index
    %c0_37 = arith.constant 0 : index
    %70 = vector.load %arg10[%c0_36, %c0_37] : memref<1x128xf32, #tpu.memory_space<vmem>>, vector<1x128xf32>
    %71 = vector.broadcast %70 : vector<1x128xf32> to vector<8x128xf32>
    %72 = arith.addf %69, %71 : vector<8x128xf32>
    %cst_38 = arith.constant 0.000000e+00 : f32
    %73 = vector.broadcast %cst_38 : f32 to vector<8x128xf32>
    %74 = arith.maximumf %72, %73 : vector<8x128xf32>
    %75 = arith.truncf %74 : vector<8x128xf32> to vector<8x128xbf16>
    %c0_39 = arith.constant 0 : index
    %c0_40 = arith.constant 0 : index
    %76 = vector.load %arg11[%c0_39, %c0_40] : memref<128x32xbf16, #tpu.memory_space<vmem>>, vector<128x32xbf16>
    %cst_41 = arith.constant dense<0.000000e+00> : vector<8x32xf32>
    %77 = tpu.matmul %75, %76, %cst_41 {dimension_numbers = #tpu.dot_dimension_numbers<[1], [0], [0], [1], [0, 0, 1, 1], [], []>} : vector<8x128xbf16>, vector<128x32xbf16>, vector<8x32xf32> -> vector<8x32xf32>
    %c0_42 = arith.constant 0 : index
    %c0_43 = arith.constant 0 : index
    %78 = vector.load %arg12[%c0_42, %c0_43] : memref<1x32xf32, #tpu.memory_space<vmem>>, vector<1x32xf32>
    %79 = vector.broadcast %78 : vector<1x32xf32> to vector<8x32xf32>
    %80 = arith.addf %77, %79 : vector<8x32xf32>
    %81 = arith.addf %80, %66 : vector<8x32xf32>
    %cst_44 = arith.constant dense<0.000000e+00> : vector<8xf32>
    %82 = vector.multi_reduction <add>, %81, %cst_44 [1] : vector<8x32xf32> to vector<8xf32>
    %83 = vector.shape_cast %82 : vector<8xf32> to vector<8x1xf32>
    %cst_45 = arith.constant 3.200000e+01 : f32
    %84 = vector.broadcast %cst_45 : f32 to vector<8x1xf32>
    %85 = arith.divf %83, %84 : vector<8x1xf32>
    %86 = vector.broadcast %85 : vector<8x1xf32> to vector<8x32xf32>
    %87 = arith.subf %81, %86 : vector<8x32xf32>
    %88 = arith.mulf %87, %87 : vector<8x32xf32>
    %cst_46 = arith.constant dense<0.000000e+00> : vector<8xf32>
    %89 = vector.multi_reduction <add>, %88, %cst_46 [1] : vector<8x32xf32> to vector<8xf32>
    %90 = vector.shape_cast %89 : vector<8xf32> to vector<8x1xf32>
    %cst_47 = arith.constant 3.200000e+01 : f32
    %91 = vector.broadcast %cst_47 : f32 to vector<8x1xf32>
    %92 = arith.divf %90, %91 : vector<8x1xf32>
    %93 = vector.broadcast %85 : vector<8x1xf32> to vector<8x32xf32>
    %94 = arith.subf %81, %93 : vector<8x32xf32>
    %cst_48 = arith.constant 9.99999974E-6 : f32
    %95 = vector.broadcast %cst_48 : f32 to vector<8x1xf32>
    %96 = arith.addf %92, %95 : vector<8x1xf32>
    %97 = math.rsqrt %96 : vector<8x1xf32>
    %98 = vector.broadcast %97 : vector<8x1xf32> to vector<8x32xf32>
    %99 = arith.mulf %94, %98 : vector<8x32xf32>
    %c0_49 = arith.constant 0 : index
    %c0_50 = arith.constant 0 : index
    %100 = vector.load %arg13[%c0_49, %c0_50] : memref<1x32xf32, #tpu.memory_space<vmem>>, vector<1x32xf32>
    %101 = vector.broadcast %100 : vector<1x32xf32> to vector<8x32xf32>
    %102 = arith.mulf %99, %101 : vector<8x32xf32>
    %c0_51 = arith.constant 0 : index
    %c0_52 = arith.constant 0 : index
    %103 = vector.load %arg14[%c0_51, %c0_52] : memref<1x32xf32, #tpu.memory_space<vmem>>, vector<1x32xf32>
    %104 = vector.broadcast %103 : vector<1x32xf32> to vector<8x32xf32>
    %105 = arith.addf %102, %104 : vector<8x32xf32>
    %c0_53 = arith.constant 0 : index
    %c0_54 = arith.constant 0 : index
    %c0_55 = arith.constant 0 : index
    %106 = vector.load %arg15[%c0_53, %c0_54, %c0_55] : memref<1x8x32xf32, #tpu.memory_space<vmem>>, vector<1x8x32xf32>
    %107 = vector.shape_cast %106 : vector<1x8x32xf32> to vector<8x32xf32>
    %108 = vector.shape_cast %105 : vector<8x32xf32> to vector<1x8x32xf32>
    tpu.vector_store %arg15[%c0_53, %c0_54, %c0_55], %108 {strides = array<i32>} : memref<1x8x32xf32, #tpu.memory_space<vmem>>, vector<1x8x32xf32>,
    return
  }
  func.func @transform_0(%arg0: i32, %arg1: i32) -> (i32, i32, i32) {
    %c0_i32 = arith.constant 0 : i32
    %c0_i32_0 = arith.constant 0 : i32
    %c0_i32_1 = arith.constant 0 : i32
    return %arg0, %c0_i32, %c0_i32_0 : i32, i32, i32
  }
  func.func @transform_1(%arg0: i32, %arg1: i32) -> (i32, i32, i32) {
    %c0_i32 = arith.constant 0 : i32
    %c0_i32_0 = arith.constant 0 : i32
    %c0_i32_1 = arith.constant 0 : i32
    %c0_i32_2 = arith.constant 0 : i32
    return %c0_i32, %c0_i32_0, %c0_i32_1 : i32, i32, i32
  }
  func.func @transform_2(%arg0: i32, %arg1: i32) -> (i32, i32, i32) {
    %c0_i32 = arith.constant 0 : i32
    %c0_i32_0 = arith.constant 0 : i32
    %c0_i32_1 = arith.constant 0 : i32
    %c0_i32_2 = arith.constant 0 : i32
    return %c0_i32, %c0_i32_0, %c0_i32_1 : i32, i32, i32
  }
  func.func @transform_3(%arg0: i32, %arg1: i32) -> (i32, i32, i32) {
    %c0_i32 = arith.constant 0 : i32
    %c0_i32_0 = arith.constant 0 : i32
    %c0_i32_1 = arith.constant 0 : i32
    %c0_i32_2 = arith.constant 0 : i32
    return %c0_i32, %c0_i32_0, %c0_i32_1 : i32, i32, i32
  }
  func.func @transform_4(%arg0: i32, %arg1: i32) -> (i32, i32, i32) {
    %c0_i32 = arith.constant 0 : i32
    %c0_i32_0 = arith.constant 0 : i32
    %c0_i32_1 = arith.constant 0 : i32
    %c0_i32_2 = arith.constant 0 : i32
    return %c0_i32, %c0_i32_0, %c0_i32_1 : i32, i32, i32
  }
  func.func @transform_5(%arg0: i32, %arg1: i32) -> (i32, i32) {
    %c0_i32 = arith.constant 0 : i32
    %c0_i32_0 = arith.constant 0 : i32
    %c0_i32_1 = arith.constant 0 : i32
    return %c0_i32, %c0_i32_0 : i32, i32
  }
  func.func @transform_6(%arg0: i32, %arg1: i32) -> (i32, i32) {
    %c0_i32 = arith.constant 0 : i32
    %c0_i32_0 = arith.constant 0 : i32
    %c0_i32_1 = arith.constant 0 : i32
    return %c0_i32, %c0_i32_0 : i32, i32
  }
  func.func @transform_7(%arg0: i32, %arg1: i32) -> (i32, i32) {
    %c0_i32 = arith.constant 0 : i32
    %c0_i32_0 = arith.constant 0 : i32
    %c0_i32_1 = arith.constant 0 : i32
    return %c0_i32, %c0_i32_0 : i32, i32
  }
  func.func @transform_8(%arg0: i32, %arg1: i32) -> (i32, i32) {
    %c0_i32 = arith.constant 0 : i32
    %c0_i32_0 = arith.constant 0 : i32
    %c0_i32_1 = arith.constant 0 : i32
    return %c0_i32, %c0_i32_0 : i32, i32
  }
  func.func @transform_9(%arg0: i32, %arg1: i32) -> (i32, i32) {
    %c0_i32 = arith.constant 0 : i32
    %c0_i32_0 = arith.constant 0 : i32
    %c0_i32_1 = arith.constant 0 : i32
    return %c0_i32, %c0_i32_0 : i32, i32
  }
  func.func @transform_10(%arg0: i32, %arg1: i32) -> (i32, i32) {
    %c0_i32 = arith.constant 0 : i32
    %c0_i32_0 = arith.constant 0 : i32
    %c0_i32_1 = arith.constant 0 : i32
    return %c0_i32, %c0_i32_0 : i32, i32
  }
  func.func @transform_11(%arg0: i32, %arg1: i32) -> (i32, i32) {
    %c0_i32 = arith.constant 0 : i32
    %c0_i32_0 = arith.constant 0 : i32
    %c0_i32_1 = arith.constant 0 : i32
    return %c0_i32, %c0_i32_0 : i32, i32
  }
  func.func @transform_12(%arg0: i32, %arg1: i32) -> (i32, i32) {
    %c0_i32 = arith.constant 0 : i32
    %c0_i32_0 = arith.constant 0 : i32
    %c0_i32_1 = arith.constant 0 : i32
    return %c0_i32, %c0_i32_0 : i32, i32
  }
  func.func @transform_13(%arg0: i32, %arg1: i32) -> (i32, i32, i32) {
    %c0_i32 = arith.constant 0 : i32
    %c0_i32_0 = arith.constant 0 : i32
    return %arg0, %arg1, %c0_i32 : i32, i32, i32
  }
}

</mosaic_0001>

<llo_original>
// kernel: tpu_custom_call.1
$region0: #{tpu_custom_call.1}
  #allocation0 [shape = 'u32[]', space=smem, size = 0x4, offset = 0x4, fixed_abs, tag = 'smem constant byte address 0x4 - core index']
  #allocation1 [shape = 'u32[144,128]{1,0:T(1,128)}', space=vmem, size = 0x12000, scoped, tag = 'internal scratch']
  #allocation2 [shape = 'bf16[2,8,32]{2,1,0:T(8,128)(2,1)}', space=vmem, size = 0x1000, scoped, tag = 'scratch operand']
  #allocation3 [shape = 'bf16[2,8,32]{2,1,0:T(8,128)(2,1)}', space=vmem, size = 0x1000, scoped, tag = 'scratch operand']
  %s0 = inlined_call_operand.vmem [shape: f32[2,8,32], index: 0, kind: input, shape index: {}]
  %s1 = inlined_call_operand.vmem [shape: bf16[2,32,32], index: 1, kind: input, shape index: {}]
  %s2 = inlined_call_operand.vmem [shape: bf16[2,32,32], index: 2, kind: input, shape index: {}]
  %s3 = inlined_call_operand.hbm [shape: bf16[2,32,32], index: 3, kind: input, shape index: {}]
  %s4 = inlined_call_operand.hbm [shape: bf16[2,32,32], index: 4, kind: input, shape index: {}]
  %s5 = inlined_call_operand.vmem [shape: f32[1,32], index: 5, kind: input, shape index: {}]
  %s6 = inlined_call_operand.vmem [shape: f32[1,32], index: 6, kind: input, shape index: {}]
  %s7 = inlined_call_operand.hbm [shape: bf16[32,128], index: 7, kind: input, shape index: {}]
  %s8 = inlined_call_operand.vmem [shape: f32[1,128], index: 8, kind: input, shape index: {}]
  %s9 = inlined_call_operand.vmem [shape: bf16[128,32], index: 9, kind: input, shape index: {}]
  %s10 = inlined_call_operand.vmem [shape: f32[1,32], index: 10, kind: input, shape index: {}]
  %s11 = inlined_call_operand.vmem [shape: f32[1,32], index: 11, kind: input, shape index: {}]
  %s12 = inlined_call_operand.vmem [shape: f32[1,32], index: 12, kind: input, shape index: {}]
  %s13 = inlined_call_operand.hbm [shape: f32[2,8,32], index: 13, kind: output, shape index: {}]
  %s14 = sld [smem:[#allocation0]]
  $region101: #{tpu_custom_call.1} parent=0
    _
  %s16 = ssub.s32 1, %s14
  %s17 = scalar_select 0, %s16, %s14
  $region1: #{tpu_custom_call.1} parent=0
    #allocation4 [shape = 'u8[16384]{0}', space=vmem, size = 0x4000, scoped, tag = 'input window, operand 3, single buffered']
    #allocation5 [shape = 's32[2]{0}', space=sflag, size = 0x8, scoped, tag = 'scoped memory for tpu_custom_call.1']
    #allocation6 [shape = 's32[2]{0}', space=sflag, size = 0x8, scoped, tag = 'scoped memory for tpu_custom_call.1']
    #allocation7 [shape = 'u8[16384]{0}', space=vmem, size = 0x4000, scoped, tag = 'input window, operand 4, single buffered']
    #allocation8 [shape = 's32[1]{0}', space=sflag, size = 0x4, scoped, tag = 'scoped memory for tpu_custom_call.1']
    #allocation9 [shape = 'u8[8192]{0}', space=vmem, size = 0x2000, scoped, tag = 'input window, operand 7, single buffered']
    #allocation10 [shape = 'u8[8192]{0}', space=vmem, size = 0x2000, scoped, tag = 'output window, operand 0']
    %18 = vsyncpa [#allocation5], 0
    %19 = vsyncpa [#allocation8], 0
    %20 = vsyncpa [#allocation6], 0
    %s21 = scalar_lea.sflag [#allocation6], 1
    %22 = vsyncpa %s21, 0
    loop: start=0, step=1, limit=4
    $region2: #{tpu_custom_call.1} parent=1 // loop_pre_header
      _
    $region3: #{tpu_custom_call.1} parent=1 // loop_header
      %s24 = sphi 0, %s28
      %p25 = scmp.ge.s32.totalorder %s24, 4
      %s31 = sphi 0, %s43
      %s32 = sphi 0, %s39
      %s33 = sphi 0, %s31
      %s34 = sphi 0, %s32
      %s35 = sphi 0, %s33
      %s36 = sphi 0, %s34
      %s46 = sphi 0, %s48
      %s49 = sphi 0, %s46
      %s50 = sphi 0, %s49
      %s66 = sphi 0, %s50
      %s70 = sphi 0, %s70
      %s72 = sphi 0, %s70
      %s73 = sphi 0, %s72
      %s87 = sphi 0, %s73
      %s91 = sphi 0, %s91
      %s93 = sphi 0, %s91
      %s94 = sphi 0, %s93
      %s108 = sphi 0, %s94
      %s112 = sphi 0, %s112
      %s114 = sphi 0, %s112
      %s115 = sphi 0, %s114
      %s129 = sphi 0, %s115
      %s133 = sphi 0, %s133
      %s135 = sphi 0, %s133
      %s136 = sphi 0, %s135
      %s150 = sphi 0, %s136
      %s154 = sphi 0, %s154
      %s156 = sphi 0, %s154
      %s157 = sphi 0, %s156
      %s171 = sphi 0, %s157
      %s175 = sphi 0, %s175
      %s177 = sphi 0, %s175
      %s178 = sphi 0, %s177
      %s192 = sphi 0, %s178
      %s196 = sphi 0, %s196
      %s198 = sphi 0, %s196
      %s199 = sphi 0, %s198
      %s213 = sphi 0, %s199
      %s217 = sphi 0, %s217
      %s219 = sphi 0, %s217
      %s220 = sphi 0, %s219
      %s234 = sphi 0, %s220
      %s238 = sphi 0, %s238
      %s240 = sphi 0, %s238
      %s241 = sphi 0, %s240
      %s255 = sphi 0, %s241
      %s259 = sphi 0, %s259
      %s261 = sphi 0, %s259
      %s262 = sphi 0, %s261
      %s276 = sphi 0, %s262
      %s280 = sphi 0, %s280
      %s282 = sphi 0, %s280
      %s283 = sphi 0, %s282
      %s297 = sphi 0, %s283
      %s301 = sphi 0, %s301
      %s303 = sphi 0, %s301
      %s304 = sphi 0, %s303
      %s318 = sphi 0, %s304
      %s326 = sphi 0, %s328
      %s329 = sphi 0, %s326
      %s330 = sphi 0, %s329
      %s346 = sphi 0, %s330
    $region4: #{tpu_custom_call.1} parent=1 // loop_header_branch
      %27 = sbr.rel (%p25) target = $region8
    $region5: #{tpu_custom_call.1} parent=1 // loop_body
      %s29 = ssub.s32 %s24, 1
      %s30 = ssub.s32 %s24, 2
      %s37 = sadd.s32 1, %s32
      %p38 = scmp.ge.s32.totalorder %s37, 1
      %s39 = scalar_select %p38, 0, %s37
      %s40 = sadd.s32 1, %s31
      %s41 = scalar_select %p38, %s40, %s31
      %p42 = scmp.ge.s32.totalorder %s41, 2
      %s43 = scalar_select %p42, 0, %s41
      %s44 = ssub.s32 %s31, %s43
      %p45 = scmp.eq.s32.totalorder %s44, 0
      %s47 = sadd.s32 %s46, 1
      %s48 = scalar_select %p45, %s46, %s47
      %p51 = pneg %p45
      %p52 = scmp.eq.s32.totalorder %s24, 1
      %p53 = por %p51, %p52
      %p54 = scmp.ne.s32.totalorder %s46, %s49
      %p55 = scmp.eq.s32.totalorder %s24, 0
      %p56 = por %p54, %p55
      %p57 = scmp.ne.s32.totalorder %s46, %s49
      %p58 = scmp.eq.s32.totalorder %s29, 1
      %p59 = por %p57, %p58
      %p60 = scmp.ne.s32.totalorder %s49, %s50
      %p61 = scmp.eq.s32.totalorder %s29, 0
      %p62 = por %p60, %p61
      %p63 = scmp.ne.s32.totalorder %s49, %s50
      %p64 = scmp.eq.s32.totalorder %s30, 1
      %p65 = por %p63, %p64
      %p67 = scmp.ne.s32.totalorder %s50, %s66
      %p68 = scmp.eq.s32.totalorder %s30, 0
      %p69 = por %p67, %p68
      %s71 = sadd.s32 %s70, 1
      %p74 = scmp.eq.s32.totalorder %s24, 1
      %p75 = scmp.ne.s32.totalorder %s70, %s72
      %p76 = scmp.eq.s32.totalorder %s24, 0
      %p77 = por %p75, %p76
      %p78 = scmp.ne.s32.totalorder %s70, %s72
      %p79 = scmp.eq.s32.totalorder %s29, 1
      %p80 = por %p78, %p79
      %p81 = scmp.ne.s32.totalorder %s72, %s73
      %p82 = scmp.eq.s32.totalorder %s29, 0
      %p83 = por %p81, %p82
      %p84 = scmp.ne.s32.totalorder %s72, %s73
      %p85 = scmp.eq.s32.totalorder %s30, 1
      %p86 = por %p84, %p85
      %p88 = scmp.ne.s32.totalorder %s73, %s87
      %p89 = scmp.eq.s32.totalorder %s30, 0
      %p90 = por %p88, %p89
      %s92 = sadd.s32 %s91, 1
      %p95 = scmp.eq.s32.totalorder %s24, 1
      %p96 = scmp.ne.s32.totalorder %s91, %s93
      %p97 = scmp.eq.s32.totalorder %s24, 0
      %p98 = por %p96, %p97
      %p99 = scmp.ne.s32.totalorder %s91, %s93
      %p100 = scmp.eq.s32.totalorder %s29, 1
      %p101 = por %p99, %p100
      %p102 = scmp.ne.s32.totalorder %s93, %s94
      %p103 = scmp.eq.s32.totalorder %s29, 0
      %p104 = por %p102, %p103
      %p105 = scmp.ne.s32.totalorder %s93, %s94
      %p106 = scmp.eq.s32.totalorder %s30, 1
      %p107 = por %p105, %p106
      %p109 = scmp.ne.s32.totalorder %s94, %s108
      %p110 = scmp.eq.s32.totalorder %s30, 0
      %p111 = por %p109, %p110
      %s113 = sadd.s32 %s112, 1
      %p116 = scmp.eq.s32.totalorder %s24, 1
      %p117 = scmp.ne.s32.totalorder %s112, %s114
      %p118 = scmp.eq.s32.totalorder %s24, 0
      %p119 = por %p117, %p118
      %p120 = scmp.ne.s32.totalorder %s112, %s114
      %p121 = scmp.eq.s32.totalorder %s29, 1
      %p122 = por %p120, %p121
      %p123 = scmp.ne.s32.totalorder %s114, %s115
      %p124 = scmp.eq.s32.totalorder %s29, 0
      %p125 = por %p123, %p124
      %p126 = scmp.ne.s32.totalorder %s114, %s115
      %p127 = scmp.eq.s32.totalorder %s30, 1
      %p128 = por %p126, %p127
      %p130 = scmp.ne.s32.totalorder %s115, %s129
      %p131 = scmp.eq.s32.totalorder %s30, 0
      %p132 = por %p130, %p131
      %s134 = sadd.s32 %s133, 1
      %p137 = scmp.eq.s32.totalorder %s24, 1
      %p138 = scmp.ne.s32.totalorder %s133, %s135
      %p139 = scmp.eq.s32.totalorder %s24, 0
      %p140 = por %p138, %p139
      %p141 = scmp.ne.s32.totalorder %s133, %s135
      %p142 = scmp.eq.s32.totalorder %s29, 1
      %p143 = por %p141, %p142
      %p144 = scmp.ne.s32.totalorder %s135, %s136
      %p145 = scmp.eq.s32.totalorder %s29, 0
      %p146 = por %p144, %p145
      %p147 = scmp.ne.s32.totalorder %s135, %s136
      %p148 = scmp.eq.s32.totalorder %s30, 1
      %p149 = por %p147, %p148
      %p151 = scmp.ne.s32.totalorder %s136, %s150
      %p152 = scmp.eq.s32.totalorder %s30, 0
      %p153 = por %p151, %p152
      %s155 = sadd.s32 %s154, 1
      %p158 = scmp.eq.s32.totalorder %s24, 1
      %p159 = scmp.ne.s32.totalorder %s154, %s156
      %p160 = scmp.eq.s32.totalorder %s24, 0
      %p161 = por %p159, %p160
      %p162 = scmp.ne.s32.totalorder %s154, %s156
      %p163 = scmp.eq.s32.totalorder %s29, 1
      %p164 = por %p162, %p163
      %p165 = scmp.ne.s32.totalorder %s156, %s157
      %p166 = scmp.eq.s32.totalorder %s29, 0
      %p167 = por %p165, %p166
      %p168 = scmp.ne.s32.totalorder %s156, %s157
      %p169 = scmp.eq.s32.totalorder %s30, 1
      %p170 = por %p168, %p169
      %p172 = scmp.ne.s32.totalorder %s157, %s171
      %p173 = scmp.eq.s32.totalorder %s30, 0
      %p174 = por %p172, %p173
      %s176 = sadd.s32 %s175, 1
      %p179 = scmp.eq.s32.totalorder %s24, 1
      %p180 = scmp.ne.s32.totalorder %s175, %s177
      %p181 = scmp.eq.s32.totalorder %s24, 0
      %p182 = por %p180, %p181
      %p183 = scmp.ne.s32.totalorder %s175, %s177
      %p184 = scmp.eq.s32.totalorder %s29, 1
      %p185 = por %p183, %p184
      %p186 = scmp.ne.s32.totalorder %s177, %s178
      %p187 = scmp.eq.s32.totalorder %s29, 0
      %p188 = por %p186, %p187
      %p189 = scmp.ne.s32.totalorder %s177, %s178
      %p190 = scmp.eq.s32.totalorder %s30, 1
      %p191 = por %p189, %p190
      %p193 = scmp.ne.s32.totalorder %s178, %s192
      %p194 = scmp.eq.s32.totalorder %s30, 0
      %p195 = por %p193, %p194
      %s197 = sadd.s32 %s196, 1
      %p200 = scmp.eq.s32.totalorder %s24, 1
      %p201 = scmp.ne.s32.totalorder %s196, %s198
      %p202 = scmp.eq.s32.totalorder %s24, 0
      %p203 = por %p201, %p202
      %p204 = scmp.ne.s32.totalorder %s196, %s198
      %p205 = scmp.eq.s32.totalorder %s29, 1
      %p206 = por %p204, %p205
      %p207 = scmp.ne.s32.totalorder %s198, %s199
      %p208 = scmp.eq.s32.totalorder %s29, 0
      %p209 = por %p207, %p208
      %p210 = scmp.ne.s32.totalorder %s198, %s199
      %p211 = scmp.eq.s32.totalorder %s30, 1
      %p212 = por %p210, %p211
      %p214 = scmp.ne.s32.totalorder %s199, %s213
      %p215 = scmp.eq.s32.totalorder %s30, 0
      %p216 = por %p214, %p215
      %s218 = sadd.s32 %s217, 1
      %p221 = scmp.eq.s32.totalorder %s24, 1
      %p222 = scmp.ne.s32.totalorder %s217, %s219
      %p223 = scmp.eq.s32.totalorder %s24, 0
      %p224 = por %p222, %p223
      %p225 = scmp.ne.s32.totalorder %s217, %s219
      %p226 = scmp.eq.s32.totalorder %s29, 1
      %p227 = por %p225, %p226
      %p228 = scmp.ne.s32.totalorder %s219, %s220
      %p229 = scmp.eq.s32.totalorder %s29, 0
      %p230 = por %p228, %p229
      %p231 = scmp.ne.s32.totalorder %s219, %s220
      %p232 = scmp.eq.s32.totalorder %s30, 1
      %p233 = por %p231, %p232
      %p235 = scmp.ne.s32.totalorder %s220, %s234
      %p236 = scmp.eq.s32.totalorder %s30, 0
      %p237 = por %p235, %p236
      %s239 = sadd.s32 %s238, 1
      %p242 = scmp.eq.s32.totalorder %s24, 1
      %p243 = scmp.ne.s32.totalorder %s238, %s240
      %p244 = scmp.eq.s32.totalorder %s24, 0
      %p245 = por %p243, %p244
      %p246 = scmp.ne.s32.totalorder %s238, %s240
      %p247 = scmp.eq.s32.totalorder %s29, 1
      %p248 = por %p246, %p247
      %p249 = scmp.ne.s32.totalorder %s240, %s241
      %p250 = scmp.eq.s32.totalorder %s29, 0
      %p251 = por %p249, %p250
      %p252 = scmp.ne.s32.totalorder %s240, %s241
      %p253 = scmp.eq.s32.totalorder %s30, 1
      %p254 = por %p252, %p253
      %p256 = scmp.ne.s32.totalorder %s241, %s255
      %p257 = scmp.eq.s32.totalorder %s30, 0
      %p258 = por %p256, %p257
      %s260 = sadd.s32 %s259, 1
      %p263 = scmp.eq.s32.totalorder %s24, 1
      %p264 = scmp.ne.s32.totalorder %s259, %s261
      %p265 = scmp.eq.s32.totalorder %s24, 0
      %p266 = por %p264, %p265
      %p267 = scmp.ne.s32.totalorder %s259, %s261
      %p268 = scmp.eq.s32.totalorder %s29, 1
      %p269 = por %p267, %p268
      %p270 = scmp.ne.s32.totalorder %s261, %s262
      %p271 = scmp.eq.s32.totalorder %s29, 0
      %p272 = por %p270, %p271
      %p273 = scmp.ne.s32.totalorder %s261, %s262
      %p274 = scmp.eq.s32.totalorder %s30, 1
      %p275 = por %p273, %p274
      %p277 = scmp.ne.s32.totalorder %s262, %s276
      %p278 = scmp.eq.s32.totalorder %s30, 0
      %p279 = por %p277, %p278
      %s281 = sadd.s32 %s280, 1
      %p284 = scmp.eq.s32.totalorder %s24, 1
      %p285 = scmp.ne.s32.totalorder %s280, %s282
      %p286 = scmp.eq.s32.totalorder %s24, 0
      %p287 = por %p285, %p286
      %p288 = scmp.ne.s32.totalorder %s280, %s282
      %p289 = scmp.eq.s32.totalorder %s29, 1
      %p290 = por %p288, %p289
      %p291 = scmp.ne.s32.totalorder %s282, %s283
      %p292 = scmp.eq.s32.totalorder %s29, 0
      %p293 = por %p291, %p292
      %p294 = scmp.ne.s32.totalorder %s282, %s283
      %p295 = scmp.eq.s32.totalorder %s30, 1
      %p296 = por %p294, %p295
      %p298 = scmp.ne.s32.totalorder %s283, %s297
      %p299 = scmp.eq.s32.totalorder %s30, 0
      %p300 = por %p298, %p299
      %s302 = sadd.s32 %s301, 1
      %p305 = scmp.eq.s32.totalorder %s24, 1
      %p306 = scmp.ne.s32.totalorder %s301, %s303
      %p307 = scmp.eq.s32.totalorder %s24, 0
      %p308 = por %p306, %p307
      %p309 = scmp.ne.s32.totalorder %s301, %s303
      %p310 = scmp.eq.s32.totalorder %s29, 1
      %p311 = por %p309, %p310
      %p312 = scmp.ne.s32.totalorder %s303, %s304
      %p313 = scmp.eq.s32.totalorder %s29, 0
      %p314 = por %p312, %p313
      %p315 = scmp.ne.s32.totalorder %s303, %s304
      %p316 = scmp.eq.s32.totalorder %s30, 1
      %p317 = por %p315, %p316
      %p319 = scmp.ne.s32.totalorder %s304, %s318
      %p320 = scmp.eq.s32.totalorder %s30, 0
      %p321 = por %p319, %p320
      %s322 = ssub.s32 %s31, %s43
      %s323 = ssub.s32 %s32, %s39
      %s324 = sor.u32 %s322, %s323
      %p325 = scmp.eq.s32.totalorder %s324, 0
      %s327 = sadd.s32 %s326, 1
      %s328 = scalar_select %p325, %s326, %s327
      %p331 = pneg %p325
      %p332 = scmp.eq.s32.totalorder %s24, 1
      %p333 = por %p331, %p332
      %p334 = scmp.ne.s32.totalorder %s326, %s329
      %p335 = scmp.eq.s32.totalorder %s24, 0
      %p336 = por %p334, %p335
      %p337 = scmp.ne.s32.totalorder %s326, %s329
      %p338 = scmp.eq.s32.totalorder %s29, 1
      %p339 = por %p337, %p338
      %p340 = scmp.ne.s32.totalorder %s329, %s330
      %p341 = scmp.eq.s32.totalorder %s29, 0
      %p342 = por %p340, %p341
      %p343 = scmp.ne.s32.totalorder %s329, %s330
      %p344 = scmp.eq.s32.totalorder %s30, 1
      %p345 = por %p343, %p344
      %p347 = scmp.ne.s32.totalorder %s330, %s346
      %p348 = scmp.eq.s32.totalorder %s30, 0
      %p349 = por %p347, %p348
      %p350 = scmp.le.s32.totalorder 1, %s24
      %p351 = scmp.lt.s32.totalorder %s24, 3
      %p352 = pnand %p350, %p351
      %p353 = pneg %p352
      // Predicated region
      $region9: #{tpu_custom_call.1} parent=5 // pred_check
        _
      $region10: #{tpu_custom_call.1} parent=5 // pred_check_branch
        %355 = sbr.rel (%p352) target = $region12
      $region11: #{tpu_custom_call.1} parent=5 // pred_region
        %s356 = ssub.s32 %s24, 1
        // Predicated region
        $region13: #{tpu_custom_call.1} parent=11 // pred_check
          %p357 = pneg %p83
        $region14: #{tpu_custom_call.1} parent=11 // pred_check_branch
          %359 = sbr.rel (%p357) target = $region16
        $region15: #{tpu_custom_call.1} parent=11 // pred_region
          _
        $region16: #{tpu_custom_call.1} parent=11 // pred_fallthru
          _
        // Predicated region
        $region17: #{tpu_custom_call.1} parent=11 // pred_check
          %p360 = pneg %p104
        $region18: #{tpu_custom_call.1} parent=11 // pred_check_branch
          %362 = sbr.rel (%p360) target = $region20
        $region19: #{tpu_custom_call.1} parent=11 // pred_region
          _
        $region20: #{tpu_custom_call.1} parent=11 // pred_fallthru
          _
        // Predicated region
        $region21: #{tpu_custom_call.1} parent=11 // pred_check
          %p363 = pneg %p125
        $region22: #{tpu_custom_call.1} parent=11 // pred_check_branch
          %365 = sbr.rel (%p363) target = $region24
        $region23: #{tpu_custom_call.1} parent=11 // pred_region
          %s367 = ssub.s32 512, 512
          %368 = vsyncadd [#allocation5], %s367
          %s369 = sshll.u32 [#allocation4], 4
          %s370 = int_to_ptr.vmem [resolvable:$true] %s369
          %375 = dma.hbm_to_vmem [thread:$0]  %s3, 512, %s370, [#allocation5], 64, 64, 4
        $region24: #{tpu_custom_call.1} parent=11 // pred_fallthru
          _
        // Predicated region
        $region25: #{tpu_custom_call.1} parent=11 // pred_check
          %p376 = pneg %p146
        $region26: #{tpu_custom_call.1} parent=11 // pred_check_branch
          %378 = sbr.rel (%p376) target = $region28
        $region27: #{tpu_custom_call.1} parent=11 // pred_region
          %s380 = ssub.s32 512, 512
          %381 = vsyncadd [#allocation8], %s380
          %s382 = sshll.u32 [#allocation7], 4
          %s383 = int_to_ptr.vmem [resolvable:$true] %s382
          %388 = dma.hbm_to_vmem [thread:$0]  %s4, 512, %s383, [#allocation8], 64, 64, 4
        $region28: #{tpu_custom_call.1} parent=11 // pred_fallthru
          _
        // Predicated region
        $region29: #{tpu_custom_call.1} parent=11 // pred_check
          %p389 = pneg %p167
        $region30: #{tpu_custom_call.1} parent=11 // pred_check_branch
          %391 = sbr.rel (%p389) target = $region32
        $region31: #{tpu_custom_call.1} parent=11 // pred_region
          _
        $region32: #{tpu_custom_call.1} parent=11 // pred_fallthru
          _
        // Predicated region
        $region33: #{tpu_custom_call.1} parent=11 // pred_check
          %p392 = pneg %p188
        $region34: #{tpu_custom_call.1} parent=11 // pred_check_branch
          %394 = sbr.rel (%p392) target = $region36
        $region35: #{tpu_custom_call.1} parent=11 // pred_region
          _
        $region36: #{tpu_custom_call.1} parent=11 // pred_fallthru
          _
        // Predicated region
        $region37: #{tpu_custom_call.1} parent=11 // pred_check
          %p395 = pneg %p209
        $region38: #{tpu_custom_call.1} parent=11 // pred_check_branch
          %397 = sbr.rel (%p395) target = $region40
        $region39: #{tpu_custom_call.1} parent=11 // pred_region
          %s399 = ssub.s32 256, 256
          %400 = vsyncadd [#allocation8], %s399
          %s401 = sshll.u32 [#allocation9], 4
          %s402 = int_to_ptr.vmem [resolvable:$true] %s401
          %407 = dma.hbm_to_vmem [thread:$0]  %s7, 256, %s402, [#allocation8], 64, 64, 4
        $region40: #{tpu_custom_call.1} parent=11 // pred_fallthru
          _
        // Predicated region
        $region41: #{tpu_custom_call.1} parent=11 // pred_check
          %p408 = pneg %p230
        $region42: #{tpu_custom_call.1} parent=11 // pred_check_branch
          %410 = sbr.rel (%p408) target = $region44
        $region43: #{tpu_custom_call.1} parent=11 // pred_region
          _
        $region44: #{tpu_custom_call.1} parent=11 // pred_fallthru
          _
        // Predicated region
        $region45: #{tpu_custom_call.1} parent=11 // pred_check
          %p411 = pneg %p251
        $region46: #{tpu_custom_call.1} parent=11 // pred_check_branch
          %413 = sbr.rel (%p411) target = $region48
        $region47: #{tpu_custom_call.1} parent=11 // pred_region
          _
        $region48: #{tpu_custom_call.1} parent=11 // pred_fallthru
          _
        // Predicated region
        $region49: #{tpu_custom_call.1} parent=11 // pred_check
          %p414 = pneg %p272
        $region50: #{tpu_custom_call.1} parent=11 // pred_check_branch
          %416 = sbr.rel (%p414) target = $region52
        $region51: #{tpu_custom_call.1} parent=11 // pred_region
          _
        $region52: #{tpu_custom_call.1} parent=11 // pred_fallthru
          _
        // Predicated region
        $region53: #{tpu_custom_call.1} parent=11 // pred_check
          %p417 = pneg %p293
        $region54: #{tpu_custom_call.1} parent=11 // pred_check_branch
          %419 = sbr.rel (%p417) target = $region56
        $region55: #{tpu_custom_call.1} parent=11 // pred_region
          _
        $region56: #{tpu_custom_call.1} parent=11 // pred_fallthru
          _
        // Predicated region
        $region57: #{tpu_custom_call.1} parent=11 // pred_check
          %p420 = pneg %p314
        $region58: #{tpu_custom_call.1} parent=11 // pred_check_branch
          %422 = sbr.rel (%p420) target = $region60
        $region59: #{tpu_custom_call.1} parent=11 // pred_region
          _
        $region60: #{tpu_custom_call.1} parent=11 // pred_fallthru
          _
      $region12: #{tpu_custom_call.1} parent=5 // pred_fallthru
        _
      %p423 = scmp.lt.s32.totalorder %s24, 2
      // Predicated region
      $region61: #{tpu_custom_call.1} parent=5 // pred_check
        %p424 = pneg %p423
      $region62: #{tpu_custom_call.1} parent=5 // pred_check_branch
        %426 = sbr.rel (%p424) target = $region64
      $region63: #{tpu_custom_call.1} parent=5 // pred_region
        // Predicated region
        $region65: #{tpu_custom_call.1} parent=63 // pred_check
          %p427 = pneg %p56
        $region66: #{tpu_custom_call.1} parent=63 // pred_check_branch
          %429 = sbr.rel (%p427) target = $region68
        $region67: #{tpu_custom_call.1} parent=63 // pred_region
          %p430 = scmp.lt.s32.totalorder %s31, 1
          %s431 = scalar_select %p430, %s31, 1
          %s432 = smul.addr %s431, 8
          %s433 = scalar_lea.vmem %s0, %s432
        $region68: #{tpu_custom_call.1} parent=63 // pred_fallthru
          _
      $region64: #{tpu_custom_call.1} parent=5 // pred_fallthru
        _
      %p434 = scmp.le.s32.totalorder 1, %s24
      %p435 = scmp.lt.s32.totalorder %s24, 3
      %p436 = pnand %p434, %p435
      %p437 = pneg %p436
      // Predicated region
      $region69: #{tpu_custom_call.1} parent=5 // pred_check
        _
      $region70: #{tpu_custom_call.1} parent=5 // pred_check_branch
        %439 = sbr.rel (%p436) target = $region72
      $region71: #{tpu_custom_call.1} parent=5 // pred_region
        %s440 = ssub.s32 %s24, 1
        // Predicated region
        $region73: #{tpu_custom_call.1} parent=71 // pred_check
          %p441 = pneg %p125
        $region74: #{tpu_custom_call.1} parent=71 // pred_check_branch
          %443 = sbr.rel (%p441) target = $region76
        $region75: #{tpu_custom_call.1} parent=71 // pred_region
          %444 = dma.done [#allocation5], 512
        $region76: #{tpu_custom_call.1} parent=71 // pred_fallthru
          _
        // Predicated region
        $region77: #{tpu_custom_call.1} parent=71 // pred_check
          %p445 = pneg %p146
        $region78: #{tpu_custom_call.1} parent=71 // pred_check_branch
          %447 = sbr.rel (%p445) target = $region80
        $region79: #{tpu_custom_call.1} parent=71 // pred_region
          %448 = dma.done [#allocation8], 512
        $region80: #{tpu_custom_call.1} parent=71 // pred_fallthru
          _
        // Predicated region
        $region81: #{tpu_custom_call.1} parent=71 // pred_check
          %p449 = pneg %p209
        $region82: #{tpu_custom_call.1} parent=71 // pred_check_branch
          %451 = sbr.rel (%p449) target = $region84
        $region83: #{tpu_custom_call.1} parent=71 // pred_region
          %452 = dma.done [#allocation8], 256
        $region84: #{tpu_custom_call.1} parent=71 // pred_fallthru
          _
        %p453 = scmp.lt.s32.totalorder %s33, 1
        %s454 = scalar_select %p453, %s33, 1
        %s455 = smul.addr %s454, 8
        %s456 = scalar_lea.vmem %s0, %s455
        %p457 = pneg %p62
        %p458 = pneg %p59
        %p459 = pneg %p83
        %p460 = pneg %p80
        %p461 = pneg %p104
        %p462 = pneg %p101
        %p463 = pneg %p125
        %p464 = pneg %p122
        %p465 = pneg %p146
        %p466 = pneg %p143
        %p467 = pneg %p167
        %p468 = pneg %p164
        %p469 = pneg %p188
        %p470 = pneg %p185
        %p471 = pneg %p209
        %p472 = pneg %p206
        %p473 = pneg %p230
        %p474 = pneg %p227
        %p475 = pneg %p251
        %p476 = pneg %p248
        %p477 = pneg %p272
        %p478 = pneg %p269
        %p479 = pneg %p293
        %p480 = pneg %p290
        %p481 = pneg %p314
        %p482 = pneg %p311
        %p483 = pneg %p342
        %p484 = pneg %p339
        %s485 = sand.u32 %s329, 1
        %s486 = scalar_lea.sflag [#allocation6], %s485
        %s487 = sand.u32 %s329, 1
        %s488 = smul.addr %s487, 8
        %s489 = scalar_lea.vmem [#allocation10], %s488
        %p490 = scmp.lt.s32.totalorder %s33, 1
        %s491 = scalar_select %p490, %s33, 1
        %s492 = smul.addr %s491, 8
        %s493 = scalar_lea.vmem %s0, %s492
        %p495 = scmp.eq.s32.totalorder %s34, 0
        // Predicated region
        $region85: #{tpu_custom_call.1} parent=71 // pred_check
          %p496 = pneg %p495
        $region86: #{tpu_custom_call.1} parent=71 // pred_check_branch
          %498 = sbr.rel (%p496) target = $region88
        $region87: #{tpu_custom_call.1} parent=71 // pred_region
          %v499 = vld [vmem:[%s493] sm:$0xff]
          %v500 = vpack.c.bf16 %v499, %v499
          %v501 = vld [vmem:[%s2] sm:$0xf]
          %v502 = vld [vmem:[%s2 + $0x4] sm:$0xf]
          %v503 = vld [vmem:[%s2 + $0x8] sm:$0xf]
          %v504 = vld [vmem:[%s2 + $0xc] sm:$0xf]
          %v505 = vld [vmem:[%s2 + $0x10] sm:$0xf]
          %v506 = vld [vmem:[%s2 + $0x14] sm:$0xf]
          %v507 = vld [vmem:[%s2 + $0x18] sm:$0xf]
          %v508 = vld [vmem:[%s2 + $0x1c] sm:$0xf]
          %v513 = vunpack.c.l.b16 %v501
          %v514 = vunpack.c.l.b16 %v502
          %v515 = vunpack.c.l.b16 %v503
          %v516 = vunpack.c.l.b16 %v504
          %v517 = vpack.c.b16 %v514, %v513
          %v518 = vpack.c.b16 %v516, %v515
          %vm521 = vcmask 261120
          %v523 = vsel %vm521, %v500, 0
          %525 = vmatprep.subr.bf16.mxu0 0
          %526 = vmatpush1.bf16.msra.mxu0 %v517
          %527 = vmatprep.subr.bf16.mxu0 0
          %528 = vmatpush1.bf16.msra.mxu0 %v518
          %529 = vmatprep.subr.bf16.mxu0 0
          %530 = vmatpush1.bf16.msra.mxu0 0
          %531 = vmatprep.subr.bf16.mxu0 0
          %532 = vmatpush1.bf16.msra.mxu0 0
          %533 = vmatprep.subr.bf16.mxu0 0
          %534 = vmatpush1.bf16.msra.mxu0 0
          %535 = vmatprep.subr.bf16.mxu0 0
          %536 = vmatpush1.bf16.msra.mxu0 0
          %537 = vmatprep.subr.bf16.mxu0 0
          %538 = vmatpush1.bf16.msra.mxu0 0
          %539 = vmatprep.subr.bf16.mxu0 0
          %540 = vmatpush1.bf16.msra.mxu0 0
          %541 = vmatprep.subr.bf16.mxu0 0
          %542 = vmatpush1.bf16.msra.mxu0 0
          %543 = vmatprep.subr.bf16.mxu0 0
          %544 = vmatpush1.bf16.msra.mxu0 0
          %545 = vmatprep.subr.bf16.mxu0 0
          %546 = vmatpush1.bf16.msra.mxu0 0
          %547 = vmatprep.subr.bf16.mxu0 0
          %548 = vmatpush1.bf16.msra.mxu0 0
          %549 = vmatprep.subr.bf16.mxu0 0
          %550 = vmatpush1.bf16.msra.mxu0 0
          %551 = vmatprep.subr.bf16.mxu0 0
          %552 = vmatpush1.bf16.msra.mxu0 0
          %553 = vmatprep.subr.bf16.mxu0 0
          %554 = vmatpush1.bf16.msra.mxu0 0
          %555 = vmatprep.subr.bf16.mxu0 0
          %556 = vmatpush1.bf16.msra.mxu0 0
          %557 = vmatprep.mubr.bf16.mxu0 0
          %558 = vmatmul.mubr.bf16.gmra.mrb[0].mxu0 %v523
          %v559 = vpop.f32.mrb[0].mxu0
          %v560 = vadd.f32 0.0, %v559
          %v561 = vpop.f32.mrb[0].mxu0
          %v562 = vpop.f32.mrb[0].mxu0
          %v563 = vpop.f32.mrb[0].mxu0
          %564 = vdwg.mxu0
          %v569 = vunpack.c.l.b16 %v505
          %v570 = vunpack.c.l.b16 %v506
          %v571 = vunpack.c.l.b16 %v507
          %v572 = vunpack.c.l.b16 %v508
          %v573 = vpack.c.b16 %v570, %v569
          %v574 = vpack.c.b16 %v572, %v571
          %577 = vmatprep.subr.bf16.mxu0 0
          %578 = vmatpush1.bf16.msra.mxu0 %v573
          %579 = vmatprep.subr.bf16.mxu0 0
          %580 = vmatpush1.bf16.msra.mxu0 %v574
          %581 = vmatprep.subr.bf16.mxu0 0
          %582 = vmatpush1.bf16.msra.mxu0 0
          %583 = vmatprep.subr.bf16.mxu0 0
          %584 = vmatpush1.bf16.msra.mxu0 0
          %585 = vmatprep.subr.bf16.mxu0 0
          %586 = vmatpush1.bf16.msra.mxu0 0
          %587 = vmatprep.subr.bf16.mxu0 0
          %588 = vmatpush1.bf16.msra.mxu0 0
          %589 = vmatprep.subr.bf16.mxu0 0
          %590 = vmatpush1.bf16.msra.mxu0 0
          %591 = vmatprep.subr.bf16.mxu0 0
          %592 = vmatpush1.bf16.msra.mxu0 0
          %593 = vmatprep.subr.bf16.mxu0 0
          %594 = vmatpush1.bf16.msra.mxu0 0
          %595 = vmatprep.subr.bf16.mxu0 0
          %596 = vmatpush1.bf16.msra.mxu0 0
          %597 = vmatprep.subr.bf16.mxu0 0
          %598 = vmatpush1.bf16.msra.mxu0 0
          %599 = vmatprep.subr.bf16.mxu0 0
          %600 = vmatpush1.bf16.msra.mxu0 0
          %601 = vmatprep.subr.bf16.mxu0 0
          %602 = vmatpush1.bf16.msra.mxu0 0
          %603 = vmatprep.subr.bf16.mxu0 0
          %604 = vmatpush1.bf16.msra.mxu0 0
          %605 = vmatprep.subr.bf16.mxu0 0
          %606 = vmatpush1.bf16.msra.mxu0 0
          %607 = vmatprep.subr.bf16.mxu0 0
          %608 = vmatpush1.bf16.msra.mxu0 0
          %609 = vmatprep.mubr.bf16.mxu0 0
          %610 = vmatmul.mubr.bf16.gmra.mrb[0].mxu0 %v523
          %v611 = vpop.f32.mrb[0].mxu0
          %v612 = vadd.f32 0.0, %v611
          %v613 = vpop.f32.mrb[0].mxu0
          %v614 = vpop.f32.mrb[0].mxu0
          %v615 = vpop.f32.mrb[0].mxu0
          %616 = vdwg.mxu0
          %v617 = vpack.c.bf16 %v560, %v560
          %v618 = vpack.c.bf16 %v612, %v612
          %vm619 = vcmask 257024
          %620 = vst.msk [vmem:[#allocation2] sm:$0xf] %vm619, %v617
          %621 = vst.msk [vmem:[#allocation2 + $0x4] sm:$0xf] %vm619, %v618
          %v622 = vld [vmem:[#allocation4] sm:$0xf]
          %v623 = vld [vmem:[#allocation4 + $0x4] sm:$0xf]
          %v624 = vld [vmem:[#allocation4 + $0x8] sm:$0xf]
          %v625 = vld [vmem:[#allocation4 + $0xc] sm:$0xf]
          %v626 = vld [vmem:[#allocation4 + $0x10] sm:$0xf]
          %v627 = vld [vmem:[#allocation4 + $0x14] sm:$0xf]
          %v628 = vld [vmem:[#allocation4 + $0x18] sm:$0xf]
          %v629 = vld [vmem:[#allocation4 + $0x1c] sm:$0xf]
          %v634 = vunpack.c.l.b16 %v622
          %v635 = vunpack.c.l.b16 %v623
          %v636 = vunpack.c.l.b16 %v624
          %v637 = vunpack.c.l.b16 %v625
          %v638 = vpack.c.b16 %v635, %v634
          %v639 = vpack.c.b16 %v637, %v636
          %642 = vmatprep.subr.bf16.mxu0 0
          %643 = vmatpush1.bf16.msra.mxu0 %v638
          %644 = vmatprep.subr.bf16.mxu0 0
          %645 = vmatpush1.bf16.msra.mxu0 %v639
          %646 = vmatprep.subr.bf16.mxu0 0
          %647 = vmatpush1.bf16.msra.mxu0 0
          %648 = vmatprep.subr.bf16.mxu0 0
          %649 = vmatpush1.bf16.msra.mxu0 0
          %650 = vmatprep.subr.bf16.mxu0 0
          %651 = vmatpush1.bf16.msra.mxu0 0
          %652 = vmatprep.subr.bf16.mxu0 0
          %653 = vmatpush1.bf16.msra.mxu0 0
          %654 = vmatprep.subr.bf16.mxu0 0
          %655 = vmatpush1.bf16.msra.mxu0 0
          %656 = vmatprep.subr.bf16.mxu0 0
          %657 = vmatpush1.bf16.msra.mxu0 0
          %658 = vmatprep.subr.bf16.mxu0 0
          %659 = vmatpush1.bf16.msra.mxu0 0
          %660 = vmatprep.subr.bf16.mxu0 0
          %661 = vmatpush1.bf16.msra.mxu0 0
          %662 = vmatprep.subr.bf16.mxu0 0
          %663 = vmatpush1.bf16.msra.mxu0 0
          %664 = vmatprep.subr.bf16.mxu0 0
          %665 = vmatpush1.bf16.msra.mxu0 0
          %666 = vmatprep.subr.bf16.mxu0 0
          %667 = vmatpush1.bf16.msra.mxu0 0
          %668 = vmatprep.subr.bf16.mxu0 0
          %669 = vmatpush1.bf16.msra.mxu0 0
          %670 = vmatprep.subr.bf16.mxu0 0
          %671 = vmatpush1.bf16.msra.mxu0 0
          %672 = vmatprep.subr.bf16.mxu0 0
          %673 = vmatpush1.bf16.msra.mxu0 0
          %674 = vmatprep.mubr.bf16.mxu0 0
          %675 = vmatmul.mubr.bf16.gmra.mrb[0].mxu0 %v523
          %v676 = vpop.f32.mrb[0].mxu0
          %v677 = vadd.f32 0.0, %v676
          %v678 = vpop.f32.mrb[0].mxu0
          %v679 = vpop.f32.mrb[0].mxu0
          %v680 = vpop.f32.mrb[0].mxu0
          %681 = vdwg.mxu0
          %v686 = vunpack.c.l.b16 %v626
          %v687 = vunpack.c.l.b16 %v627
          %v688 = vunpack.c.l.b16 %v628
          %v689 = vunpack.c.l.b16 %v629
          %v690 = vpack.c.b16 %v687, %v686
          %v691 = vpack.c.b16 %v689, %v688
          %694 = vmatprep.subr.bf16.mxu0 0
          %695 = vmatpush1.bf16.msra.mxu0 %v690
          %696 = vmatprep.subr.bf16.mxu0 0
          %697 = vmatpush1.bf16.msra.mxu0 %v691
          %698 = vmatprep.subr.bf16.mxu0 0
          %699 = vmatpush1.bf16.msra.mxu0 0
          %700 = vmatprep.subr.bf16.mxu0 0
          %701 = vmatpush1.bf16.msra.mxu0 0
          %702 = vmatprep.subr.bf16.mxu0 0
          %703 = vmatpush1.bf16.msra.mxu0 0
          %704 = vmatprep.subr.bf16.mxu0 0
          %705 = vmatpush1.bf16.msra.mxu0 0
          %706 = vmatprep.subr.bf16.mxu0 0
          %707 = vmatpush1.bf16.msra.mxu0 0
          %708 = vmatprep.subr.bf16.mxu0 0
          %709 = vmatpush1.bf16.msra.mxu0 0
          %710 = vmatprep.subr.bf16.mxu0 0
          %711 = vmatpush1.bf16.msra.mxu0 0
          %712 = vmatprep.subr.bf16.mxu0 0
          %713 = vmatpush1.bf16.msra.mxu0 0
          %714 = vmatprep.subr.bf16.mxu0 0
          %715 = vmatpush1.bf16.msra.mxu0 0
          %716 = vmatprep.subr.bf16.mxu0 0
          %717 = vmatpush1.bf16.msra.mxu0 0
          %718 = vmatprep.subr.bf16.mxu0 0
          %719 = vmatpush1.bf16.msra.mxu0 0
          %720 = vmatprep.subr.bf16.mxu0 0
          %721 = vmatpush1.bf16.msra.mxu0 0
          %722 = vmatprep.subr.bf16.mxu0 0
          %723 = vmatpush1.bf16.msra.mxu0 0
          %724 = vmatprep.subr.bf16.mxu0 0
          %725 = vmatpush1.bf16.msra.mxu0 0
          %726 = vmatprep.mubr.bf16.mxu0 0
          %727 = vmatmul.mubr.bf16.gmra.mrb[0].mxu0 %v523
          %v728 = vpop.f32.mrb[0].mxu0
          %v729 = vadd.f32 0.0, %v728
          %v730 = vpop.f32.mrb[0].mxu0
          %v731 = vpop.f32.mrb[0].mxu0
          %v732 = vpop.f32.mrb[0].mxu0
          %733 = vdwg.mxu0
          %v734 = vpack.c.bf16 %v677, %v677
          %v735 = vpack.c.bf16 %v729, %v729
          %736 = vst.msk [vmem:[#allocation3] sm:$0xf] %vm619, %v734
          %737 = vst.msk [vmem:[#allocation3 + $0x4] sm:$0xf] %vm619, %v735
        $region88: #{tpu_custom_call.1} parent=71 // pred_fallthru
          _
        %v738 = vld [vmem:[%s493] sm:$0xff]
        %v739 = vpack.c.bf16 %v738, %v738
        %v740 = vld [vmem:[%s1] sm:$0xf]
        %v741 = vld [vmem:[%s1 + $0x4] sm:$0xf]
        %v742 = vld [vmem:[%s1 + $0x8] sm:$0xf]
        %v743 = vld [vmem:[%s1 + $0xc] sm:$0xf]
        %v744 = vld [vmem:[%s1 + $0x10] sm:$0xf]
        %v745 = vld [vmem:[%s1 + $0x14] sm:$0xf]
        %v746 = vld [vmem:[%s1 + $0x18] sm:$0xf]
        %v747 = vld [vmem:[%s1 + $0x1c] sm:$0xf]
        %v752 = vunpack.c.l.b16 %v740
        %v753 = vunpack.c.l.b16 %v741
        %v754 = vunpack.c.l.b16 %v742
        %v755 = vunpack.c.l.b16 %v743
        %v756 = vpack.c.b16 %v753, %v752
        %v757 = vpack.c.b16 %v755, %v754
        %vm760 = vcmask 261120
        %v762 = vsel %vm760, %v739, 0
        %764 = vmatprep.subr.bf16.mxu0 0
        %765 = vmatpush1.bf16.msra.mxu0 %v756
        %766 = vmatprep.subr.bf16.mxu0 0
        %767 = vmatpush1.bf16.msra.mxu0 %v757
        %768 = vmatprep.subr.bf16.mxu0 0
        %769 = vmatpush1.bf16.msra.mxu0 0
        %770 = vmatprep.subr.bf16.mxu0 0
        %771 = vmatpush1.bf16.msra.mxu0 0
        %772 = vmatprep.subr.bf16.mxu0 0
        %773 = vmatpush1.bf16.msra.mxu0 0
        %774 = vmatprep.subr.bf16.mxu0 0
        %775 = vmatpush1.bf16.msra.mxu0 0
        %776 = vmatprep.subr.bf16.mxu0 0
        %777 = vmatpush1.bf16.msra.mxu0 0
        %778 = vmatprep.subr.bf16.mxu0 0
        %779 = vmatpush1.bf16.msra.mxu0 0
        %780 = vmatprep.subr.bf16.mxu0 0
        %781 = vmatpush1.bf16.msra.mxu0 0
        %782 = vmatprep.subr.bf16.mxu0 0
        %783 = vmatpush1.bf16.msra.mxu0 0
        %784 = vmatprep.subr.bf16.mxu0 0
        %785 = vmatpush1.bf16.msra.mxu0 0
        %786 = vmatprep.subr.bf16.mxu0 0
        %787 = vmatpush1.bf16.msra.mxu0 0
        %788 = vmatprep.subr.bf16.mxu0 0
        %789 = vmatpush1.bf16.msra.mxu0 0
        %790 = vmatprep.subr.bf16.mxu0 0
        %791 = vmatpush1.bf16.msra.mxu0 0
        %792 = vmatprep.subr.bf16.mxu0 0
        %793 = vmatpush1.bf16.msra.mxu0 0
        %794 = vmatprep.subr.bf16.mxu0 0
        %795 = vmatpush1.bf16.msra.mxu0 0
        %796 = vmatprep.mubr.bf16.mxu0 0
        %797 = vmatmul.mubr.bf16.gmra.mrb[0].mxu0 %v762
        %v798 = vpop.f32.mrb[0].mxu0
        %v799 = vadd.f32 0.0, %v798
        %v800 = vpop.f32.mrb[0].mxu0
        %v801 = vpop.f32.mrb[0].mxu0
        %v802 = vpop.f32.mrb[0].mxu0
        %803 = vdwg.mxu0
        %v808 = vunpack.c.l.b16 %v744
        %v809 = vunpack.c.l.b16 %v745
        %v810 = vunpack.c.l.b16 %v746
        %v811 = vunpack.c.l.b16 %v747
        %v812 = vpack.c.b16 %v809, %v808
        %v813 = vpack.c.b16 %v811, %v810
        %816 = vmatprep.subr.bf16.mxu0 0
        %817 = vmatpush1.bf16.msra.mxu0 %v812
        %818 = vmatprep.subr.bf16.mxu0 0
        %819 = vmatpush1.bf16.msra.mxu0 %v813
        %820 = vmatprep.subr.bf16.mxu0 0
        %821 = vmatpush1.bf16.msra.mxu0 0
        %822 = vmatprep.subr.bf16.mxu0 0
        %823 = vmatpush1.bf16.msra.mxu0 0
        %824 = vmatprep.subr.bf16.mxu0 0
        %825 = vmatpush1.bf16.msra.mxu0 0
        %826 = vmatprep.subr.bf16.mxu0 0
        %827 = vmatpush1.bf16.msra.mxu0 0
        %828 = vmatprep.subr.bf16.mxu0 0
        %829 = vmatpush1.bf16.msra.mxu0 0
        %830 = vmatprep.subr.bf16.mxu0 0
        %831 = vmatpush1.bf16.msra.mxu0 0
        %832 = vmatprep.subr.bf16.mxu0 0
        %833 = vmatpush1.bf16.msra.mxu0 0
        %834 = vmatprep.subr.bf16.mxu0 0
        %835 = vmatpush1.bf16.msra.mxu0 0
        %836 = vmatprep.subr.bf16.mxu0 0
        %837 = vmatpush1.bf16.msra.mxu0 0
        %838 = vmatprep.subr.bf16.mxu0 0
        %839 = vmatpush1.bf16.msra.mxu0 0
        %840 = vmatprep.subr.bf16.mxu0 0
        %841 = vmatpush1.bf16.msra.mxu0 0
        %842 = vmatprep.subr.bf16.mxu0 0
        %843 = vmatpush1.bf16.msra.mxu0 0
        %844 = vmatprep.subr.bf16.mxu0 0
        %845 = vmatpush1.bf16.msra.mxu0 0
        %846 = vmatprep.subr.bf16.mxu0 0
        %847 = vmatpush1.bf16.msra.mxu0 0
        %848 = vmatprep.mubr.bf16.mxu0 0
        %849 = vmatmul.mubr.bf16.gmra.mrb[0].mxu0 %v762
        %v850 = vpop.f32.mrb[0].mxu0
        %v851 = vadd.f32 0.0, %v850
        %v852 = vpop.f32.mrb[0].mxu0
        %v853 = vpop.f32.mrb[0].mxu0
        %v854 = vpop.f32.mrb[0].mxu0
        %855 = vdwg.mxu0
        %v856 = vmul.f32 %v799, 0.17677669
        %v857 = vmul.f32 %v851, 0.17677669
        %v858 = vpack.c.bf16 %v856, %v856
        %v859 = vpack.c.bf16 %v857, %v857
        %v860 = vld [vmem:[#allocation2] sm:$0xf]
        %v861 = vld [vmem:[#allocation2 + $0x4] sm:$0xf]
        %v863 = vsel %vm760, %v858, 0
        %v866 = vsel %vm760, %v860, 0
        %868 = vmatprep.subr.bf16.mxu0 0
        %869 = vmatpush1.bf16.xpose.msra.mxu0 %v866
        %870 = vmatprep.subr.bf16.mxu0 0
        %871 = vmatpush1.bf16.xpose.msra.mxu0 0
        %872 = vmatprep.subr.bf16.mxu0 0
        %873 = vmatpush1.bf16.xpose.msra.mxu0 0
        %874 = vmatprep.subr.bf16.mxu0 0
        %875 = vmatpush1.bf16.xpose.msra.mxu0 0
        %876 = vmatprep.subr.bf16.mxu0 0
        %877 = vmatpush1.bf16.xpose.msra.mxu0 0
        %878 = vmatprep.subr.bf16.mxu0 0
        %879 = vmatpush1.bf16.xpose.msra.mxu0 0
        %880 = vmatprep.subr.bf16.mxu0 0
        %881 = vmatpush1.bf16.xpose.msra.mxu0 0
        %882 = vmatprep.subr.bf16.mxu0 0
        %883 = vmatpush1.bf16.xpose.msra.mxu0 0
        %884 = vmatprep.subr.bf16.mxu0 0
        %885 = vmatpush1.bf16.xpose.msra.mxu0 0
        %886 = vmatprep.subr.bf16.mxu0 0
        %887 = vmatpush1.bf16.xpose.msra.mxu0 0
        %888 = vmatprep.subr.bf16.mxu0 0
        %889 = vmatpush1.bf16.xpose.msra.mxu0 0
        %890 = vmatprep.subr.bf16.mxu0 0
        %891 = vmatpush1.bf16.xpose.msra.mxu0 0
        %892 = vmatprep.subr.bf16.mxu0 0
        %893 = vmatpush1.bf16.xpose.msra.mxu0 0
        %894 = vmatprep.subr.bf16.mxu0 0
        %895 = vmatpush1.bf16.xpose.msra.mxu0 0
        %896 = vmatprep.subr.bf16.mxu0 0
        %897 = vmatpush1.bf16.xpose.msra.mxu0 0
        %898 = vmatprep.subr.bf16.mxu0 0
        %899 = vmatpush1.bf16.xpose.msra.mxu0 0
        %900 = vmatprep.mubr.bf16.mxu0 0
        %901 = vmatmul.mubr.bf16.gmra.mrb[0].mxu0 %v863
        %v902 = vpop.f32.mrb[0].mxu0
        %v903 = vadd.f32 0.0, %v902
        %v904 = vpop.f32.mrb[0].mxu0
        %v905 = vpop.f32.mrb[0].mxu0
        %v906 = vpop.f32.mrb[0].mxu0
        %907 = vdwg.mxu0
        %v909 = vsel %vm760, %v859, 0
        %v912 = vsel %vm760, %v861, 0
        %914 = vmatprep.subr.bf16.mxu0 0
        %915 = vmatpush1.bf16.xpose.msra.mxu0 %v912
        %916 = vmatprep.subr.bf16.mxu0 0
        %917 = vmatpush1.bf16.xpose.msra.mxu0 0
        %918 = vmatprep.subr.bf16.mxu0 0
        %919 = vmatpush1.bf16.xpose.msra.mxu0 0
        %920 = vmatprep.subr.bf16.mxu0 0
        %921 = vmatpush1.bf16.xpose.msra.mxu0 0
        %922 = vmatprep.subr.bf16.mxu0 0
        %923 = vmatpush1.bf16.xpose.msra.mxu0 0
        %924 = vmatprep.subr.bf16.mxu0 0
        %925 = vmatpush1.bf16.xpose.msra.mxu0 0
        %926 = vmatprep.subr.bf16.mxu0 0
        %927 = vmatpush1.bf16.xpose.msra.mxu0 0
        %928 = vmatprep.subr.bf16.mxu0 0
        %929 = vmatpush1.bf16.xpose.msra.mxu0 0
        %930 = vmatprep.subr.bf16.mxu0 0
        %931 = vmatpush1.bf16.xpose.msra.mxu0 0
        %932 = vmatprep.subr.bf16.mxu0 0
        %933 = vmatpush1.bf16.xpose.msra.mxu0 0
        %934 = vmatprep.subr.bf16.mxu0 0
        %935 = vmatpush1.bf16.xpose.msra.mxu0 0
        %936 = vmatprep.subr.bf16.mxu0 0
        %937 = vmatpush1.bf16.xpose.msra.mxu0 0
        %938 = vmatprep.subr.bf16.mxu0 0
        %939 = vmatpush1.bf16.xpose.msra.mxu0 0
        %940 = vmatprep.subr.bf16.mxu0 0
        %941 = vmatpush1.bf16.xpose.msra.mxu0 0
        %942 = vmatprep.subr.bf16.mxu0 0
        %943 = vmatpush1.bf16.xpose.msra.mxu0 0
        %944 = vmatprep.subr.bf16.mxu0 0
        %945 = vmatpush1.bf16.xpose.msra.mxu0 0
        %946 = vmatprep.mubr.bf16.mxu0 0
        %947 = vmatmul.mubr.bf16.gmra.mrb[0].mxu0 %v909
        %v948 = vpop.f32.mrb[0].mxu0
        %v949 = vadd.f32 0.0, %v948
        %v950 = vpop.f32.mrb[0].mxu0
        %v951 = vpop.f32.mrb[0].mxu0
        %v952 = vpop.f32.mrb[0].mxu0
        %953 = vdwg.mxu0
        %v954 = vlaneseq
        %v955 = vshrl.u32 %v954, 7
        %v956 = vlaneseq
        %v957 = vand.u32 %v956, 127
        %vm958 = vcmp.ge.s32.totalorder %v955, %v957
        %v959 = vsel %vm958, 1, 0
        %vm960 = vcmp.eq.s32.totalorder %v959, 1
        %v961 = vsel %vm960, %v903, -1e+30
        %v962 = vsel %vm960, %v949, -1e+30
        %vm963 = vcmask 64512
        %v964 = vsel %vm963, %v961, -inf
        %965 = vmax.xlane.f32.xlu0 %v964
        %v966 = vpop.xlane.xlu0 %965
        %v967 = vsel %vm963, %v962, -inf
        %968 = vmax.xlane.f32.xlu0 %v967
        %v969 = vpop.xlane.xlu0 %968
        %v970 = vsub.f32 %v961, %v966
        %v971 = vsub.f32 %v962, %v969
        %v972 = vmul.f32 %v970, 1.442695
        %v973 = vpow.pop %v972
        %v974 = vmul.f32 %v971, 1.442695
        %v975 = vpow.pop %v974
        %v976 = vsel %vm963, %v973, 0.0
        %977 = vadd.xlane.f32.xlu0 %v976
        %v978 = vpop.xlane.xlu0 %977
        %v979 = vsel %vm963, %v975, 0.0
        %980 = vadd.xlane.f32.xlu0 %v979
        %v981 = vpop.xlane.xlu0 %980
        %v982 = vrcp.pop %v978
        %v983 = vrcp.pop %v981
        %v984 = vmul.f32 %v973, %v982
        %v985 = vmul.f32 %v975, %v983
        %v986 = vpack.c.bf16 %v984, %v984
        %v987 = vpack.c.bf16 %v985, %v985
        %v988 = vld [vmem:[#allocation3] sm:$0xf]
        %v989 = vld [vmem:[#allocation3 + $0x4] sm:$0xf]
        %v991 = vsel %vm963, %v986, 0
        %vm993 = vcmask 1043456
        %v995 = vsel %vm993, %v988, 0
        %997 = vmatprep.subr.bf16.mxu0 0
        %998 = vmatpush1.bf16.msra.mxu0 %v995
        %999 = vmatprep.subr.bf16.mxu0 0
        %1000 = vmatpush1.bf16.msra.mxu0 0
        %1001 = vmatprep.subr.bf16.mxu0 0
        %1002 = vmatpush1.bf16.msra.mxu0 0
        %1003 = vmatprep.subr.bf16.mxu0 0
        %1004 = vmatpush1.bf16.msra.mxu0 0
        %1005 = vmatprep.subr.bf16.mxu0 0
        %1006 = vmatpush1.bf16.msra.mxu0 0
        %1007 = vmatprep.subr.bf16.mxu0 0
        %1008 = vmatpush1.bf16.msra.mxu0 0
        %1009 = vmatprep.subr.bf16.mxu0 0
        %1010 = vmatpush1.bf16.msra.mxu0 0
        %1011 = vmatprep.subr.bf16.mxu0 0
        %1012 = vmatpush1.bf16.msra.mxu0 0
        %1013 = vmatprep.subr.bf16.mxu0 0
        %1014 = vmatpush1.bf16.msra.mxu0 0
        %1015 = vmatprep.subr.bf16.mxu0 0
        %1016 = vmatpush1.bf16.msra.mxu0 0
        %1017 = vmatprep.subr.bf16.mxu0 0
        %1018 = vmatpush1.bf16.msra.mxu0 0
        %1019 = vmatprep.subr.bf16.mxu0 0
        %1020 = vmatpush1.bf16.msra.mxu0 0
        %1021 = vmatprep.subr.bf16.mxu0 0
        %1022 = vmatpush1.bf16.msra.mxu0 0
        %1023 = vmatprep.subr.bf16.mxu0 0
        %1024 = vmatpush1.bf16.msra.mxu0 0
        %1025 = vmatprep.subr.bf16.mxu0 0
        %1026 = vmatpush1.bf16.msra.mxu0 0
        %1027 = vmatprep.subr.bf16.mxu0 0
        %1028 = vmatpush1.bf16.msra.mxu0 0
        %1029 = vmatprep.mubr.bf16.mxu0 0
        %1030 = vmatmul.mubr.bf16.gmra.mrb[0].mxu0 %v991
        %v1031 = vpop.f32.mrb[0].mxu0
        %v1032 = vadd.f32 0.0, %v1031
        %v1033 = vpop.f32.mrb[0].mxu0
        %v1034 = vpop.f32.mrb[0].mxu0
        %v1035 = vpop.f32.mrb[0].mxu0
        %1036 = vdwg.mxu0
        %v1038 = vsel %vm963, %v987, 0
        %v1041 = vsel %vm993, %v989, 0
        %1043 = vmatprep.subr.bf16.mxu0 0
        %1044 = vmatpush1.bf16.msra.mxu0 %v1041
        %1045 = vmatprep.subr.bf16.mxu0 0
        %1046 = vmatpush1.bf16.msra.mxu0 0
        %1047 = vmatprep.subr.bf16.mxu0 0
        %1048 = vmatpush1.bf16.msra.mxu0 0
        %1049 = vmatprep.subr.bf16.mxu0 0
        %1050 = vmatpush1.bf16.msra.mxu0 0
        %1051 = vmatprep.subr.bf16.mxu0 0
        %1052 = vmatpush1.bf16.msra.mxu0 0
        %1053 = vmatprep.subr.bf16.mxu0 0
        %1054 = vmatpush1.bf16.msra.mxu0 0
        %1055 = vmatprep.subr.bf16.mxu0 0
        %1056 = vmatpush1.bf16.msra.mxu0 0
        %1057 = vmatprep.subr.bf16.mxu0 0
        %1058 = vmatpush1.bf16.msra.mxu0 0
        %1059 = vmatprep.subr.bf16.mxu0 0
        %1060 = vmatpush1.bf16.msra.mxu0 0
        %1061 = vmatprep.subr.bf16.mxu0 0
        %1062 = vmatpush1.bf16.msra.mxu0 0
        %1063 = vmatprep.subr.bf16.mxu0 0
        %1064 = vmatpush1.bf16.msra.mxu0 0
        %1065 = vmatprep.subr.bf16.mxu0 0
        %1066 = vmatpush1.bf16.msra.mxu0 0
        %1067 = vmatprep.subr.bf16.mxu0 0
        %1068 = vmatpush1.bf16.msra.mxu0 0
        %1069 = vmatprep.subr.bf16.mxu0 0
        %1070 = vmatpush1.bf16.msra.mxu0 0
        %1071 = vmatprep.subr.bf16.mxu0 0
        %1072 = vmatpush1.bf16.msra.mxu0 0
        %1073 = vmatprep.subr.bf16.mxu0 0
        %1074 = vmatpush1.bf16.msra.mxu0 0
        %1075 = vmatprep.mubr.bf16.mxu0 0
        %1076 = vmatmul.mubr.bf16.gmra.mrb[0].mxu0 %v1038
        %v1077 = vpop.f32.mrb[0].mxu0
        %v1078 = vadd.f32 0.0, %v1077
        %v1079 = vpop.f32.mrb[0].mxu0
        %v1080 = vpop.f32.mrb[0].mxu0
        %v1081 = vpop.f32.mrb[0].mxu0
        %1082 = vdwg.mxu0
        %v1083 = vpack.c.bf16 %v1032, %v1032
        %v1084 = vpack.c.bf16 %v1078, %v1078
        %v1085 = vld [vmem:[#allocation7] sm:$0xf]
        %v1086 = vld [vmem:[#allocation7 + $0x4] sm:$0xf]
        %v1087 = vld [vmem:[#allocation7 + $0x8] sm:$0xf]
        %v1088 = vld [vmem:[#allocation7 + $0xc] sm:$0xf]
        %v1089 = vld [vmem:[#allocation7 + $0x10] sm:$0xf]
        %v1090 = vld [vmem:[#allocation7 + $0x14] sm:$0xf]
        %v1091 = vld [vmem:[#allocation7 + $0x18] sm:$0xf]
        %v1092 = vld [vmem:[#allocation7 + $0x1c] sm:$0xf]
        %v1097 = vunpack.c.l.b16 %v1085
        %v1098 = vunpack.c.l.b16 %v1086
        %v1099 = vunpack.c.l.b16 %v1087
        %v1100 = vunpack.c.l.b16 %v1088
        %v1101 = vpack.c.b16 %v1098, %v1097
        %v1102 = vpack.c.b16 %v1100, %v1099
        %v1106 = vsel %vm760, %v1083, 0
        %1108 = vmatprep.subr.bf16.mxu0 0
        %1109 = vmatpush1.bf16.msra.mxu0 %v1101
        %1110 = vmatprep.subr.bf16.mxu0 0
        %1111 = vmatpush1.bf16.msra.mxu0 %v1102
        %1112 = vmatprep.subr.bf16.mxu0 0
        %1113 = vmatpush1.bf16.msra.mxu0 0
        %1114 = vmatprep.subr.bf16.mxu0 0
        %1115 = vmatpush1.bf16.msra.mxu0 0
        %1116 = vmatprep.subr.bf16.mxu0 0
        %1117 = vmatpush1.bf16.msra.mxu0 0
        %1118 = vmatprep.subr.bf16.mxu0 0
        %1119 = vmatpush1.bf16.msra.mxu0 0
        %1120 = vmatprep.subr.bf16.mxu0 0
        %1121 = vmatpush1.bf16.msra.mxu0 0
        %1122 = vmatprep.subr.bf16.mxu0 0
        %1123 = vmatpush1.bf16.msra.mxu0 0
        %1124 = vmatprep.subr.bf16.mxu0 0
        %1125 = vmatpush1.bf16.msra.mxu0 0
        %1126 = vmatprep.subr.bf16.mxu0 0
        %1127 = vmatpush1.bf16.msra.mxu0 0
        %1128 = vmatprep.subr.bf16.mxu0 0
        %1129 = vmatpush1.bf16.msra.mxu0 0
        %1130 = vmatprep.subr.bf16.mxu0 0
        %1131 = vmatpush1.bf16.msra.mxu0 0
        %1132 = vmatprep.subr.bf16.mxu0 0
        %1133 = vmatpush1.bf16.msra.mxu0 0
        %1134 = vmatprep.subr.bf16.mxu0 0
        %1135 = vmatpush1.bf16.msra.mxu0 0
        %1136 = vmatprep.subr.bf16.mxu0 0
        %1137 = vmatpush1.bf16.msra.mxu0 0
        %1138 = vmatprep.subr.bf16.mxu0 0
        %1139 = vmatpush1.bf16.msra.mxu0 0
        %1140 = vmatprep.mubr.bf16.mxu0 0
        %1141 = vmatmul.mubr.bf16.gmra.mrb[0].mxu0 %v1106
        %v1142 = vpop.f32.mrb[0].mxu0
        %v1143 = vadd.f32 0.0, %v1142
        %v1144 = vpop.f32.mrb[0].mxu0
        %v1145 = vpop.f32.mrb[0].mxu0
        %v1146 = vpop.f32.mrb[0].mxu0
        %1147 = vdwg.mxu0
        %v1152 = vunpack.c.l.b16 %v1089
        %v1153 = vunpack.c.l.b16 %v1090
        %v1154 = vunpack.c.l.b16 %v1091
        %v1155 = vunpack.c.l.b16 %v1092
        %v1156 = vpack.c.b16 %v1153, %v1152
        %v1157 = vpack.c.b16 %v1155, %v1154
        %v1161 = vsel %vm760, %v1084, 0
        %1163 = vmatprep.subr.bf16.mxu0 0
        %1164 = vmatpush1.bf16.msra.mxu0 %v1156
        %1165 = vmatprep.subr.bf16.mxu0 0
        %1166 = vmatpush1.bf16.msra.mxu0 %v1157
        %1167 = vmatprep.subr.bf16.mxu0 0
        %1168 = vmatpush1.bf16.msra.mxu0 0
        %1169 = vmatprep.subr.bf16.mxu0 0
        %1170 = vmatpush1.bf16.msra.mxu0 0
        %1171 = vmatprep.subr.bf16.mxu0 0
        %1172 = vmatpush1.bf16.msra.mxu0 0
        %1173 = vmatprep.subr.bf16.mxu0 0
        %1174 = vmatpush1.bf16.msra.mxu0 0
        %1175 = vmatprep.subr.bf16.mxu0 0
        %1176 = vmatpush1.bf16.msra.mxu0 0
        %1177 = vmatprep.subr.bf16.mxu0 0
        %1178 = vmatpush1.bf16.msra.mxu0 0
        %1179 = vmatprep.subr.bf16.mxu0 0
        %1180 = vmatpush1.bf16.msra.mxu0 0
        %1181 = vmatprep.subr.bf16.mxu0 0
        %1182 = vmatpush1.bf16.msra.mxu0 0
        %1183 = vmatprep.subr.bf16.mxu0 0
        %1184 = vmatpush1.bf16.msra.mxu0 0
        %1185 = vmatprep.subr.bf16.mxu0 0
        %1186 = vmatpush1.bf16.msra.mxu0 0
        %1187 = vmatprep.subr.bf16.mxu0 0
        %1188 = vmatpush1.bf16.msra.mxu0 0
        %1189 = vmatprep.subr.bf16.mxu0 0
        %1190 = vmatpush1.bf16.msra.mxu0 0
        %1191 = vmatprep.subr.bf16.mxu0 0
        %1192 = vmatpush1.bf16.msra.mxu0 0
        %1193 = vmatprep.subr.bf16.mxu0 0
        %1194 = vmatpush1.bf16.msra.mxu0 0
        %1195 = vmatprep.mubr.bf16.mxu0 0
        %1196 = vmatmul.mubr.bf16.gmra.mrb[0].mxu0 %v1161
        %v1197 = vpop.f32.mrb[0].mxu0
        %v1198 = vadd.f32 0.0, %v1197
        %v1199 = vpop.f32.mrb[0].mxu0
        %v1200 = vpop.f32.mrb[0].mxu0
        %v1201 = vpop.f32.mrb[0].mxu0
        %1202 = vdwg.mxu0
        %v1203 = vsel %vm760, %v1143, 0.0
        %v1204 = vsel %vm760, %v1198, 0.0
        %v1205 = vadd.f32 %v1203, %v1204
        %v1206 = vadd.f32 %v1205, %v738
        %v1207 = vsel %vm760, %v1206, 0.0
        %1208 = vadd.xlane.f32.xlu0 %v1207
        %v1209 = vpop.xlane.xlu0 %1208
        %v1210 = vrcp.pop 32.0
        %v1211 = vmul.f32 %v1209, %v1210
        %v1212 = vsub.f32 %v1206, %v1211
        %v1213 = vmul.f32 %v1212, %v1212
        %v1214 = vsel %vm760, %v1213, 0.0
        %1215 = vadd.xlane.f32.xlu0 %v1214
        %v1216 = vpop.xlane.xlu0 %1215
        %v1217 = vmul.f32 %v1216, %v1210
        %v1218 = vadd.f32 %v1217, 1e-05
        %v1219 = vrsqrt.pop %v1218
        %v1220 = vmul.f32 %v1212, %v1219
        %v1221 = vld [vmem:[%s5] sm:$0x1]
        %v1223 = vlaneseq
        %v1224 = vshrl.u32 %v1223, 7
        %v1225 = vsub.s32 0, %v1224
        %v1226 = vrot.slane %v1221, %v1225
        %v1228 = vmul.f32 %v1220, %v1226
        %v1229 = vld [vmem:[%s6] sm:$0x1]
        %v1231 = vlaneseq
        %v1232 = vshrl.u32 %v1231, 7
        %v1233 = vsub.s32 0, %v1232
        %v1234 = vrot.slane %v1229, %v1233
        %v1236 = vadd.f32 %v1228, %v1234
        %v1237 = vpack.c.bf16 %v1236, %v1236
        %v1238 = vld [vmem:[#allocation9] sm:$0xf]
        %v1239 = vld [vmem:[#allocation9 + $0x4] sm:$0xf]
        %v1240 = vld [vmem:[#allocation9 + $0x8] sm:$0xf]
        %v1241 = vld [vmem:[#allocation9 + $0xc] sm:$0xf]
        %v1242 = vld [vmem:[%s8] sm:$0x1]
        %v1244 = vlaneseq
        %v1245 = vshrl.u32 %v1244, 7
        %v1246 = vsub.s32 0, %v1245
        %v1247 = vrot.slane %v1242, %v1246
        %v1253 = vunpack.c.l.b16 %v1238
        %v1254 = vunpack.c.l.b16 %v1239
        %v1255 = vunpack.c.l.b16 %v1240
        %v1256 = vunpack.c.l.b16 %v1241
        %v1257 = vpack.c.b16 %v1254, %v1253
        %v1258 = vpack.c.b16 %v1256, %v1255
        %v1262 = vsel %vm760, %v1237, 0
        %1264 = vmatprep.subr.bf16.mxu0 0
        %1265 = vmatpush1.bf16.msra.mxu0 %v1257
        %1266 = vmatprep.subr.bf16.mxu0 0
        %1267 = vmatpush1.bf16.msra.mxu0 %v1258
        %1268 = vmatprep.subr.bf16.mxu0 0
        %1269 = vmatpush1.bf16.msra.mxu0 0
        %1270 = vmatprep.subr.bf16.mxu0 0
        %1271 = vmatpush1.bf16.msra.mxu0 0
        %1272 = vmatprep.subr.bf16.mxu0 0
        %1273 = vmatpush1.bf16.msra.mxu0 0
        %1274 = vmatprep.subr.bf16.mxu0 0
        %1275 = vmatpush1.bf16.msra.mxu0 0
        %1276 = vmatprep.subr.bf16.mxu0 0
        %1277 = vmatpush1.bf16.msra.mxu0 0
        %1278 = vmatprep.subr.bf16.mxu0 0
        %1279 = vmatpush1.bf16.msra.mxu0 0
        %1280 = vmatprep.subr.bf16.mxu0 0
        %1281 = vmatpush1.bf16.msra.mxu0 0
        %1282 = vmatprep.subr.bf16.mxu0 0
        %1283 = vmatpush1.bf16.msra.mxu0 0
        %1284 = vmatprep.subr.bf16.mxu0 0
        %1285 = vmatpush1.bf16.msra.mxu0 0
        %1286 = vmatprep.subr.bf16.mxu0 0
        %1287 = vmatpush1.bf16.msra.mxu0 0
        %1288 = vmatprep.subr.bf16.mxu0 0
        %1289 = vmatpush1.bf16.msra.mxu0 0
        %1290 = vmatprep.subr.bf16.mxu0 0
        %1291 = vmatpush1.bf16.msra.mxu0 0
        %1292 = vmatprep.subr.bf16.mxu0 0
        %1293 = vmatpush1.bf16.msra.mxu0 0
        %1294 = vmatprep.subr.bf16.mxu0 0
        %1295 = vmatpush1.bf16.msra.mxu0 0
        %1296 = vmatprep.mubr.bf16.mxu0 0
        %1297 = vmatmul.mubr.bf16.gmra.mrb[0].mxu0 %v1262
        %v1298 = vpop.f32.mrb[0].mxu0
        %v1299 = vadd.f32 %v1247, %v1298
        %v1300 = vpop.f32.mrb[0].mxu0
        %v1301 = vpop.f32.mrb[0].mxu0
        %v1302 = vpop.f32.mrb[0].mxu0
        %1303 = vdwg.mxu0
        %v1304 = vmax.f32 %v1299, 0.0
        %v1305 = vpack.c.bf16 %v1304, %v1304
        %v1306 = vld [vmem:[%s9] sm:$0xf]
        %v1307 = vld [vmem:[%s9 + $0x4] sm:$0xf]
        %v1308 = vld [vmem:[%s9 + $0x8] sm:$0xf]
        %v1309 = vld [vmem:[%s9 + $0xc] sm:$0xf]
        %v1310 = vld [vmem:[%s9 + $0x10] sm:$0xf]
        %v1311 = vld [vmem:[%s9 + $0x14] sm:$0xf]
        %v1312 = vld [vmem:[%s9 + $0x18] sm:$0xf]
        %v1313 = vld [vmem:[%s9 + $0x1c] sm:$0xf]
        %v1314 = vld [vmem:[%s9 + $0x20] sm:$0xf]
        %v1315 = vld [vmem:[%s9 + $0x24] sm:$0xf]
        %v1316 = vld [vmem:[%s9 + $0x28] sm:$0xf]
        %v1317 = vld [vmem:[%s9 + $0x2c] sm:$0xf]
        %v1318 = vld [vmem:[%s9 + $0x30] sm:$0xf]
        %v1319 = vld [vmem:[%s9 + $0x34] sm:$0xf]
        %v1320 = vld [vmem:[%s9 + $0x38] sm:$0xf]
        %v1321 = vld [vmem:[%s9 + $0x3c] sm:$0xf]
        %v1322 = vld [vmem:[%s10] sm:$0x1]
        %v1324 = vlaneseq
        %v1325 = vshrl.u32 %v1324, 7
        %v1326 = vsub.s32 0, %v1325
        %v1327 = vrot.slane %v1322, %v1326
        %v1345 = vunpack.c.l.b16 %v1306
        %v1346 = vunpack.c.l.b16 %v1307
        %v1347 = vunpack.c.l.b16 %v1308
        %v1348 = vunpack.c.l.b16 %v1309
        %v1349 = vunpack.c.l.b16 %v1310
        %v1350 = vunpack.c.l.b16 %v1311
        %v1351 = vunpack.c.l.b16 %v1312
        %v1352 = vunpack.c.l.b16 %v1313
        %v1353 = vunpack.c.l.b16 %v1314
        %v1354 = vunpack.c.l.b16 %v1315
        %v1355 = vunpack.c.l.b16 %v1316
        %v1356 = vunpack.c.l.b16 %v1317
        %v1357 = vunpack.c.l.b16 %v1318
        %v1358 = vunpack.c.l.b16 %v1319
        %v1359 = vunpack.c.l.b16 %v1320
        %v1360 = vunpack.c.l.b16 %v1321
        %v1361 = vpack.c.b16 %v1346, %v1345
        %v1362 = vpack.c.b16 %v1348, %v1347
        %v1363 = vpack.c.b16 %v1350, %v1349
        %v1364 = vpack.c.b16 %v1352, %v1351
        %v1365 = vpack.c.b16 %v1354, %v1353
        %v1366 = vpack.c.b16 %v1356, %v1355
        %v1367 = vpack.c.b16 %v1358, %v1357
        %v1368 = vpack.c.b16 %v1360, %v1359
        %1377 = vmatprep.subr.bf16.mxu0 0
        %1378 = vmatpush1.bf16.msra.mxu0 %v1361
        %1379 = vmatprep.subr.bf16.mxu0 0
        %1380 = vmatpush1.bf16.msra.mxu0 %v1362
        %1381 = vmatprep.subr.bf16.mxu0 0
        %1382 = vmatpush1.bf16.msra.mxu0 %v1363
        %1383 = vmatprep.subr.bf16.mxu0 0
        %1384 = vmatpush1.bf16.msra.mxu0 %v1364
        %1385 = vmatprep.subr.bf16.mxu0 0
        %1386 = vmatpush1.bf16.msra.mxu0 %v1365
        %1387 = vmatprep.subr.bf16.mxu0 0
        %1388 = vmatpush1.bf16.msra.mxu0 %v1366
        %1389 = vmatprep.subr.bf16.mxu0 0
        %1390 = vmatpush1.bf16.msra.mxu0 %v1367
        %1391 = vmatprep.subr.bf16.mxu0 0
        %1392 = vmatpush1.bf16.msra.mxu0 %v1368
        %1393 = vmatprep.subr.bf16.mxu0 0
        %1394 = vmatpush1.bf16.msra.mxu0 0
        %1395 = vmatprep.subr.bf16.mxu0 0
        %1396 = vmatpush1.bf16.msra.mxu0 0
        %1397 = vmatprep.subr.bf16.mxu0 0
        %1398 = vmatpush1.bf16.msra.mxu0 0
        %1399 = vmatprep.subr.bf16.mxu0 0
        %1400 = vmatpush1.bf16.msra.mxu0 0
        %1401 = vmatprep.subr.bf16.mxu0 0
        %1402 = vmatpush1.bf16.msra.mxu0 0
        %1403 = vmatprep.subr.bf16.mxu0 0
        %1404 = vmatpush1.bf16.msra.mxu0 0
        %1405 = vmatprep.subr.bf16.mxu0 0
        %1406 = vmatpush1.bf16.msra.mxu0 0
        %1407 = vmatprep.subr.bf16.mxu0 0
        %1408 = vmatpush1.bf16.msra.mxu0 0
        %1409 = vmatprep.mubr.bf16.mxu0 0
        %1410 = vmatmul.mubr.bf16.gmra.mrb[0].mxu0 %v1305
        %v1411 = vpop.f32.mrb[0].mxu0
        %v1412 = vadd.f32 %v1327, %v1411
        %v1413 = vpop.f32.mrb[0].mxu0
        %v1414 = vpop.f32.mrb[0].mxu0
        %v1415 = vpop.f32.mrb[0].mxu0
        %1416 = vdwg.mxu0
        %v1417 = vadd.f32 %v1412, %v1236
        %v1418 = vsel %vm760, %v1417, 0.0
        %1419 = vadd.xlane.f32.xlu0 %v1418
        %v1420 = vpop.xlane.xlu0 %1419
        %v1421 = vmul.f32 %v1420, %v1210
        %v1422 = vsub.f32 %v1417, %v1421
        %v1423 = vmul.f32 %v1422, %v1422
        %v1424 = vsel %vm760, %v1423, 0.0
        %1425 = vadd.xlane.f32.xlu0 %v1424
        %v1426 = vpop.xlane.xlu0 %1425
        %v1427 = vmul.f32 %v1426, %v1210
        %v1428 = vadd.f32 %v1427, 1e-05
        %v1429 = vrsqrt.pop %v1428
        %v1430 = vmul.f32 %v1422, %v1429
        %v1431 = vld [vmem:[%s11] sm:$0x1]
        %v1433 = vlaneseq
        %v1434 = vshrl.u32 %v1433, 7
        %v1435 = vsub.s32 0, %v1434
        %v1436 = vrot.slane %v1431, %v1435
        %v1438 = vmul.f32 %v1430, %v1436
        %v1439 = vld [vmem:[%s12] sm:$0x1]
        %v1441 = vlaneseq
        %v1442 = vshrl.u32 %v1441, 7
        %v1443 = vsub.s32 0, %v1442
        %v1444 = vrot.slane %v1439, %v1443
        %v1446 = vadd.f32 %v1438, %v1444
        %1447 = vst.msk [vmem:[%s489] sm:$0xff] %vm760, %v1446
        %s1448 = sand.u32 %s329, 1
        %s1449 = scalar_lea.sflag [#allocation6], %s1448
        %s1450 = sand.u32 %s329, 1
        %s1451 = smul.addr %s1450, 8
        %s1452 = scalar_lea.vmem [#allocation10], %s1451
        // Predicated region
        $region89: #{tpu_custom_call.1} parent=71 // pred_check
          %p1453 = pneg %p339
        $region90: #{tpu_custom_call.1} parent=71 // pred_check_branch
          %1455 = sbr.rel (%p1453) target = $region92
        $region91: #{tpu_custom_call.1} parent=71 // pred_region
          %s1457 = ssub.s32 128, 128
          %1458 = vsyncadd %s1449, %s1457
          %s1459 = sadd.s32 %s34, %s33
          %s1460 = smul.addr %s1459, 128
          %s1461 = scalar_lea.hbm %s13, %s1460
          %s1463 = sshll.u32 %s1452, 4
          %s1464 = int_to_ptr.vmem [resolvable:$true] %s1463
          %1466 = dma.vmem_to_hbm [thread:$0]  %s1464, 128, %s1461, %s1449
        $region92: #{tpu_custom_call.1} parent=71 // pred_fallthru
          _
      $region72: #{tpu_custom_call.1} parent=5 // pred_fallthru
        _
      %p1467 = scmp.le.s32.totalorder 2, %s24
      // Predicated region
      $region93: #{tpu_custom_call.1} parent=5 // pred_check
        %p1468 = pneg %p1467
      $region94: #{tpu_custom_call.1} parent=5 // pred_check_branch
        %1470 = sbr.rel (%p1468) target = $region96
      $region95: #{tpu_custom_call.1} parent=5 // pred_region
        %s1471 = ssub.s32 %s24, 2
        // Predicated region
        $region97: #{tpu_custom_call.1} parent=95 // pred_check
          %p1472 = pneg %p345
        $region98: #{tpu_custom_call.1} parent=95 // pred_check_branch
          %1474 = sbr.rel (%p1472) target = $region100
        $region99: #{tpu_custom_call.1} parent=95 // pred_region
          %s1475 = sand.u32 %s330, 1
          %s1476 = scalar_lea.sflag [#allocation6], %s1475
          %s1477 = sand.u32 %s330, 1
          %s1478 = smul.addr %s1477, 8
          %s1479 = scalar_lea.vmem [#allocation10], %s1478
          %1480 = dma.done %s1476, 128
        $region100: #{tpu_custom_call.1} parent=95 // pred_fallthru
          _
      $region96: #{tpu_custom_call.1} parent=5 // pred_fallthru
        _
    $region6: #{tpu_custom_call.1} parent=1 // loop_footer
      %s28 = sadd.s32 1, %s24
    $region7: #{tpu_custom_call.1} parent=1 // loop_footer_branch
      %23 = sbr.rel target = $region3
    $region8: #{tpu_custom_call.1} parent=1 // loop_exit
      _
    %1481 = vsyncpa [#allocation5], 1
    %s1482 = scalar_lea.sflag [#allocation5], 1
    %1483 = vsyncpa %s1482, 1
    %1484 = vsyncpa [#allocation8], 1
    %1485 = vsyncpa [#allocation6], 1
    %s1486 = scalar_lea.sflag [#allocation6], 1
    %1487 = vsyncpa %s1486, 1

// kernel: tpu_custom_call.1
$region0: #{tpu_custom_call.1}
  #allocation0 [shape = 'u32[]', space=smem, size = 0x4, offset = 0x4, fixed_abs, tag = 'smem constant byte address 0x4 - core index']
  #allocation1 [shape = 'u32[144,128]{1,0:T(1,128)}', space=vmem, size = 0x12000, scoped, tag = 'internal scratch']
  #allocation2 [shape = 'bf16[2,8,32]{2,1,0:T(8,128)(2,1)}', space=vmem, size = 0x1000, scoped, tag = 'scratch operand']
  #allocation3 [shape = 'bf16[2,8,32]{2,1,0:T(8,128)(2,1)}', space=vmem, size = 0x1000, scoped, tag = 'scratch operand']
  %s0 = inlined_call_operand.vmem [shape: f32[2,8,32], index: 0, kind: input, shape index: {}]
  %s1 = inlined_call_operand.vmem [shape: bf16[2,32,32], index: 1, kind: input, shape index: {}]
  %s2 = inlined_call_operand.vmem [shape: bf16[2,32,32], index: 2, kind: input, shape index: {}]
  %s3 = inlined_call_operand.hbm [shape: bf16[2,32,32], index: 3, kind: input, shape index: {}]
  %s4 = inlined_call_operand.hbm [shape: bf16[2,32,32], index: 4, kind: input, shape index: {}]
  %s5 = inlined_call_operand.vmem [shape: f32[1,32], index: 5, kind: input, shape index: {}]
  %s6 = inlined_call_operand.vmem [shape: f32[1,32], index: 6, kind: input, shape index: {}]
  %s7 = inlined_call_operand.hbm [shape: bf16[32,128], index: 7, kind: input, shape index: {}]
  %s8 = inlined_call_operand.vmem [shape: f32[1,128], index: 8, kind: input, shape index: {}]
  %s9 = inlined_call_operand.vmem [shape: bf16[128,32], index: 9, kind: input, shape index: {}]
  %s10 = inlined_call_operand.vmem [shape: f32[1,32], index: 10, kind: input, shape index: {}]
  %s11 = inlined_call_operand.vmem [shape: f32[1,32], index: 11, kind: input, shape index: {}]
  %s12 = inlined_call_operand.vmem [shape: f32[1,32], index: 12, kind: input, shape index: {}]
  %s13 = inlined_call_operand.hbm [shape: f32[2,8,32], index: 13, kind: output, shape index: {}]
  %s14 = sld [smem:[#allocation0]]
  $region101: #{tpu_custom_call.1} parent=0
    _
  %s16 = ssub.s32 1, %s14
  %s17 = scalar_select 0, %s16, %s14
  $region1: #{tpu_custom_call.1} parent=0
    #allocation4 [shape = 'u8[16384]{0}', space=vmem, size = 0x4000, scoped, tag = 'input window, operand 3, single buffered']
    #allocation5 [shape = 's32[2]{0}', space=sflag, size = 0x8, scoped, tag = 'scoped memory for tpu_custom_call.1']
    #allocation6 [shape = 's32[2]{0}', space=sflag, size = 0x8, scoped, tag = 'scoped memory for tpu_custom_call.1']
    #allocation7 [shape = 'u8[16384]{0}', space=vmem, size = 0x4000, scoped, tag = 'input window, operand 4, single buffered']
    #allocation8 [shape = 's32[1]{0}', space=sflag, size = 0x4, scoped, tag = 'scoped memory for tpu_custom_call.1']
    #allocation9 [shape = 'u8[8192]{0}', space=vmem, size = 0x2000, scoped, tag = 'input window, operand 7, single buffered']
    #allocation10 [shape = 'u8[8192]{0}', space=vmem, size = 0x2000, scoped, tag = 'output window, operand 0']
    %18 = vsyncpa [#allocation5], 0
    %19 = vsyncpa [#allocation8], 0
    %20 = vsyncpa [#allocation6], 0
    %s21 = scalar_lea.sflag [#allocation6], 1
    %22 = vsyncpa %s21, 0
    loop: start=0, step=1, limit=4
    $region2: #{tpu_custom_call.1} parent=1 // loop_pre_header
      _
    $region3: #{tpu_custom_call.1} parent=1 // loop_header
      %s24 = sphi 0, %s28
      %p25 = scmp.ge.s32.totalorder %s24, 4
      %s31 = sphi 0, %s43
      %s32 = sphi 0, %s39
      %s33 = sphi 0, %s31
      %s34 = sphi 0, %s32
      %s35 = sphi 0, %s33
      %s36 = sphi 0, %s34
      %s46 = sphi 0, %s48
      %s49 = sphi 0, %s46
      %s50 = sphi 0, %s49
      %s66 = sphi 0, %s50
      %s70 = sphi 0, %s70
      %s72 = sphi 0, %s70
      %s73 = sphi 0, %s72
      %s87 = sphi 0, %s73
      %s91 = sphi 0, %s91
      %s93 = sphi 0, %s91
      %s94 = sphi 0, %s93
      %s108 = sphi 0, %s94
      %s112 = sphi 0, %s112
      %s114 = sphi 0, %s112
      %s115 = sphi 0, %s114
      %s129 = sphi 0, %s115
      %s133 = sphi 0, %s133
      %s135 = sphi 0, %s133
      %s136 = sphi 0, %s135
      %s150 = sphi 0, %s136
      %s154 = sphi 0, %s154
      %s156 = sphi 0, %s154
      %s157 = sphi 0, %s156
      %s171 = sphi 0, %s157
      %s175 = sphi 0, %s175
      %s177 = sphi 0, %s175
      %s178 = sphi 0, %s177
      %s192 = sphi 0, %s178
      %s196 = sphi 0, %s196
      %s198 = sphi 0, %s196
      %s199 = sphi 0, %s198
      %s213 = sphi 0, %s199
      %s217 = sphi 0, %s217
      %s219 = sphi 0, %s217
      %s220 = sphi 0, %s219
      %s234 = sphi 0, %s220
      %s238 = sphi 0, %s238
      %s240 = sphi 0, %s238
      %s241 = sphi 0, %s240
      %s255 = sphi 0, %s241
      %s259 = sphi 0, %s259
      %s261 = sphi 0, %s259
      %s262 = sphi 0, %s261
      %s276 = sphi 0, %s262
      %s280 = sphi 0, %s280
      %s282 = sphi 0, %s280
      %s283 = sphi 0, %s282
      %s297 = sphi 0, %s283
      %s301 = sphi 0, %s301
      %s303 = sphi 0, %s301
      %s304 = sphi 0, %s303
      %s318 = sphi 0, %s304
      %s326 = sphi 0, %s328
      %s329 = sphi 0, %s326
      %s330 = sphi 0, %s329
      %s346 = sphi 0, %s330
    $region4: #{tpu_custom_call.1} parent=1 // loop_header_branch
      %27 = sbr.rel (%p25) target = $region8
    $region5: #{tpu_custom_call.1} parent=1 // loop_body
      %s29 = ssub.s32 %s24, 1
      %s30 = ssub.s32 %s24, 2
      %s37 = sadd.s32 1, %s32
      %p38 = scmp.ge.s32.totalorder %s37, 1
      %s39 = scalar_select %p38, 0, %s37
      %s40 = sadd.s32 1, %s31
      %s41 = scalar_select %p38, %s40, %s31
      %p42 = scmp.ge.s32.totalorder %s41, 2
      %s43 = scalar_select %p42, 0, %s41
      %s44 = ssub.s32 %s31, %s43
      %p45 = scmp.eq.s32.totalorder %s44, 0
      %s47 = sadd.s32 %s46, 1
      %s48 = scalar_select %p45, %s46, %s47
      %p51 = pneg %p45
      %p52 = scmp.eq.s32.totalorder %s24, 1
      %p53 = por %p51, %p52
      %p54 = scmp.ne.s32.totalorder %s46, %s49
      %p55 = scmp.eq.s32.totalorder %s24, 0
      %p56 = por %p54, %p55
      %p57 = scmp.ne.s32.totalorder %s46, %s49
      %p58 = scmp.eq.s32.totalorder %s29, 1
      %p59 = por %p57, %p58
      %p60 = scmp.ne.s32.totalorder %s49, %s50
      %p61 = scmp.eq.s32.totalorder %s29, 0
      %p62 = por %p60, %p61
      %p63 = scmp.ne.s32.totalorder %s49, %s50
      %p64 = scmp.eq.s32.totalorder %s30, 1
      %p65 = por %p63, %p64
      %p67 = scmp.ne.s32.totalorder %s50, %s66
      %p68 = scmp.eq.s32.totalorder %s30, 0
      %p69 = por %p67, %p68
      %s71 = sadd.s32 %s70, 1
      %p74 = scmp.eq.s32.totalorder %s24, 1
      %p75 = scmp.ne.s32.totalorder %s70, %s72
      %p76 = scmp.eq.s32.totalorder %s24, 0
      %p77 = por %p75, %p76
      %p78 = scmp.ne.s32.totalorder %s70, %s72
      %p79 = scmp.eq.s32.totalorder %s29, 1
      %p80 = por %p78, %p79
      %p81 = scmp.ne.s32.totalorder %s72, %s73
      %p82 = scmp.eq.s32.totalorder %s29, 0
      %p83 = por %p81, %p82
      %p84 = scmp.ne.s32.totalorder %s72, %s73
      %p85 = scmp.eq.s32.totalorder %s30, 1
      %p86 = por %p84, %p85
      %p88 = scmp.ne.s32.totalorder %s73, %s87
      %p89 = scmp.eq.s32.totalorder %s30, 0
      %p90 = por %p88, %p89
      %s92 = sadd.s32 %s91, 1
      %p95 = scmp.eq.s32.totalorder %s24, 1
      %p96 = scmp.ne.s32.totalorder %s91, %s93
      %p97 = scmp.eq.s32.totalorder %s24, 0
      %p98 = por %p96, %p97
      %p99 = scmp.ne.s32.totalorder %s91, %s93
      %p100 = scmp.eq.s32.totalorder %s29, 1
      %p101 = por %p99, %p100
      %p102 = scmp.ne.s32.totalorder %s93, %s94
      %p103 = scmp.eq.s32.totalorder %s29, 0
      %p104 = por %p102, %p103
      %p105 = scmp.ne.s32.totalorder %s93, %s94
      %p106 = scmp.eq.s32.totalorder %s30, 1
      %p107 = por %p105, %p106
      %p109 = scmp.ne.s32.totalorder %s94, %s108
      %p110 = scmp.eq.s32.totalorder %s30, 0
      %p111 = por %p109, %p110
      %s113 = sadd.s32 %s112, 1
      %p116 = scmp.eq.s32.totalorder %s24, 1
      %p117 = scmp.ne.s32.totalorder %s112, %s114
      %p118 = scmp.eq.s32.totalorder %s24, 0
      %p119 = por %p117, %p118
      %p120 = scmp.ne.s32.totalorder %s112, %s114
      %p121 = scmp.eq.s32.totalorder %s29, 1
      %p122 = por %p120, %p121
      %p123 = scmp.ne.s32.totalorder %s114, %s115
      %p124 = scmp.eq.s32.totalorder %s29, 0
      %p125 = por %p123, %p124
      %p126 = scmp.ne.s32.totalorder %s114, %s115
      %p127 = scmp.eq.s32.totalorder %s30, 1
      %p128 = por %p126, %p127
      %p130 = scmp.ne.s32.totalorder %s115, %s129
      %p131 = scmp.eq.s32.totalorder %s30, 0
      %p132 = por %p130, %p131
      %s134 = sadd.s32 %s133, 1
      %p137 = scmp.eq.s32.totalorder %s24, 1
      %p138 = scmp.ne.s32.totalorder %s133, %s135
      %p139 = scmp.eq.s32.totalorder %s24, 0
      %p140 = por %p138, %p139
      %p141 = scmp.ne.s32.totalorder %s133, %s135
      %p142 = scmp.eq.s32.totalorder %s29, 1
      %p143 = por %p141, %p142
      %p144 = scmp.ne.s32.totalorder %s135, %s136
      %p145 = scmp.eq.s32.totalorder %s29, 0
      %p146 = por %p144, %p145
      %p147 = scmp.ne.s32.totalorder %s135, %s136
      %p148 = scmp.eq.s32.totalorder %s30, 1
      %p149 = por %p147, %p148
      %p151 = scmp.ne.s32.totalorder %s136, %s150
      %p152 = scmp.eq.s32.totalorder %s30, 0
      %p153 = por %p151, %p152
      %s155 = sadd.s32 %s154, 1
      %p158 = scmp.eq.s32.totalorder %s24, 1
      %p159 = scmp.ne.s32.totalorder %s154, %s156
      %p160 = scmp.eq.s32.totalorder %s24, 0
      %p161 = por %p159, %p160
      %p162 = scmp.ne.s32.totalorder %s154, %s156
      %p163 = scmp.eq.s32.totalorder %s29, 1
      %p164 = por %p162, %p163
      %p165 = scmp.ne.s32.totalorder %s156, %s157
      %p166 = scmp.eq.s32.totalorder %s29, 0
      %p167 = por %p165, %p166
      %p168 = scmp.ne.s32.totalorder %s156, %s157
      %p169 = scmp.eq.s32.totalorder %s30, 1
      %p170 = por %p168, %p169
      %p172 = scmp.ne.s32.totalorder %s157, %s171
      %p173 = scmp.eq.s32.totalorder %s30, 0
      %p174 = por %p172, %p173
      %s176 = sadd.s32 %s175, 1
      %p179 = scmp.eq.s32.totalorder %s24, 1
      %p180 = scmp.ne.s32.totalorder %s175, %s177
      %p181 = scmp.eq.s32.totalorder %s24, 0
      %p182 = por %p180, %p181
      %p183 = scmp.ne.s32.totalorder %s175, %s177
      %p184 = scmp.eq.s32.totalorder %s29, 1
      %p185 = por %p183, %p184
      %p186 = scmp.ne.s32.totalorder %s177, %s178
      %p187 = scmp.eq.s32.totalorder %s29, 0
      %p188 = por %p186, %p187
      %p189 = scmp.ne.s32.totalorder %s177, %s178
      %p190 = scmp.eq.s32.totalorder %s30, 1
      %p191 = por %p189, %p190
      %p193 = scmp.ne.s32.totalorder %s178, %s192
      %p194 = scmp.eq.s32.totalorder %s30, 0
      %p195 = por %p193, %p194
      %s197 = sadd.s32 %s196, 1
      %p200 = scmp.eq.s32.totalorder %s24, 1
      %p201 = scmp.ne.s32.totalorder %s196, %s198
      %p202 = scmp.eq.s32.totalorder %s24, 0
      %p203 = por %p201, %p202
      %p204 = scmp.ne.s32.totalorder %s196, %s198
      %p205 = scmp.eq.s32.totalorder %s29, 1
      %p206 = por %p204, %p205
      %p207 = scmp.ne.s32.totalorder %s198, %s199
      %p208 = scmp.eq.s32.totalorder %s29, 0
      %p209 = por %p207, %p208
      %p210 = scmp.ne.s32.totalorder %s198, %s199
      %p211 = scmp.eq.s32.totalorder %s30, 1
      %p212 = por %p210, %p211
      %p214 = scmp.ne.s32.totalorder %s199, %s213
      %p215 = scmp.eq.s32.totalorder %s30, 0
      %p216 = por %p214, %p215
      %s218 = sadd.s32 %s217, 1
      %p221 = scmp.eq.s32.totalorder %s24, 1
      %p222 = scmp.ne.s32.totalorder %s217, %s219
      %p223 = scmp.eq.s32.totalorder %s24, 0
      %p224 = por %p222, %p223
      %p225 = scmp.ne.s32.totalorder %s217, %s219
      %p226 = scmp.eq.s32.totalorder %s29, 1
      %p227 = por %p225, %p226
      %p228 = scmp.ne.s32.totalorder %s219, %s220
      %p229 = scmp.eq.s32.totalorder %s29, 0
      %p230 = por %p228, %p229
      %p231 = scmp.ne.s32.totalorder %s219, %s220
      %p232 = scmp.eq.s32.totalorder %s30, 1
      %p233 = por %p231, %p232
      %p235 = scmp.ne.s32.totalorder %s220, %s234
      %p236 = scmp.eq.s32.totalorder %s30, 0
      %p237 = por %p235, %p236
      %s239 = sadd.s32 %s238, 1
      %p242 = scmp.eq.s32.totalorder %s24, 1
      %p243 = scmp.ne.s32.totalorder %s238, %s240
      %p244 = scmp.eq.s32.totalorder %s24, 0
      %p245 = por %p243, %p244
      %p246 = scmp.ne.s32.totalorder %s238, %s240
      %p247 = scmp.eq.s32.totalorder %s29, 1
      %p248 = por %p246, %p247
      %p249 = scmp.ne.s32.totalorder %s240, %s241
      %p250 = scmp.eq.s32.totalorder %s29, 0
      %p251 = por %p249, %p250
      %p252 = scmp.ne.s32.totalorder %s240, %s241
      %p253 = scmp.eq.s32.totalorder %s30, 1
      %p254 = por %p252, %p253
      %p256 = scmp.ne.s32.totalorder %s241, %s255
      %p257 = scmp.eq.s32.totalorder %s30, 0
      %p258 = por %p256, %p257
      %s260 = sadd.s32 %s259, 1
      %p263 = scmp.eq.s32.totalorder %s24, 1
      %p264 = scmp.ne.s32.totalorder %s259, %s261
      %p265 = scmp.eq.s32.totalorder %s24, 0
      %p266 = por %p264, %p265
      %p267 = scmp.ne.s32.totalorder %s259, %s261
      %p268 = scmp.eq.s32.totalorder %s29, 1
      %p269 = por %p267, %p268
      %p270 = scmp.ne.s32.totalorder %s261, %s262
      %p271 = scmp.eq.s32.totalorder %s29, 0
      %p272 = por %p270, %p271
      %p273 = scmp.ne.s32.totalorder %s261, %s262
      %p274 = scmp.eq.s32.totalorder %s30, 1
      %p275 = por %p273, %p274
      %p277 = scmp.ne.s32.totalorder %s262, %s276
      %p278 = scmp.eq.s32.totalorder %s30, 0
      %p279 = por %p277, %p278
      %s281 = sadd.s32 %s280, 1
      %p284 = scmp.eq.s32.totalorder %s24, 1
      %p285 = scmp.ne.s32.totalorder %s280, %s282
      %p286 = scmp.eq.s32.totalorder %s24, 0
      %p287 = por %p285, %p286
      %p288 = scmp.ne.s32.totalorder %s280, %s282
      %p289 = scmp.eq.s32.totalorder %s29, 1
      %p290 = por %p288, %p289
      %p291 = scmp.ne.s32.totalorder %s282, %s283
      %p292 = scmp.eq.s32.totalorder %s29, 0
      %p293 = por %p291, %p292
      %p294 = scmp.ne.s32.totalorder %s282, %s283
      %p295 = scmp.eq.s32.totalorder %s30, 1
      %p296 = por %p294, %p295
      %p298 = scmp.ne.s32.totalorder %s283, %s297
      %p299 = scmp.eq.s32.totalorder %s30, 0
      %p300 = por %p298, %p299
      %s302 = sadd.s32 %s301, 1
      %p305 = scmp.eq.s32.totalorder %s24, 1
      %p306 = scmp.ne.s32.totalorder %s301, %s303
      %p307 = scmp.eq.s32.totalorder %s24, 0
      %p308 = por %p306, %p307
      %p309 = scmp.ne.s32.totalorder %s301, %s303
      %p310 = scmp.eq.s32.totalorder %s29, 1
      %p311 = por %p309, %p310
      %p312 = scmp.ne.s32.totalorder %s303, %s304
      %p313 = scmp.eq.s32.totalorder %s29, 0
      %p314 = por %p312, %p313
      %p315 = scmp.ne.s32.totalorder %s303, %s304
      %p316 = scmp.eq.s32.totalorder %s30, 1
      %p317 = por %p315, %p316
      %p319 = scmp.ne.s32.totalorder %s304, %s318
      %p320 = scmp.eq.s32.totalorder %s30, 0
      %p321 = por %p319, %p320
      %s322 = ssub.s32 %s31, %s43
      %s323 = ssub.s32 %s32, %s39
      %s324 = sor.u32 %s322, %s323
      %p325 = scmp.eq.s32.totalorder %s324, 0
      %s327 = sadd.s32 %s326, 1
      %s328 = scalar_select %p325, %s326, %s327
      %p331 = pneg %p325
      %p332 = scmp.eq.s32.totalorder %s24, 1
      %p333 = por %p331, %p332
      %p334 = scmp.ne.s32.totalorder %s326, %s329
      %p335 = scmp.eq.s32.totalorder %s24, 0
      %p336 = por %p334, %p335
      %p337 = scmp.ne.s32.totalorder %s326, %s329
      %p338 = scmp.eq.s32.totalorder %s29, 1
      %p339 = por %p337, %p338
      %p340 = scmp.ne.s32.totalorder %s329, %s330
      %p341 = scmp.eq.s32.totalorder %s29, 0
      %p342 = por %p340, %p341
      %p343 = scmp.ne.s32.totalorder %s329, %s330
      %p344 = scmp.eq.s32.totalorder %s30, 1
      %p345 = por %p343, %p344
      %p347 = scmp.ne.s32.totalorder %s330, %s346
      %p348 = scmp.eq.s32.totalorder %s30, 0
      %p349 = por %p347, %p348
      %p350 = scmp.le.s32.totalorder 1, %s24
      %p351 = scmp.lt.s32.totalorder %s24, 3
      %p352 = pnand %p350, %p351
      %p353 = pneg %p352
      // Predicated region
      $region9: #{tpu_custom_call.1} parent=5 // pred_check
        _
      $region10: #{tpu_custom_call.1} parent=5 // pred_check_branch
        %355 = sbr.rel (%p352) target = $region12
      $region11: #{tpu_custom_call.1} parent=5 // pred_region
        %s356 = ssub.s32 %s24, 1
        // Predicated region
        $region13: #{tpu_custom_call.1} parent=11 // pred_check
          %p357 = pneg %p83
        $region14: #{tpu_custom_call.1} parent=11 // pred_check_branch
          %359 = sbr.rel (%p357) target = $region16
        $region15: #{tpu_custom_call.1} parent=11 // pred_region
          _
        $region16: #{tpu_custom_call.1} parent=11 // pred_fallthru
          _
        // Predicated region
        $region17: #{tpu_custom_call.1} parent=11 // pred_check
          %p360 = pneg %p104
        $region18: #{tpu_custom_call.1} parent=11 // pred_check_branch
          %362 = sbr.rel (%p360) target = $region20
        $region19: #{tpu_custom_call.1} parent=11 // pred_region
          _
        $region20: #{tpu_custom_call.1} parent=11 // pred_fallthru
          _
        // Predicated region
        $region21: #{tpu_custom_call.1} parent=11 // pred_check
          %p363 = pneg %p125
        $region22: #{tpu_custom_call.1} parent=11 // pred_check_branch
          %365 = sbr.rel (%p363) target = $region24
        $region23: #{tpu_custom_call.1} parent=11 // pred_region
          %s367 = ssub.s32 512, 512
          %368 = vsyncadd [#allocation5], %s367
          %s369 = sshll.u32 [#allocation4], 4
          %s370 = int_to_ptr.vmem [resolvable:$true] %s369
          %375 = dma.hbm_to_vmem [thread:$0]  %s3, 512, %s370, [#allocation5], 64, 64, 4
        $region24: #{tpu_custom_call.1} parent=11 // pred_fallthru
          _
        // Predicated region
        $region25: #{tpu_custom_call.1} parent=11 // pred_check
          %p376 = pneg %p146
        $region26: #{tpu_custom_call.1} parent=11 // pred_check_branch
          %378 = sbr.rel (%p376) target = $region28
        $region27: #{tpu_custom_call.1} parent=11 // pred_region
          %s380 = ssub.s32 512, 512
          %381 = vsyncadd [#allocation8], %s380
          %s382 = sshll.u32 [#allocation7], 4
          %s383 = int_to_ptr.vmem [resolvable:$true] %s382
          %388 = dma.hbm_to_vmem [thread:$0]  %s4, 512, %s383, [#allocation8], 64, 64, 4
        $region28: #{tpu_custom_call.1} parent=11 // pred_fallthru
          _
        // Predicated region
        $region29: #{tpu_custom_call.1} parent=11 // pred_check
          %p389 = pneg %p167
        $region30: #{tpu_custom_call.1} parent=11 // pred_check_branch
          %391 = sbr.rel (%p389) target = $region32
        $region31: #{tpu_custom_call.1} parent=11 // pred_region
          _
        $region32: #{tpu_custom_call.1} parent=11 // pred_fallthru
          _
        // Predicated region
        $region33: #{tpu_custom_call.1} parent=11 // pred_check
          %p392 = pneg %p188
        $region34: #{tpu_custom_call.1} parent=11 // pred_check_branch
          %394 = sbr.rel (%p392) target = $region36
        $region35: #{tpu_custom_call.1} parent=11 // pred_region
          _
        $region36: #{tpu_custom_call.1} parent=11 // pred_fallthru
          _
        // Predicated region
        $region37: #{tpu_custom_call.1} parent=11 // pred_check
          %p395 = pneg %p209
        $region38: #{tpu_custom_call.1} parent=11 // pred_check_branch
          %397 = sbr.rel (%p395) target = $region40
        $region39: #{tpu_custom_call.1} parent=11 // pred_region
          %s399 = ssub.s32 256, 256
          %400 = vsyncadd [#allocation8], %s399
          %s401 = sshll.u32 [#allocation9], 4
          %s402 = int_to_ptr.vmem [resolvable:$true] %s401
          %407 = dma.hbm_to_vmem [thread:$0]  %s7, 256, %s402, [#allocation8], 64, 64, 4
        $region40: #{tpu_custom_call.1} parent=11 // pred_fallthru
          _
        // Predicated region
        $region41: #{tpu_custom_call.1} parent=11 // pred_check
          %p408 = pneg %p230
        $region42: #{tpu_custom_call.1} parent=11 // pred_check_branch
          %410 = sbr.rel (%p408) target = $region44
        $region43: #{tpu_custom_call.1} parent=11 // pred_region
          _
        $region44: #{tpu_custom_call.1} parent=11 // pred_fallthru
          _
        // Predicated region
        $region45: #{tpu_custom_call.1} parent=11 // pred_check
          %p411 = pneg %p251
        $region46: #{tpu_custom_call.1} parent=11 // pred_check_branch
          %413 = sbr.rel (%p411) target = $region48
        $region47: #{tpu_custom_call.1} parent=11 // pred_region
          _
        $region48: #{tpu_custom_call.1} parent=11 // pred_fallthru
          _
        // Predicated region
        $region49: #{tpu_custom_call.1} parent=11 // pred_check
          %p414 = pneg %p272
        $region50: #{tpu_custom_call.1} parent=11 // pred_check_branch
          %416 = sbr.rel (%p414) target = $region52
        $region51: #{tpu_custom_call.1} parent=11 // pred_region
          _
        $region52: #{tpu_custom_call.1} parent=11 // pred_fallthru
          _
        // Predicated region
        $region53: #{tpu_custom_call.1} parent=11 // pred_check
          %p417 = pneg %p293
        $region54: #{tpu_custom_call.1} parent=11 // pred_check_branch
          %419 = sbr.rel (%p417) target = $region56
        $region55: #{tpu_custom_call.1} parent=11 // pred_region
          _
        $region56: #{tpu_custom_call.1} parent=11 // pred_fallthru
          _
        // Predicated region
        $region57: #{tpu_custom_call.1} parent=11 // pred_check
          %p420 = pneg %p314
        $region58: #{tpu_custom_call.1} parent=11 // pred_check_branch
          %422 = sbr.rel (%p420) target = $region60
        $region59: #{tpu_custom_call.1} parent=11 // pred_region
          _
        $region60: #{tpu_custom_call.1} parent=11 // pred_fallthru
          _
      $region12: #{tpu_custom_call.1} parent=5 // pred_fallthru
        _
      %p423 = scmp.lt.s32.totalorder %s24, 2
      // Predicated region
      $region61: #{tpu_custom_call.1} parent=5 // pred_check
        %p424 = pneg %p423
      $region62: #{tpu_custom_call.1} parent=5 // pred_check_branch
        %426 = sbr.rel (%p424) target = $region64
      $region63: #{tpu_custom_call.1} parent=5 // pred_region
        // Predicated region
        $region65: #{tpu_custom_call.1} parent=63 // pred_check
          %p427 = pneg %p56
        $region66: #{tpu_custom_call.1} parent=63 // pred_check_branch
          %429 = sbr.rel (%p427) target = $region68
        $region67: #{tpu_custom_call.1} parent=63 // pred_region
          %p430 = scmp.lt.s32.totalorder %s31, 1
          %s431 = scalar_select %p430, %s31, 1
          %s432 = smul.addr %s431, 8
          %s433 = scalar_lea.vmem %s0, %s432
        $region68: #{tpu_custom_call.1} parent=63 // pred_fallthru
          _
      $region64: #{tpu_custom_call.1} parent=5 // pred_fallthru
        _
      %p434 = scmp.le.s32.totalorder 1, %s24
      %p435 = scmp.lt.s32.totalorder %s24, 3
      %p436 = pnand %p434, %p435
      %p437 = pneg %p436
      // Predicated region
      $region69: #{tpu_custom_call.1} parent=5 // pred_check
        _
      $region70: #{tpu_custom_call.1} parent=5 // pred_check_branch
        %439 = sbr.rel (%p436) target = $region72
      $region71: #{tpu_custom_call.1} parent=5 // pred_region
        %s440 = ssub.s32 %s24, 1
        // Predicated region
        $region73: #{tpu_custom_call.1} parent=71 // pred_check
          %p441 = pneg %p125
        $region74: #{tpu_custom_call.1} parent=71 // pred_check_branch
          %443 = sbr.rel (%p441) target = $region76
        $region75: #{tpu_custom_call.1} parent=71 // pred_region
          %444 = dma.done [#allocation5], 512
        $region76: #{tpu_custom_call.1} parent=71 // pred_fallthru
          _
        // Predicated region
        $region77: #{tpu_custom_call.1} parent=71 // pred_check
          %p445 = pneg %p146
        $region78: #{tpu_custom_call.1} parent=71 // pred_check_branch
          %447 = sbr.rel (%p445) target = $region80
        $region79: #{tpu_custom_call.1} parent=71 // pred_region
          %448 = dma.done [#allocation8], 512
        $region80: #{tpu_custom_call.1} parent=71 // pred_fallthru
          _
        // Predicated region
        $region81: #{tpu_custom_call.1} parent=71 // pred_check
          %p449 = pneg %p209
        $region82: #{tpu_custom_call.1} parent=71 // pred_check_branch
          %451 = sbr.rel (%p449) target = $region84
        $region83: #{tpu_custom_call.1} parent=71 // pred_region
          %452 = dma.done [#allocation8], 256
        $region84: #{tpu_custom_call.1} parent=71 // pred_fallthru
          _
        %p453 = scmp.lt.s32.totalorder %s33, 1
        %s454 = scalar_select %p453, %s33, 1
        %s455 = smul.addr %s454, 8
        %s456 = scalar_lea.vmem %s0, %s455
        %p457 = pneg %p62
        %p458 = pneg %p59
        %p459 = pneg %p83
        %p460 = pneg %p80
        %p461 = pneg %p104
        %p462 = pneg %p101
        %p463 = pneg %p125
        %p464 = pneg %p122
        %p465 = pneg %p146
        %p466 = pneg %p143
        %p467 = pneg %p167
        %p468 = pneg %p164
        %p469 = pneg %p188
        %p470 = pneg %p185
        %p471 = pneg %p209
        %p472 = pneg %p206
        %p473 = pneg %p230
        %p474 = pneg %p227
        %p475 = pneg %p251
        %p476 = pneg %p248
        %p477 = pneg %p272
        %p478 = pneg %p269
        %p479 = pneg %p293
        %p480 = pneg %p290
        %p481 = pneg %p314
        %p482 = pneg %p311
        %p483 = pneg %p342
        %p484 = pneg %p339
        %s485 = sand.u32 %s329, 1
        %s486 = scalar_lea.sflag [#allocation6], %s485
        %s487 = sand.u32 %s329, 1
        %s488 = smul.addr %s487, 8
        %s489 = scalar_lea.vmem [#allocation10], %s488
        %p490 = scmp.lt.s32.totalorder %s33, 1
        %s491 = scalar_select %p490, %s33, 1
        %s492 = smul.addr %s491, 8
        %s493 = scalar_lea.vmem %s0, %s492
        %p495 = scmp.eq.s32.totalorder %s34, 0
        // Predicated region
        $region85: #{tpu_custom_call.1} parent=71 // pred_check
          %p496 = pneg %p495
        $region86: #{tpu_custom_call.1} parent=71 // pred_check_branch
          %498 = sbr.rel (%p496) target = $region88
        $region87: #{tpu_custom_call.1} parent=71 // pred_region
          %v499 = vld [vmem:[%s493] sm:$0xff]
          %v500 = vpack.c.bf16 %v499, %v499
          %v501 = vld [vmem:[%s2] sm:$0xf]
          %v502 = vld [vmem:[%s2 + $0x4] sm:$0xf]
          %v503 = vld [vmem:[%s2 + $0x8] sm:$0xf]
          %v504 = vld [vmem:[%s2 + $0xc] sm:$0xf]
          %v505 = vld [vmem:[%s2 + $0x10] sm:$0xf]
          %v506 = vld [vmem:[%s2 + $0x14] sm:$0xf]
          %v507 = vld [vmem:[%s2 + $0x18] sm:$0xf]
          %v508 = vld [vmem:[%s2 + $0x1c] sm:$0xf]
          %v513 = vunpack.c.l.b16 %v501
          %v514 = vunpack.c.l.b16 %v502
          %v515 = vunpack.c.l.b16 %v503
          %v516 = vunpack.c.l.b16 %v504
          %v517 = vpack.c.b16 %v514, %v513
          %v518 = vpack.c.b16 %v516, %v515
          %vm521 = vcmask 261120
          %v523 = vsel %vm521, %v500, 0
          %525 = vmatprep.subr.bf16.mxu0 0
          %526 = vmatpush1.bf16.msra.mxu0 %v517
          %527 = vmatprep.subr.bf16.mxu0 0
          %528 = vmatpush1.bf16.msra.mxu0 %v518
          %529 = vmatprep.subr.bf16.mxu0 0
          %530 = vmatpush1.bf16.msra.mxu0 0
          %531 = vmatprep.subr.bf16.mxu0 0
          %532 = vmatpush1.bf16.msra.mxu0 0
          %533 = vmatprep.subr.bf16.mxu0 0
          %534 = vmatpush1.bf16.msra.mxu0 0
          %535 = vmatprep.subr.bf16.mxu0 0
          %536 = vmatpush1.bf16.msra.mxu0 0
          %537 = vmatprep.subr.bf16.mxu0 0
          %538 = vmatpush1.bf16.msra.mxu0 0
          %539 = vmatprep.subr.bf16.mxu0 0
          %540 = vmatpush1.bf16.msra.mxu0 0
          %541 = vmatprep.subr.bf16.mxu0 0
          %542 = vmatpush1.bf16.msra.mxu0 0
          %543 = vmatprep.subr.bf16.mxu0 0
          %544 = vmatpush1.bf16.msra.mxu0 0
          %545 = vmatprep.subr.bf16.mxu0 0
          %546 = vmatpush1.bf16.msra.mxu0 0
          %547 = vmatprep.subr.bf16.mxu0 0
          %548 = vmatpush1.bf16.msra.mxu0 0
          %549 = vmatprep.subr.bf16.mxu0 0
          %550 = vmatpush1.bf16.msra.mxu0 0
          %551 = vmatprep.subr.bf16.mxu0 0
          %552 = vmatpush1.bf16.msra.mxu0 0
          %553 = vmatprep.subr.bf16.mxu0 0
          %554 = vmatpush1.bf16.msra.mxu0 0
          %555 = vmatprep.subr.bf16.mxu0 0
          %556 = vmatpush1.bf16.msra.mxu0 0
          %557 = vmatprep.mubr.bf16.mxu0 0
          %558 = vmatmul.mubr.bf16.gmra.mrb[0].mxu0 %v523
          %v559 = vpop.f32.mrb[0].mxu0
          %v560 = vadd.f32 0.0, %v559
          %v561 = vpop.f32.mrb[0].mxu0
          %v562 = vpop.f32.mrb[0].mxu0
          %v563 = vpop.f32.mrb[0].mxu0
          %564 = vdwg.mxu0
          %v569 = vunpack.c.l.b16 %v505
          %v570 = vunpack.c.l.b16 %v506
          %v571 = vunpack.c.l.b16 %v507
          %v572 = vunpack.c.l.b16 %v508
          %v573 = vpack.c.b16 %v570, %v569
          %v574 = vpack.c.b16 %v572, %v571
          %577 = vmatprep.subr.bf16.mxu0 0
          %578 = vmatpush1.bf16.msra.mxu0 %v573
          %579 = vmatprep.subr.bf16.mxu0 0
          %580 = vmatpush1.bf16.msra.mxu0 %v574
          %581 = vmatprep.subr.bf16.mxu0 0
          %582 = vmatpush1.bf16.msra.mxu0 0
          %583 = vmatprep.subr.bf16.mxu0 0
          %584 = vmatpush1.bf16.msra.mxu0 0
          %585 = vmatprep.subr.bf16.mxu0 0
          %586 = vmatpush1.bf16.msra.mxu0 0
          %587 = vmatprep.subr.bf16.mxu0 0
          %588 = vmatpush1.bf16.msra.mxu0 0
          %589 = vmatprep.subr.bf16.mxu0 0
          %590 = vmatpush1.bf16.msra.mxu0 0
          %591 = vmatprep.subr.bf16.mxu0 0
          %592 = vmatpush1.bf16.msra.mxu0 0
          %593 = vmatprep.subr.bf16.mxu0 0
          %594 = vmatpush1.bf16.msra.mxu0 0
          %595 = vmatprep.subr.bf16.mxu0 0
          %596 = vmatpush1.bf16.msra.mxu0 0
          %597 = vmatprep.subr.bf16.mxu0 0
          %598 = vmatpush1.bf16.msra.mxu0 0
          %599 = vmatprep.subr.bf16.mxu0 0
          %600 = vmatpush1.bf16.msra.mxu0 0
          %601 = vmatprep.subr.bf16.mxu0 0
          %602 = vmatpush1.bf16.msra.mxu0 0
          %603 = vmatprep.subr.bf16.mxu0 0
          %604 = vmatpush1.bf16.msra.mxu0 0
          %605 = vmatprep.subr.bf16.mxu0 0
          %606 = vmatpush1.bf16.msra.mxu0 0
          %607 = vmatprep.subr.bf16.mxu0 0
          %608 = vmatpush1.bf16.msra.mxu0 0
          %609 = vmatprep.mubr.bf16.mxu0 0
          %610 = vmatmul.mubr.bf16.gmra.mrb[0].mxu0 %v523
          %v611 = vpop.f32.mrb[0].mxu0
          %v612 = vadd.f32 0.0, %v611
          %v613 = vpop.f32.mrb[0].mxu0
          %v614 = vpop.f32.mrb[0].mxu0
          %v615 = vpop.f32.mrb[0].mxu0
          %616 = vdwg.mxu0
          %v617 = vpack.c.bf16 %v560, %v560
          %v618 = vpack.c.bf16 %v612, %v612
          %vm619 = vcmask 257024
          %620 = vst.msk [vmem:[#allocation2] sm:$0xf] %vm619, %v617
          %621 = vst.msk [vmem:[#allocation2 + $0x4] sm:$0xf] %vm619, %v618
          %v622 = vld [vmem:[#allocation4] sm:$0xf]
          %v623 = vld [vmem:[#allocation4 + $0x4] sm:$0xf]
          %v624 = vld [vmem:[#allocation4 + $0x8] sm:$0xf]
          %v625 = vld [vmem:[#allocation4 + $0xc] sm:$0xf]
          %v626 = vld [vmem:[#allocation4 + $0x10] sm:$0xf]
          %v627 = vld [vmem:[#allocation4 + $0x14] sm:$0xf]
          %v628 = vld [vmem:[#allocation4 + $0x18] sm:$0xf]
          %v629 = vld [vmem:[#allocation4 + $0x1c] sm:$0xf]
          %v634 = vunpack.c.l.b16 %v622
          %v635 = vunpack.c.l.b16 %v623
          %v636 = vunpack.c.l.b16 %v624
          %v637 = vunpack.c.l.b16 %v625
          %v638 = vpack.c.b16 %v635, %v634
          %v639 = vpack.c.b16 %v637, %v636
          %642 = vmatprep.subr.bf16.mxu0 0
          %643 = vmatpush1.bf16.msra.mxu0 %v638
          %644 = vmatprep.subr.bf16.mxu0 0
          %645 = vmatpush1.bf16.msra.mxu0 %v639
          %646 = vmatprep.subr.bf16.mxu0 0
          %647 = vmatpush1.bf16.msra.mxu0 0
          %648 = vmatprep.subr.bf16.mxu0 0
          %649 = vmatpush1.bf16.msra.mxu0 0
          %650 = vmatprep.subr.bf16.mxu0 0
          %651 = vmatpush1.bf16.msra.mxu0 0
          %652 = vmatprep.subr.bf16.mxu0 0
          %653 = vmatpush1.bf16.msra.mxu0 0
          %654 = vmatprep.subr.bf16.mxu0 0
          %655 = vmatpush1.bf16.msra.mxu0 0
          %656 = vmatprep.subr.bf16.mxu0 0
          %657 = vmatpush1.bf16.msra.mxu0 0
          %658 = vmatprep.subr.bf16.mxu0 0
          %659 = vmatpush1.bf16.msra.mxu0 0
          %660 = vmatprep.subr.bf16.mxu0 0
          %661 = vmatpush1.bf16.msra.mxu0 0
          %662 = vmatprep.subr.bf16.mxu0 0
          %663 = vmatpush1.bf16.msra.mxu0 0
          %664 = vmatprep.subr.bf16.mxu0 0
          %665 = vmatpush1.bf16.msra.mxu0 0
          %666 = vmatprep.subr.bf16.mxu0 0
          %667 = vmatpush1.bf16.msra.mxu0 0
          %668 = vmatprep.subr.bf16.mxu0 0
          %669 = vmatpush1.bf16.msra.mxu0 0
          %670 = vmatprep.subr.bf16.mxu0 0
          %671 = vmatpush1.bf16.msra.mxu0 0
          %672 = vmatprep.subr.bf16.mxu0 0
          %673 = vmatpush1.bf16.msra.mxu0 0
          %674 = vmatprep.mubr.bf16.mxu0 0
          %675 = vmatmul.mubr.bf16.gmra.mrb[0].mxu0 %v523
          %v676 = vpop.f32.mrb[0].mxu0
          %v677 = vadd.f32 0.0, %v676
          %v678 = vpop.f32.mrb[0].mxu0
          %v679 = vpop.f32.mrb[0].mxu0
          %v680 = vpop.f32.mrb[0].mxu0
          %681 = vdwg.mxu0
          %v686 = vunpack.c.l.b16 %v626
          %v687 = vunpack.c.l.b16 %v627
          %v688 = vunpack.c.l.b16 %v628
          %v689 = vunpack.c.l.b16 %v629
          %v690 = vpack.c.b16 %v687, %v686
          %v691 = vpack.c.b16 %v689, %v688
          %694 = vmatprep.subr.bf16.mxu0 0
          %695 = vmatpush1.bf16.msra.mxu0 %v690
          %696 = vmatprep.subr.bf16.mxu0 0
          %697 = vmatpush1.bf16.msra.mxu0 %v691
          %698 = vmatprep.subr.bf16.mxu0 0
          %699 = vmatpush1.bf16.msra.mxu0 0
          %700 = vmatprep.subr.bf16.mxu0 0
          %701 = vmatpush1.bf16.msra.mxu0 0
          %702 = vmatprep.subr.bf16.mxu0 0
          %703 = vmatpush1.bf16.msra.mxu0 0
          %704 = vmatprep.subr.bf16.mxu0 0
          %705 = vmatpush1.bf16.msra.mxu0 0
          %706 = vmatprep.subr.bf16.mxu0 0
          %707 = vmatpush1.bf16.msra.mxu0 0
          %708 = vmatprep.subr.bf16.mxu0 0
          %709 = vmatpush1.bf16.msra.mxu0 0
          %710 = vmatprep.subr.bf16.mxu0 0
          %711 = vmatpush1.bf16.msra.mxu0 0
          %712 = vmatprep.subr.bf16.mxu0 0
          %713 = vmatpush1.bf16.msra.mxu0 0
          %714 = vmatprep.subr.bf16.mxu0 0
          %715 = vmatpush1.bf16.msra.mxu0 0
          %716 = vmatprep.subr.bf16.mxu0 0
          %717 = vmatpush1.bf16.msra.mxu0 0
          %718 = vmatprep.subr.bf16.mxu0 0
          %719 = vmatpush1.bf16.msra.mxu0 0
          %720 = vmatprep.subr.bf16.mxu0 0
          %721 = vmatpush1.bf16.msra.mxu0 0
          %722 = vmatprep.subr.bf16.mxu0 0
          %723 = vmatpush1.bf16.msra.mxu0 0
          %724 = vmatprep.subr.bf16.mxu0 0
          %725 = vmatpush1.bf16.msra.mxu0 0
          %726 = vmatprep.mubr.bf16.mxu0 0
          %727 = vmatmul.mubr.bf16.gmra.mrb[0].mxu0 %v523
          %v728 = vpop.f32.mrb[0].mxu0
          %v729 = vadd.f32 0.0, %v728
          %v730 = vpop.f32.mrb[0].mxu0
          %v731 = vpop.f32.mrb[0].mxu0
          %v732 = vpop.f32.mrb[0].mxu0
          %733 = vdwg.mxu0
          %v734 = vpack.c.bf16 %v677, %v677
          %v735 = vpack.c.bf16 %v729, %v729
          %736 = vst.msk [vmem:[#allocation3] sm:$0xf] %vm619, %v734
          %737 = vst.msk [vmem:[#allocation3 + $0x4] sm:$0xf] %vm619, %v735
        $region88: #{tpu_custom_call.1} parent=71 // pred_fallthru
          _
        %v738 = vld [vmem:[%s493] sm:$0xff]
        %v739 = vpack.c.bf16 %v738, %v738
        %v740 = vld [vmem:[%s1] sm:$0xf]
        %v741 = vld [vmem:[%s1 + $0x4] sm:$0xf]
        %v742 = vld [vmem:[%s1 + $0x8] sm:$0xf]
        %v743 = vld [vmem:[%s1 + $0xc] sm:$0xf]
        %v744 = vld [vmem:[%s1 + $0x10] sm:$0xf]
        %v745 = vld [vmem:[%s1 + $0x14] sm:$0xf]
        %v746 = vld [vmem:[%s1 + $0x18] sm:$0xf]
        %v747 = vld [vmem:[%s1 + $0x1c] sm:$0xf]
        %v752 = vunpack.c.l.b16 %v740
        %v753 = vunpack.c.l.b16 %v741
        %v754 = vunpack.c.l.b16 %v742
        %v755 = vunpack.c.l.b16 %v743
        %v756 = vpack.c.b16 %v753, %v752
        %v757 = vpack.c.b16 %v755, %v754
        %vm760 = vcmask 261120
        %v762 = vsel %vm760, %v739, 0
        %764 = vmatprep.subr.bf16.mxu0 0
        %765 = vmatpush1.bf16.msra.mxu0 %v756
        %766 = vmatprep.subr.bf16.mxu0 0
        %767 = vmatpush1.bf16.msra.mxu0 %v757
        %768 = vmatprep.subr.bf16.mxu0 0
        %769 = vmatpush1.bf16.msra.mxu0 0
        %770 = vmatprep.subr.bf16.mxu0 0
        %771 = vmatpush1.bf16.msra.mxu0 0
        %772 = vmatprep.subr.bf16.mxu0 0
        %773 = vmatpush1.bf16.msra.mxu0 0
        %774 = vmatprep.subr.bf16.mxu0 0
        %775 = vmatpush1.bf16.msra.mxu0 0
        %776 = vmatprep.subr.bf16.mxu0 0
        %777 = vmatpush1.bf16.msra.mxu0 0
        %778 = vmatprep.subr.bf16.mxu0 0
        %779 = vmatpush1.bf16.msra.mxu0 0
        %780 = vmatprep.subr.bf16.mxu0 0
        %781 = vmatpush1.bf16.msra.mxu0 0
        %782 = vmatprep.subr.bf16.mxu0 0
        %783 = vmatpush1.bf16.msra.mxu0 0
        %784 = vmatprep.subr.bf16.mxu0 0
        %785 = vmatpush1.bf16.msra.mxu0 0
        %786 = vmatprep.subr.bf16.mxu0 0
        %787 = vmatpush1.bf16.msra.mxu0 0
        %788 = vmatprep.subr.bf16.mxu0 0
        %789 = vmatpush1.bf16.msra.mxu0 0
        %790 = vmatprep.subr.bf16.mxu0 0
        %791 = vmatpush1.bf16.msra.mxu0 0
        %792 = vmatprep.subr.bf16.mxu0 0
        %793 = vmatpush1.bf16.msra.mxu0 0
        %794 = vmatprep.subr.bf16.mxu0 0
        %795 = vmatpush1.bf16.msra.mxu0 0
        %796 = vmatprep.mubr.bf16.mxu0 0
        %797 = vmatmul.mubr.bf16.gmra.mrb[0].mxu0 %v762
        %v798 = vpop.f32.mrb[0].mxu0
        %v799 = vadd.f32 0.0, %v798
        %v800 = vpop.f32.mrb[0].mxu0
        %v801 = vpop.f32.mrb[0].mxu0
        %v802 = vpop.f32.mrb[0].mxu0
        %803 = vdwg.mxu0
        %v808 = vunpack.c.l.b16 %v744
        %v809 = vunpack.c.l.b16 %v745
        %v810 = vunpack.c.l.b16 %v746
        %v811 = vunpack.c.l.b16 %v747
        %v812 = vpack.c.b16 %v809, %v808
        %v813 = vpack.c.b16 %v811, %v810
        %816 = vmatprep.subr.bf16.mxu0 0
        %817 = vmatpush1.bf16.msra.mxu0 %v812
        %818 = vmatprep.subr.bf16.mxu0 0
        %819 = vmatpush1.bf16.msra.mxu0 %v813
        %820 = vmatprep.subr.bf16.mxu0 0
        %821 = vmatpush1.bf16.msra.mxu0 0
        %822 = vmatprep.subr.bf16.mxu0 0
        %823 = vmatpush1.bf16.msra.mxu0 0
        %824 = vmatprep.subr.bf16.mxu0 0
        %825 = vmatpush1.bf16.msra.mxu0 0
        %826 = vmatprep.subr.bf16.mxu0 0
        %827 = vmatpush1.bf16.msra.mxu0 0
        %828 = vmatprep.subr.bf16.mxu0 0
        %829 = vmatpush1.bf16.msra.mxu0 0
        %830 = vmatprep.subr.bf16.mxu0 0
        %831 = vmatpush1.bf16.msra.mxu0 0
        %832 = vmatprep.subr.bf16.mxu0 0
        %833 = vmatpush1.bf16.msra.mxu0 0
        %834 = vmatprep.subr.bf16.mxu0 0
        %835 = vmatpush1.bf16.msra.mxu0 0
        %836 = vmatprep.subr.bf16.mxu0 0
        %837 = vmatpush1.bf16.msra.mxu0 0
        %838 = vmatprep.subr.bf16.mxu0 0
        %839 = vmatpush1.bf16.msra.mxu0 0
        %840 = vmatprep.subr.bf16.mxu0 0
        %841 = vmatpush1.bf16.msra.mxu0 0
        %842 = vmatprep.subr.bf16.mxu0 0
        %843 = vmatpush1.bf16.msra.mxu0 0
        %844 = vmatprep.subr.bf16.mxu0 0
        %845 = vmatpush1.bf16.msra.mxu0 0
        %846 = vmatprep.subr.bf16.mxu0 0
        %847 = vmatpush1.bf16.msra.mxu0 0
        %848 = vmatprep.mubr.bf16.mxu0 0
        %849 = vmatmul.mubr.bf16.gmra.mrb[0].mxu0 %v762
        %v850 = vpop.f32.mrb[0].mxu0
        %v851 = vadd.f32 0.0, %v850
        %v852 = vpop.f32.mrb[0].mxu0
        %v853 = vpop.f32.mrb[0].mxu0
        %v854 = vpop.f32.mrb[0].mxu0
        %855 = vdwg.mxu0
        %v856 = vmul.f32 %v799, 0.17677669
        %v857 = vmul.f32 %v851, 0.17677669
        %v858 = vpack.c.bf16 %v856, %v856
        %v859 = vpack.c.bf16 %v857, %v857
        %v860 = vld [vmem:[#allocation2] sm:$0xf]
        %v861 = vld [vmem:[#allocation2 + $0x4] sm:$0xf]
        %v863 = vsel %vm760, %v858, 0
        %v866 = vsel %vm760, %v860, 0
        %868 = vmatprep.subr.bf16.mxu0 0
        %869 = vmatpush1.bf16.xpose.msra.mxu0 %v866
        %870 = vmatprep.subr.bf16.mxu0 0
        %871 = vmatpush1.bf16.xpose.msra.mxu0 0
        %872 = vmatprep.subr.bf16.mxu0 0
        %873 = vmatpush1.bf16.xpose.msra.mxu0 0
        %874 = vmatprep.subr.bf16.mxu0 0
        %875 = vmatpush1.bf16.xpose.msra.mxu0 0
        %876 = vmatprep.subr.bf16.mxu0 0
        %877 = vmatpush1.bf16.xpose.msra.mxu0 0
        %878 = vmatprep.subr.bf16.mxu0 0
        %879 = vmatpush1.bf16.xpose.msra.mxu0 0
        %880 = vmatprep.subr.bf16.mxu0 0
        %881 = vmatpush1.bf16.xpose.msra.mxu0 0
        %882 = vmatprep.subr.bf16.mxu0 0
        %883 = vmatpush1.bf16.xpose.msra.mxu0 0
        %884 = vmatprep.subr.bf16.mxu0 0
        %885 = vmatpush1.bf16.xpose.msra.mxu0 0
        %886 = vmatprep.subr.bf16.mxu0 0
        %887 = vmatpush1.bf16.xpose.msra.mxu0 0
        %888 = vmatprep.subr.bf16.mxu0 0
        %889 = vmatpush1.bf16.xpose.msra.mxu0 0
        %890 = vmatprep.subr.bf16.mxu0 0
        %891 = vmatpush1.bf16.xpose.msra.mxu0 0
        %892 = vmatprep.subr.bf16.mxu0 0
        %893 = vmatpush1.bf16.xpose.msra.mxu0 0
        %894 = vmatprep.subr.bf16.mxu0 0
        %895 = vmatpush1.bf16.xpose.msra.mxu0 0
        %896 = vmatprep.subr.bf16.mxu0 0
        %897 = vmatpush1.bf16.xpose.msra.mxu0 0
        %898 = vmatprep.subr.bf16.mxu0 0
        %899 = vmatpush1.bf16.xpose.msra.mxu0 0
        %900 = vmatprep.mubr.bf16.mxu0 0
        %901 = vmatmul.mubr.bf16.gmra.mrb[0].mxu0 %v863
        %v902 = vpop.f32.mrb[0].mxu0
        %v903 = vadd.f32 0.0, %v902
        %v904 = vpop.f32.mrb[0].mxu0
        %v905 = vpop.f32.mrb[0].mxu0
        %v906 = vpop.f32.mrb[0].mxu0
        %907 = vdwg.mxu0
        %v909 = vsel %vm760, %v859, 0
        %v912 = vsel %vm760, %v861, 0
        %914 = vmatprep.subr.bf16.mxu0 0
        %915 = vmatpush1.bf16.xpose.msra.mxu0 %v912
        %916 = vmatprep.subr.bf16.mxu0 0
        %917 = vmatpush1.bf16.xpose.msra.mxu0 0
        %918 = vmatprep.subr.bf16.mxu0 0
        %919 = vmatpush1.bf16.xpose.msra.mxu0 0
        %920 = vmatprep.subr.bf16.mxu0 0
        %921 = vmatpush1.bf16.xpose.msra.mxu0 0
        %922 = vmatprep.subr.bf16.mxu0 0
        %923 = vmatpush1.bf16.xpose.msra.mxu0 0
        %924 = vmatprep.subr.bf16.mxu0 0
        %925 = vmatpush1.bf16.xpose.msra.mxu0 0
        %926 = vmatprep.subr.bf16.mxu0 0
        %927 = vmatpush1.bf16.xpose.msra.mxu0 0
        %928 = vmatprep.subr.bf16.mxu0 0
        %929 = vmatpush1.bf16.xpose.msra.mxu0 0
        %930 = vmatprep.subr.bf16.mxu0 0
        %931 = vmatpush1.bf16.xpose.msra.mxu0 0
        %932 = vmatprep.subr.bf16.mxu0 0
        %933 = vmatpush1.bf16.xpose.msra.mxu0 0
        %934 = vmatprep.subr.bf16.mxu0 0
        %935 = vmatpush1.bf16.xpose.msra.mxu0 0
        %936 = vmatprep.subr.bf16.mxu0 0
        %937 = vmatpush1.bf16.xpose.msra.mxu0 0
        %938 = vmatprep.subr.bf16.mxu0 0
        %939 = vmatpush1.bf16.xpose.msra.mxu0 0
        %940 = vmatprep.subr.bf16.mxu0 0
        %941 = vmatpush1.bf16.xpose.msra.mxu0 0
        %942 = vmatprep.subr.bf16.mxu0 0
        %943 = vmatpush1.bf16.xpose.msra.mxu0 0
        %944 = vmatprep.subr.bf16.mxu0 0
        %945 = vmatpush1.bf16.xpose.msra.mxu0 0
        %946 = vmatprep.mubr.bf16.mxu0 0
        %947 = vmatmul.mubr.bf16.gmra.mrb[0].mxu0 %v909
        %v948 = vpop.f32.mrb[0].mxu0
        %v949 = vadd.f32 0.0, %v948
        %v950 = vpop.f32.mrb[0].mxu0
        %v951 = vpop.f32.mrb[0].mxu0
        %v952 = vpop.f32.mrb[0].mxu0
        %953 = vdwg.mxu0
        %v954 = vlaneseq
        %v955 = vshrl.u32 %v954, 7
        %v956 = vlaneseq
        %v957 = vand.u32 %v956, 127
        %vm958 = vcmp.ge.s32.totalorder %v955, %v957
        %v959 = vsel %vm958, 1, 0
        %vm960 = vcmp.eq.s32.totalorder %v959, 1
        %v961 = vsel %vm960, %v903, -1e+30
        %v962 = vsel %vm960, %v949, -1e+30
        %vm963 = vcmask 64512
        %v964 = vsel %vm963, %v961, -inf
        %965 = vmax.xlane.f32.xlu0 %v964
        %v966 = vpop.xlane.xlu0 %965
        %v967 = vsel %vm963, %v962, -inf
        %968 = vmax.xlane.f32.xlu0 %v967
        %v969 = vpop.xlane.xlu0 %968
        %v970 = vsub.f32 %v961, %v966
        %v971 = vsub.f32 %v962, %v969
        %v972 = vmul.f32 %v970, 1.442695
        %v973 = vpow.pop %v972
        %v974 = vmul.f32 %v971, 1.442695
        %v975 = vpow.pop %v974
        %v976 = vsel %vm963, %v973, 0.0
        %977 = vadd.xlane.f32.xlu0 %v976
        %v978 = vpop.xlane.xlu0 %977
        %v979 = vsel %vm963, %v975, 0.0
        %980 = vadd.xlane.f32.xlu0 %v979
        %v981 = vpop.xlane.xlu0 %980
        %v982 = vrcp.pop %v978
        %v983 = vrcp.pop %v981
        %v984 = vmul.f32 %v973, %v982
        %v985 = vmul.f32 %v975, %v983
        %v986 = vpack.c.bf16 %v984, %v984
        %v987 = vpack.c.bf16 %v985, %v985
        %v988 = vld [vmem:[#allocation3] sm:$0xf]
        %v989 = vld [vmem:[#allocation3 + $0x4] sm:$0xf]
        %v991 = vsel %vm963, %v986, 0
        %vm993 = vcmask 1043456
        %v995 = vsel %vm993, %v988, 0
        %997 = vmatprep.subr.bf16.mxu0 0
        %998 = vmatpush1.bf16.msra.mxu0 %v995
        %999 = vmatprep.subr.bf16.mxu0 0
        %1000 = vmatpush1.bf16.msra.mxu0 0
        %1001 = vmatprep.subr.bf16.mxu0 0
        %1002 = vmatpush1.bf16.msra.mxu0 0
        %1003 = vmatprep.subr.bf16.mxu0 0
        %1004 = vmatpush1.bf16.msra.mxu0 0
        %1005 = vmatprep.subr.bf16.mxu0 0
        %1006 = vmatpush1.bf16.msra.mxu0 0
        %1007 = vmatprep.subr.bf16.mxu0 0
        %1008 = vmatpush1.bf16.msra.mxu0 0
        %1009 = vmatprep.subr.bf16.mxu0 0
        %1010 = vmatpush1.bf16.msra.mxu0 0
        %1011 = vmatprep.subr.bf16.mxu0 0
        %1012 = vmatpush1.bf16.msra.mxu0 0
        %1013 = vmatprep.subr.bf16.mxu0 0
        %1014 = vmatpush1.bf16.msra.mxu0 0
        %1015 = vmatprep.subr.bf16.mxu0 0
        %1016 = vmatpush1.bf16.msra.mxu0 0
        %1017 = vmatprep.subr.bf16.mxu0 0
        %1018 = vmatpush1.bf16.msra.mxu0 0
        %1019 = vmatprep.subr.bf16.mxu0 0
        %1020 = vmatpush1.bf16.msra.mxu0 0
        %1021 = vmatprep.subr.bf16.mxu0 0
        %1022 = vmatpush1.bf16.msra.mxu0 0
        %1023 = vmatprep.subr.bf16.mxu0 0
        %1024 = vmatpush1.bf16.msra.mxu0 0
        %1025 = vmatprep.subr.bf16.mxu0 0
        %1026 = vmatpush1.bf16.msra.mxu0 0
        %1027 = vmatprep.subr.bf16.mxu0 0
        %1028 = vmatpush1.bf16.msra.mxu0 0
        %1029 = vmatprep.mubr.bf16.mxu0 0
        %1030 = vmatmul.mubr.bf16.gmra.mrb[0].mxu0 %v991
        %v1031 = vpop.f32.mrb[0].mxu0
        %v1032 = vadd.f32 0.0, %v1031
        %v1033 = vpop.f32.mrb[0].mxu0
        %v1034 = vpop.f32.mrb[0].mxu0
        %v1035 = vpop.f32.mrb[0].mxu0
        %1036 = vdwg.mxu0
        %v1038 = vsel %vm963, %v987, 0
        %v1041 = vsel %vm993, %v989, 0
        %1043 = vmatprep.subr.bf16.mxu0 0
        %1044 = vmatpush1.bf16.msra.mxu0 %v1041
        %1045 = vmatprep.subr.bf16.mxu0 0
        %1046 = vmatpush1.bf16.msra.mxu0 0
        %1047 = vmatprep.subr.bf16.mxu0 0
        %1048 = vmatpush1.bf16.msra.mxu0 0
        %1049 = vmatprep.subr.bf16.mxu0 0
        %1050 = vmatpush1.bf16.msra.mxu0 0
        %1051 = vmatprep.subr.bf16.mxu0 0
        %1052 = vmatpush1.bf16.msra.mxu0 0
        %1053 = vmatprep.subr.bf16.mxu0 0
        %1054 = vmatpush1.bf16.msra.mxu0 0
        %1055 = vmatprep.subr.bf16.mxu0 0
        %1056 = vmatpush1.bf16.msra.mxu0 0
        %1057 = vmatprep.subr.bf16.mxu0 0
        %1058 = vmatpush1.bf16.msra.mxu0 0
        %1059 = vmatprep.subr.bf16.mxu0 0
        %1060 = vmatpush1.bf16.msra.mxu0 0
        %1061 = vmatprep.subr.bf16.mxu0 0
        %1062 = vmatpush1.bf16.msra.mxu0 0
        %1063 = vmatprep.subr.bf16.mxu0 0
        %1064 = vmatpush1.bf16.msra.mxu0 0
        %1065 = vmatprep.subr.bf16.mxu0 0
        %1066 = vmatpush1.bf16.msra.mxu0 0
        %1067 = vmatprep.subr.bf16.mxu0 0
        %1068 = vmatpush1.bf16.msra.mxu0 0
        %1069 = vmatprep.subr.bf16.mxu0 0
        %1070 = vmatpush1.bf16.msra.mxu0 0
        %1071 = vmatprep.subr.bf16.mxu0 0
        %1072 = vmatpush1.bf16.msra.mxu0 0
        %1073 = vmatprep.subr.bf16.mxu0 0
        %1074 = vmatpush1.bf16.msra.mxu0 0
        %1075 = vmatprep.mubr.bf16.mxu0 0
        %1076 = vmatmul.mubr.bf16.gmra.mrb[0].mxu0 %v1038
        %v1077 = vpop.f32.mrb[0].mxu0
        %v1078 = vadd.f32 0.0, %v1077
        %v1079 = vpop.f32.mrb[0].mxu0
        %v1080 = vpop.f32.mrb[0].mxu0
        %v1081 = vpop.f32.mrb[0].mxu0
        %1082 = vdwg.mxu0
        %v1083 = vpack.c.bf16 %v1032, %v1032
        %v1084 = vpack.c.bf16 %v1078, %v1078
        %v1085 = vld [vmem:[#allocation7] sm:$0xf]
        %v1086 = vld [vmem:[#allocation7 + $0x4] sm:$0xf]
        %v1087 = vld [vmem:[#allocation7 + $0x8] sm:$0xf]
        %v1088 = vld [vmem:[#allocation7 + $0xc] sm:$0xf]
        %v1089 = vld [vmem:[#allocation7 + $0x10] sm:$0xf]
        %v1090 = vld [vmem:[#allocation7 + $0x14] sm:$0xf]
        %v1091 = vld [vmem:[#allocation7 + $0x18] sm:$0xf]
        %v1092 = vld [vmem:[#allocation7 + $0x1c] sm:$0xf]
        %v1097 = vunpack.c.l.b16 %v1085
        %v1098 = vunpack.c.l.b16 %v1086
        %v1099 = vunpack.c.l.b16 %v1087
        %v1100 = vunpack.c.l.b16 %v1088
        %v1101 = vpack.c.b16 %v1098, %v1097
        %v1102 = vpack.c.b16 %v1100, %v1099
        %v1106 = vsel %vm760, %v1083, 0
        %1108 = vmatprep.subr.bf16.mxu0 0
        %1109 = vmatpush1.bf16.msra.mxu0 %v1101
        %1110 = vmatprep.subr.bf16.mxu0 0
        %1111 = vmatpush1.bf16.msra.mxu0 %v1102
        %1112 = vmatprep.subr.bf16.mxu0 0
        %1113 = vmatpush1.bf16.msra.mxu0 0
        %1114 = vmatprep.subr.bf16.mxu0 0
        %1115 = vmatpush1.bf16.msra.mxu0 0
        %1116 = vmatprep.subr.bf16.mxu0 0
        %1117 = vmatpush1.bf16.msra.mxu0 0
        %1118 = vmatprep.subr.bf16.mxu0 0
        %1119 = vmatpush1.bf16.msra.mxu0 0
        %1120 = vmatprep.subr.bf16.mxu0 0
        %1121 = vmatpush1.bf16.msra.mxu0 0
        %1122 = vmatprep.subr.bf16.mxu0 0
        %1123 = vmatpush1.bf16.msra.mxu0 0
        %1124 = vmatprep.subr.bf16.mxu0 0
        %1125 = vmatpush1.bf16.msra.mxu0 0
        %1126 = vmatprep.subr.bf16.mxu0 0
        %1127 = vmatpush1.bf16.msra.mxu0 0
        %1128 = vmatprep.subr.bf16.mxu0 0
        %1129 = vmatpush1.bf16.msra.mxu0 0
        %1130 = vmatprep.subr.bf16.mxu0 0
        %1131 = vmatpush1.bf16.msra.mxu0 0
        %1132 = vmatprep.subr.bf16.mxu0 0
        %1133 = vmatpush1.bf16.msra.mxu0 0
        %1134 = vmatprep.subr.bf16.mxu0 0
        %1135 = vmatpush1.bf16.msra.mxu0 0
        %1136 = vmatprep.subr.bf16.mxu0 0
        %1137 = vmatpush1.bf16.msra.mxu0 0
        %1138 = vmatprep.subr.bf16.mxu0 0
        %1139 = vmatpush1.bf16.msra.mxu0 0
        %1140 = vmatprep.mubr.bf16.mxu0 0
        %1141 = vmatmul.mubr.bf16.gmra.mrb[0].mxu0 %v1106
        %v1142 = vpop.f32.mrb[0].mxu0
        %v1143 = vadd.f32 0.0, %v1142
        %v1144 = vpop.f32.mrb[0].mxu0
        %v1145 = vpop.f32.mrb[0].mxu0
        %v1146 = vpop.f32.mrb[0].mxu0
        %1147 = vdwg.mxu0
        %v1152 = vunpack.c.l.b16 %v1089
        %v1153 = vunpack.c.l.b16 %v1090
        %v1154 = vunpack.c.l.b16 %v1091
        %v1155 = vunpack.c.l.b16 %v1092
        %v1156 = vpack.c.b16 %v1153, %v1152
        %v1157 = vpack.c.b16 %v1155, %v1154
        %v1161 = vsel %vm760, %v1084, 0
        %1163 = vmatprep.subr.bf16.mxu0 0
        %1164 = vmatpush1.bf16.msra.mxu0 %v1156
        %1165 = vmatprep.subr.bf16.mxu0 0
        %1166 = vmatpush1.bf16.msra.mxu0 %v1157
        %1167 = vmatprep.subr.bf16.mxu0 0
        %1168 = vmatpush1.bf16.msra.mxu0 0
        %1169 = vmatprep.subr.bf16.mxu0 0
        %1170 = vmatpush1.bf16.msra.mxu0 0
        %1171 = vmatprep.subr.bf16.mxu0 0
        %1172 = vmatpush1.bf16.msra.mxu0 0
        %1173 = vmatprep.subr.bf16.mxu0 0
        %1174 = vmatpush1.bf16.msra.mxu0 0
        %1175 = vmatprep.subr.bf16.mxu0 0
        %1176 = vmatpush1.bf16.msra.mxu0 0
        %1177 = vmatprep.subr.bf16.mxu0 0
        %1178 = vmatpush1.bf16.msra.mxu0 0
        %1179 = vmatprep.subr.bf16.mxu0 0
        %1180 = vmatpush1.bf16.msra.mxu0 0
        %1181 = vmatprep.subr.bf16.mxu0 0
        %1182 = vmatpush1.bf16.msra.mxu0 0
        %1183 = vmatprep.subr.bf16.mxu0 0
        %1184 = vmatpush1.bf16.msra.mxu0 0
        %1185 = vmatprep.subr.bf16.mxu0 0
        %1186 = vmatpush1.bf16.msra.mxu0 0
        %1187 = vmatprep.subr.bf16.mxu0 0
        %1188 = vmatpush1.bf16.msra.mxu0 0
        %1189 = vmatprep.subr.bf16.mxu0 0
        %1190 = vmatpush1.bf16.msra.mxu0 0
        %1191 = vmatprep.subr.bf16.mxu0 0
        %1192 = vmatpush1.bf16.msra.mxu0 0
        %1193 = vmatprep.subr.bf16.mxu0 0
        %1194 = vmatpush1.bf16.msra.mxu0 0
        %1195 = vmatprep.mubr.bf16.mxu0 0
        %1196 = vmatmul.mubr.bf16.gmra.mrb[0].mxu0 %v1161
        %v1197 = vpop.f32.mrb[0].mxu0
        %v1198 = vadd.f32 0.0, %v1197
        %v1199 = vpop.f32.mrb[0].mxu0
        %v1200 = vpop.f32.mrb[0].mxu0
        %v1201 = vpop.f32.mrb[0].mxu0
        %1202 = vdwg.mxu0
        %v1203 = vsel %vm760, %v1143, 0.0
        %v1204 = vsel %vm760, %v1198, 0.0
        %v1205 = vadd.f32 %v1203, %v1204
        %v1206 = vadd.f32 %v1205, %v738
        %v1207 = vsel %vm760, %v1206, 0.0
        %1208 = vadd.xlane.f32.xlu0 %v1207
        %v1209 = vpop.xlane.xlu0 %1208
        %v1210 = vrcp.pop 32.0
        %v1211 = vmul.f32 %v1209, %v1210
        %v1212 = vsub.f32 %v1206, %v1211
        %v1213 = vmul.f32 %v1212, %v1212
        %v1214 = vsel %vm760, %v1213, 0.0
        %1215 = vadd.xlane.f32.xlu0 %v1214
        %v1216 = vpop.xlane.xlu0 %1215
        %v1217 = vmul.f32 %v1216, %v1210
        %v1218 = vadd.f32 %v1217, 1e-05
        %v1219 = vrsqrt.pop %v1218
        %v1220 = vmul.f32 %v1212, %v1219
        %v1221 = vld [vmem:[%s5] sm:$0x1]
        %v1223 = vlaneseq
        %v1224 = vshrl.u32 %v1223, 7
        %v1225 = vsub.s32 0, %v1224
        %v1226 = vrot.slane %v1221, %v1225
        %v1228 = vmul.f32 %v1220, %v1226
        %v1229 = vld [vmem:[%s6] sm:$0x1]
        %v1231 = vlaneseq
        %v1232 = vshrl.u32 %v1231, 7
        %v1233 = vsub.s32 0, %v1232
        %v1234 = vrot.slane %v1229, %v1233
        %v1236 = vadd.f32 %v1228, %v1234
        %v1237 = vpack.c.bf16 %v1236, %v1236
        %v1238 = vld [vmem:[#allocation9] sm:$0xf]
        %v1239 = vld [vmem:[#allocation9 + $0x4] sm:$0xf]
        %v1240 = vld [vmem:[#allocation9 + $0x8] sm:$0xf]
        %v1241 = vld [vmem:[#allocation9 + $0xc] sm:$0xf]
        %v1242 = vld [vmem:[%s8] sm:$0x1]
        %v1244 = vlaneseq
        %v1245 = vshrl.u32 %v1244, 7
        %v1246 = vsub.s32 0, %v1245
        %v1247 = vrot.slane %v1242, %v1246
        %v1253 = vunpack.c.l.b16 %v1238
        %v1254 = vunpack.c.l.b16 %v1239
        %v1255 = vunpack.c.l.b16 %v1240
        %v1256 = vunpack.c.l.b16 %v1241
        %v1257 = vpack.c.b16 %v1254, %v1253
        %v1258 = vpack.c.b16 %v1256, %v1255
        %v1262 = vsel %vm760, %v1237, 0
        %1264 = vmatprep.subr.bf16.mxu0 0
        %1265 = vmatpush1.bf16.msra.mxu0 %v1257
        %1266 = vmatprep.subr.bf16.mxu0 0
        %1267 = vmatpush1.bf16.msra.mxu0 %v1258
        %1268 = vmatprep.subr.bf16.mxu0 0
        %1269 = vmatpush1.bf16.msra.mxu0 0
        %1270 = vmatprep.subr.bf16.mxu0 0
        %1271 = vmatpush1.bf16.msra.mxu0 0
        %1272 = vmatprep.subr.bf16.mxu0 0
        %1273 = vmatpush1.bf16.msra.mxu0 0
        %1274 = vmatprep.subr.bf16.mxu0 0
        %1275 = vmatpush1.bf16.msra.mxu0 0
        %1276 = vmatprep.subr.bf16.mxu0 0
        %1277 = vmatpush1.bf16.msra.mxu0 0
        %1278 = vmatprep.subr.bf16.mxu0 0
        %1279 = vmatpush1.bf16.msra.mxu0 0
        %1280 = vmatprep.subr.bf16.mxu0 0
        %1281 = vmatpush1.bf16.msra.mxu0 0
        %1282 = vmatprep.subr.bf16.mxu0 0
        %1283 = vmatpush1.bf16.msra.mxu0 0
        %1284 = vmatprep.subr.bf16.mxu0 0
        %1285 = vmatpush1.bf16.msra.mxu0 0
        %1286 = vmatprep.subr.bf16.mxu0 0
        %1287 = vmatpush1.bf16.msra.mxu0 0
        %1288 = vmatprep.subr.bf16.mxu0 0
        %1289 = vmatpush1.bf16.msra.mxu0 0
        %1290 = vmatprep.subr.bf16.mxu0 0
        %1291 = vmatpush1.bf16.msra.mxu0 0
        %1292 = vmatprep.subr.bf16.mxu0 0
        %1293 = vmatpush1.bf16.msra.mxu0 0
        %1294 = vmatprep.subr.bf16.mxu0 0
        %1295 = vmatpush1.bf16.msra.mxu0 0
        %1296 = vmatprep.mubr.bf16.mxu0 0
        %1297 = vmatmul.mubr.bf16.gmra.mrb[0].mxu0 %v1262
        %v1298 = vpop.f32.mrb[0].mxu0
        %v1299 = vadd.f32 %v1247, %v1298
        %v1300 = vpop.f32.mrb[0].mxu0
        %v1301 = vpop.f32.mrb[0].mxu0
        %v1302 = vpop.f32.mrb[0].mxu0
        %1303 = vdwg.mxu0
        %v1304 = vmax.f32 %v1299, 0.0
        %v1305 = vpack.c.bf16 %v1304, %v1304
        %v1306 = vld [vmem:[%s9] sm:$0xf]
        %v1307 = vld [vmem:[%s9 + $0x4] sm:$0xf]
        %v1308 = vld [vmem:[%s9 + $0x8] sm:$0xf]
        %v1309 = vld [vmem:[%s9 + $0xc] sm:$0xf]
        %v1310 = vld [vmem:[%s9 + $0x10] sm:$0xf]
        %v1311 = vld [vmem:[%s9 + $0x14] sm:$0xf]
        %v1312 = vld [vmem:[%s9 + $0x18] sm:$0xf]
        %v1313 = vld [vmem:[%s9 + $0x1c] sm:$0xf]
        %v1314 = vld [vmem:[%s9 + $0x20] sm:$0xf]
        %v1315 = vld [vmem:[%s9 + $0x24] sm:$0xf]
        %v1316 = vld [vmem:[%s9 + $0x28] sm:$0xf]
        %v1317 = vld [vmem:[%s9 + $0x2c] sm:$0xf]
        %v1318 = vld [vmem:[%s9 + $0x30] sm:$0xf]
        %v1319 = vld [vmem:[%s9 + $0x34] sm:$0xf]
        %v1320 = vld [vmem:[%s9 + $0x38] sm:$0xf]
        %v1321 = vld [vmem:[%s9 + $0x3c] sm:$0xf]
        %v1322 = vld [vmem:[%s10] sm:$0x1]
        %v1324 = vlaneseq
        %v1325 = vshrl.u32 %v1324, 7
        %v1326 = vsub.s32 0, %v1325
        %v1327 = vrot.slane %v1322, %v1326
        %v1345 = vunpack.c.l.b16 %v1306
        %v1346 = vunpack.c.l.b16 %v1307
        %v1347 = vunpack.c.l.b16 %v1308
        %v1348 = vunpack.c.l.b16 %v1309
        %v1349 = vunpack.c.l.b16 %v1310
        %v1350 = vunpack.c.l.b16 %v1311
        %v1351 = vunpack.c.l.b16 %v1312
        %v1352 = vunpack.c.l.b16 %v1313
        %v1353 = vunpack.c.l.b16 %v1314
        %v1354 = vunpack.c.l.b16 %v1315
        %v1355 = vunpack.c.l.b16 %v1316
        %v1356 = vunpack.c.l.b16 %v1317
        %v1357 = vunpack.c.l.b16 %v1318
        %v1358 = vunpack.c.l.b16 %v1319
        %v1359 = vunpack.c.l.b16 %v1320
        %v1360 = vunpack.c.l.b16 %v1321
        %v1361 = vpack.c.b16 %v1346, %v1345
        %v1362 = vpack.c.b16 %v1348, %v1347
        %v1363 = vpack.c.b16 %v1350, %v1349
        %v1364 = vpack.c.b16 %v1352, %v1351
        %v1365 = vpack.c.b16 %v1354, %v1353
        %v1366 = vpack.c.b16 %v1356, %v1355
        %v1367 = vpack.c.b16 %v1358, %v1357
        %v1368 = vpack.c.b16 %v1360, %v1359
        %1377 = vmatprep.subr.bf16.mxu0 0
        %1378 = vmatpush1.bf16.msra.mxu0 %v1361
        %1379 = vmatprep.subr.bf16.mxu0 0
        %1380 = vmatpush1.bf16.msra.mxu0 %v1362
        %1381 = vmatprep.subr.bf16.mxu0 0
        %1382 = vmatpush1.bf16.msra.mxu0 %v1363
        %1383 = vmatprep.subr.bf16.mxu0 0
        %1384 = vmatpush1.bf16.msra.mxu0 %v1364
        %1385 = vmatprep.subr.bf16.mxu0 0
        %1386 = vmatpush1.bf16.msra.mxu0 %v1365
        %1387 = vmatprep.subr.bf16.mxu0 0
        %1388 = vmatpush1.bf16.msra.mxu0 %v1366
        %1389 = vmatprep.subr.bf16.mxu0 0
        %1390 = vmatpush1.bf16.msra.mxu0 %v1367
        %1391 = vmatprep.subr.bf16.mxu0 0
        %1392 = vmatpush1.bf16.msra.mxu0 %v1368
        %1393 = vmatprep.subr.bf16.mxu0 0
        %1394 = vmatpush1.bf16.msra.mxu0 0
        %1395 = vmatprep.subr.bf16.mxu0 0
        %1396 = vmatpush1.bf16.msra.mxu0 0
        %1397 = vmatprep.subr.bf16.mxu0 0
        %1398 = vmatpush1.bf16.msra.mxu0 0
        %1399 = vmatprep.subr.bf16.mxu0 0
        %1400 = vmatpush1.bf16.msra.mxu0 0
        %1401 = vmatprep.subr.bf16.mxu0 0
        %1402 = vmatpush1.bf16.msra.mxu0 0
        %1403 = vmatprep.subr.bf16.mxu0 0
        %1404 = vmatpush1.bf16.msra.mxu0 0
        %1405 = vmatprep.subr.bf16.mxu0 0
        %1406 = vmatpush1.bf16.msra.mxu0 0
        %1407 = vmatprep.subr.bf16.mxu0 0
        %1408 = vmatpush1.bf16.msra.mxu0 0
        %1409 = vmatprep.mubr.bf16.mxu0 0
        %1410 = vmatmul.mubr.bf16.gmra.mrb[0].mxu0 %v1305
        %v1411 = vpop.f32.mrb[0].mxu0
        %v1412 = vadd.f32 %v1327, %v1411
        %v1413 = vpop.f32.mrb[0].mxu0
        %v1414 = vpop.f32.mrb[0].mxu0
        %v1415 = vpop.f32.mrb[0].mxu0
        %1416 = vdwg.mxu0
        %v1417 = vadd.f32 %v1412, %v1236
        %v1418 = vsel %vm760, %v1417, 0.0
        %1419 = vadd.xlane.f32.xlu0 %v1418
        %v1420 = vpop.xlane.xlu0 %1419
        %v1421 = vmul.f32 %v1420, %v1210
        %v1422 = vsub.f32 %v1417, %v1421
        %v1423 = vmul.f32 %v1422, %v1422
        %v1424 = vsel %vm760, %v1423, 0.0
        %1425 = vadd.xlane.f32.xlu0 %v1424
        %v1426 = vpop.xlane.xlu0 %1425
        %v1427 = vmul.f32 %v1426, %v1210
        %v1428 = vadd.f32 %v1427, 1e-05
        %v1429 = vrsqrt.pop %v1428
        %v1430 = vmul.f32 %v1422, %v1429
        %v1431 = vld [vmem:[%s11] sm:$0x1]
        %v1433 = vlaneseq
        %v1434 = vshrl.u32 %v1433, 7
        %v1435 = vsub.s32 0, %v1434
        %v1436 = vrot.slane %v1431, %v1435
        %v1438 = vmul.f32 %v1430, %v1436
        %v1439 = vld [vmem:[%s12] sm:$0x1]
        %v1441 = vlaneseq
        %v1442 = vshrl.u32 %v1441, 7
        %v1443 = vsub.s32 0, %v1442
        %v1444 = vrot.slane %v1439, %v1443
        %v1446 = vadd.f32 %v1438, %v1444
        %1447 = vst.msk [vmem:[%s489] sm:$0xff] %vm760, %v1446
        %s1448 = sand.u32 %s329, 1
        %s1449 = scalar_lea.sflag [#allocation6], %s1448
        %s1450 = sand.u32 %s329, 1
        %s1451 = smul.addr %s1450, 8
        %s1452 = scalar_lea.vmem [#allocation10], %s1451
        // Predicated region
        $region89: #{tpu_custom_call.1} parent=71 // pred_check
          %p1453 = pneg %p339
        $region90: #{tpu_custom_call.1} parent=71 // pred_check_branch
          %1455 = sbr.rel (%p1453) target = $region92
        $region91: #{tpu_custom_call.1} parent=71 // pred_region
          %s1457 = ssub.s32 128, 128
          %1458 = vsyncadd %s1449, %s1457
          %s1459 = sadd.s32 %s34, %s33
          %s1460 = smul.addr %s1459, 128
          %s1461 = scalar_lea.hbm %s13, %s1460
          %s1463 = sshll.u32 %s1452, 4
          %s1464 = int_to_ptr.vmem [resolvable:$true] %s1463
          %1466 = dma.vmem_to_hbm [thread:$0]  %s1464, 128, %s1461, %s1449
        $region92: #{tpu_custom_call.1} parent=71 // pred_fallthru
          _
      $region72: #{tpu_custom_call.1} parent=5 // pred_fallthru
        _
      %p1467 = scmp.le.s32.totalorder 2, %s24
      // Predicated region
      $region93: #{tpu_custom_call.1} parent=5 // pred_check
        %p1468 = pneg %p1467
      $region94: #{tpu_custom_call.1} parent=5 // pred_check_branch
        %1470 = sbr.rel (%p1468) target = $region96
      $region95: #{tpu_custom_call.1} parent=5 // pred_region
        %s1471 = ssub.s32 %s24, 2
        // Predicated region
        $region97: #{tpu_custom_call.1} parent=95 // pred_check
          %p1472 = pneg %p345
        $region98: #{tpu_custom_call.1} parent=95 // pred_check_branch
          %1474 = sbr.rel (%p1472) target = $region100
        $region99: #{tpu_custom_call.1} parent=95 // pred_region
          %s1475 = sand.u32 %s330, 1
          %s1476 = scalar_lea.sflag [#allocation6], %s1475
          %s1477 = sand.u32 %s330, 1
          %s1478 = smul.addr %s1477, 8
          %s1479 = scalar_lea.vmem [#allocation10], %s1478
          %1480 = dma.done %s1476, 128
        $region100: #{tpu_custom_call.1} parent=95 // pred_fallthru
          _
      $region96: #{tpu_custom_call.1} parent=5 // pred_fallthru
        _
    $region6: #{tpu_custom_call.1} parent=1 // loop_footer
      %s28 = sadd.s32 1, %s24
    $region7: #{tpu_custom_call.1} parent=1 // loop_footer_branch
      %23 = sbr.rel target = $region3
    $region8: #{tpu_custom_call.1} parent=1 // loop_exit
      _
    %1481 = vsyncpa [#allocation5], 1
    %s1482 = scalar_lea.sflag [#allocation5], 1
    %1483 = vsyncpa %s1482, 1
    %1484 = vsyncpa [#allocation8], 1
    %1485 = vsyncpa [#allocation6], 1
    %s1486 = scalar_lea.sflag [#allocation6], 1
    %1487 = vsyncpa %s1486, 1

</llo_original>
